<compile_context>
chip_gen: v7x
topology: tpu7x:2x2x1
jax: 0.10.0
libtpu: 0.0.40
codegen_flags: <defaults>
</compile_context>

<pallas_src>
import jax
import jax.numpy as jnp
from jax.experimental import pallas as pl
from jax.experimental.pallas import tpu as pltpu  # noqa: F401  (kept for TPU backend)

N = 16      # number of points
P = 3       # pos_dim
CIN = 8     # in_channels
COUT = 16   # out_channels
HID = 64    # hidden width of pos_nn / attn_nn (fixed by the module)
K = 4       # k-NN neighbors used to build edge_index


# ---------------- single fused kernel: projections + attention + lin_out ----------------
def fused_block_kernel(x_ref, pos_ref, mask_ref, et_ref, es_ref,
                       win_ref, bin_ref, wsrc_ref, wdst_ref, wlin_ref,
                       wp1_ref, bp1_ref, wp2_ref, bp2_ref,
                       wa1_ref, ba1_ref, wa2_ref, ba2_ref,
                       wlo_ref, blo_ref, out_ref):
    f32 = jnp.float32
    n = x_ref.shape[0]

    # ---- node-wise projections: h = relu(lin_in(x)); a_src/a_dst/xl = h @ W ----
    x = x_ref[...]
    h = jnp.maximum(
        jnp.dot(x, win_ref[...], preferred_element_type=f32) + bin_ref[...], 0.0)
    a_src = jnp.dot(h, wsrc_ref[...], preferred_element_type=f32)      # (n, COUT)
    a_dst = jnp.dot(h, wdst_ref[...], preferred_element_type=f32)      # (n, COUT)
    xl = jnp.dot(h, wlin_ref[...], preferred_element_type=f32)         # (n, COUT)

    # ---- expand node-level tensors onto the flattened pair axis r = j*n + i ----
    # et[r, i] = 1 (picks target i of pair r), es[r, j] = 1 (picks source j).
    et = et_ref[...]                                                   # (n*n, n)
    es = es_ref[...]                                                   # (n*n, n)
    a_dst_e = jnp.dot(et, a_dst, preferred_element_type=f32)           # (n*n, COUT)
    a_src_e = jnp.dot(es, a_src, preferred_element_type=f32)           # (n*n, COUT)
    xl_e = jnp.dot(es, xl, preferred_element_type=f32)                 # (n*n, COUT)
    diff = jnp.dot(et - es, pos_ref[...], preferred_element_type=f32)  # pos_i - pos_j

    # ---- pos_nn(diff): Linear+ReLU, Linear+ReLU over all n*n pairs ----
    d1 = jnp.maximum(
        jnp.dot(diff, wp1_ref[...], preferred_element_type=f32) + bp1_ref[...], 0.0)
    delta = jnp.maximum(
        jnp.dot(d1, wp2_ref[...], preferred_element_type=f32) + bp2_ref[...], 0.0)

    # ---- attn_nn(a_dst_i - a_src_j + delta) ----
    alpha = a_dst_e - a_src_e + delta
    a1 = jnp.maximum(
        jnp.dot(alpha, wa1_ref[...], preferred_element_type=f32) + ba1_ref[...], 0.0)
    alpha = jnp.maximum(
        jnp.dot(a1, wa2_ref[...], preferred_element_type=f32) + ba2_ref[...], 0.0)

    # ---- masked per-target (per-channel) softmax + weighted aggregation ----
    mask = mask_ref[...]                                # (n*n, 1): 1.0 if edge j -> i
    neg = jnp.where(mask > 0.5, 0.0, -1e30)
    am = alpha + neg                                    # (n*n, COUT)
    val = xl_e + delta                                  # (n*n, COUT)

    # block j = rows [j*n, (j+1)*n); each block's rows are indexed by target i,
    # so per-target reductions are plain elementwise accumulations over blocks
    # (pure VPU, no XLU round-trips, all slices sublane-tile aligned).
    m = am[0:n, :]
    for j in range(1, n):
        m = jnp.maximum(m, am[j * n:(j + 1) * n, :])
    num = jnp.zeros_like(m)
    den = jnp.zeros_like(m)
    for j in range(n):
        sl = slice(j * n, (j + 1) * n)
        e = jnp.exp(am[sl, :] - m) * mask[sl, :]
        den = den + e
        num = num + e * val[sl, :]
    agg = num * pl.reciprocal(den, approx=True)         # (n, COUT)

    # ---- lin_out + ReLU: one batched matmul, one contiguous store ----
    y = jnp.maximum(
        jnp.dot(agg, wlo_ref[...], preferred_element_type=f32) + blo_ref[...], 0.0)
    out_ref[...] = y


def transformer_block(x, pos, edge_index, params):
    (win, bin_, wsrc, wdst, wlin,
     wp1, bp1, wp2, bp2, wa1, ba1, wa2, ba2, wlo, blo) = params
    n = x.shape[0]

    # --- plain-JAX glue: sparse edge_index -> dense adjacency + pair-expansion ---
    # adj[i, j] = 1 iff message flows j (source) -> i (target)
    src, dst = edge_index[0], edge_index[1]
    adj = jnp.zeros((n, n), jnp.float32).at[dst, src].set(1.0)
    eye = jnp.eye(n, dtype=jnp.float32)
    adj = adj * (1.0 - eye) + eye                       # remove + re-add self loops

    # flattened (source-major) pair layout: row r = j*n + i  (j source, i target)
    mask_flat = adj.T.reshape(n * n, 1)                 # mask_flat[j*n+i] = adj[i, j]
    et = jnp.tile(eye, (n, 1))                          # et[j*n+i, i] = 1
    es = jnp.repeat(eye, n, axis=0)                     # es[j*n+i, j] = 1

    # single grid step; every operand is tiny and stays whole in VMEM.
    return pl.pallas_call(
        fused_block_kernel,
        out_shape=jax.ShapeDtypeStruct((n, COUT), jnp.float32),
    )(x, pos, mask_flat, et, es,
      win, bin_, wsrc, wdst, wlin,
      wp1, bp1, wp2, bp2, wa1, ba1, wa2, ba2, wlo, blo)


# ---------------- pure-JAX reference (dense formulation of the same math) ----------------
def reference(x, pos, adj, params):
    (win, bin_, wsrc, wdst, wlin,
     wp1, bp1, wp2, bp2, wa1, ba1, wa2, ba2, wlo, blo) = params
    h = jax.nn.relu(x @ win + bin_)
    a_src, a_dst, xl = h @ wsrc, h @ wdst, h @ wlin
    diff = pos[:, None, :] - pos[None, :, :]
    delta = jax.nn.relu(jax.nn.relu(diff @ wp1 + bp1) @ wp2 + bp2)
    alpha = a_dst[:, None, :] - a_src[None, :, :] + delta
    alpha = jax.nn.relu(jax.nn.relu(alpha @ wa1 + ba1) @ wa2 + ba2)
    mask = adj[:, :, None]
    am = jnp.where(mask > 0.5, alpha, -1e30)
    amax = am.max(axis=1, keepdims=True)
    ex = jnp.exp(am - amax) * mask
    attn = ex / ex.sum(axis=1, keepdims=True)
    out = (attn * (xl[None, :, :] + delta)).sum(axis=1)
    return jax.nn.relu(out @ wlo + blo)


if __name__ == "__main__":
    key = jax.random.PRNGKey(0)
    keys = jax.random.split(key, 12)

    x = jax.random.normal(keys[0], (N, CIN), jnp.float32)
    pos = jax.random.normal(keys[1], (N, P), jnp.float32)

    # deterministic k-NN graph; edge_index follows PyG convention [src; dst]
    d2 = jnp.sum((pos[:, None, :] - pos[None, :, :]) ** 2, axis=-1) + jnp.eye(N) * 1e9
    nbr = jnp.argsort(d2, axis=1)[:, :K]
    src = nbr.reshape(-1).astype(jnp.int32)
    dst = jnp.repeat(jnp.arange(N, dtype=jnp.int32), K)
    edge_index = jnp.stack([src, dst])

    def linear_params(k, fan_in, fan_out, bias=True):
        kw, kb = jax.random.split(k)
        bound = 1.0 / (fan_in ** 0.5)
        w = jax.random.uniform(kw, (fan_in, fan_out), jnp.float32, -bound, bound)
        if bias:
            b = jax.random.uniform(kb, (1, fan_out), jnp.float32, -bound, bound)
            return w, b
        return w

    win, bin_ = linear_params(keys[2], CIN, CIN)              # lin_in
    wsrc = linear_params(keys[3], CIN, COUT, bias=False)      # lin_src
    wdst = linear_params(keys[4], CIN, COUT, bias=False)      # lin_dst
    wlin = linear_params(keys[5], CIN, COUT, bias=False)      # lin
    wp1, bp1 = linear_params(keys[6], P, HID)                 # pos_nn layer 1
    wp2, bp2 = linear_params(keys[7], HID, COUT)              # pos_nn layer 2
    wa1, ba1 = linear_params(keys[8], COUT, HID)              # attn_nn layer 1
    wa2, ba2 = linear_params(keys[9], HID, COUT)              # attn_nn layer 2
    wlo, blo = linear_params(keys[10], COUT, COUT)            # lin_out

    params = (win, bin_, wsrc, wdst, wlin,
              wp1, bp1, wp2, bp2, wa1, ba1, wa2, ba2, wlo, blo)

    y = jax.jit(transformer_block)(x, pos, edge_index, params)
    jax.block_until_ready(y)

    # correctness check vs. pure-JAX reference
    adj = jnp.zeros((N, N), jnp.float32).at[dst, src].set(1.0)
    adj = adj * (1.0 - jnp.eye(N)) + jnp.eye(N)
    y_ref = reference(x, pos, adj, params)
    assert y.shape == (N, COUT)
    assert jnp.allclose(y, y_ref, rtol=1e-3, atol=1e-3), (
        float(jnp.max(jnp.abs(y - y_ref))))

    print("KERNEL_OK")
</pallas_src>

<mosaic_0001>
module attributes {stable_mosaic.version = 11 : i64} {
  func.func @fused_block_kernel(%arg0: memref<16x8xf32, #tpu.memory_space<vmem>>, %arg1: memref<16x3xf32, #tpu.memory_space<vmem>>, %arg2: memref<256x1xf32, #tpu.memory_space<vmem>>, %arg3: memref<256x16xf32, #tpu.memory_space<vmem>>, %arg4: memref<256x16xf32, #tpu.memory_space<vmem>>, %arg5: memref<8x8xf32, #tpu.memory_space<vmem>>, %arg6: memref<1x8xf32, #tpu.memory_space<vmem>>, %arg7: memref<8x16xf32, #tpu.memory_space<vmem>>, %arg8: memref<8x16xf32, #tpu.memory_space<vmem>>, %arg9: memref<8x16xf32, #tpu.memory_space<vmem>>, %arg10: memref<3x64xf32, #tpu.memory_space<vmem>>, %arg11: memref<1x64xf32, #tpu.memory_space<vmem>>, %arg12: memref<64x16xf32, #tpu.memory_space<vmem>>, %arg13: memref<1x16xf32, #tpu.memory_space<vmem>>, %arg14: memref<16x64xf32, #tpu.memory_space<vmem>>, %arg15: memref<1x64xf32, #tpu.memory_space<vmem>>, %arg16: memref<64x16xf32, #tpu.memory_space<vmem>>, %arg17: memref<1x16xf32, #tpu.memory_space<vmem>>, %arg18: memref<16x16xf32, #tpu.memory_space<vmem>>, %arg19: memref<1x16xf32, #tpu.memory_space<vmem>>, %arg20: memref<16x16xf32, #tpu.memory_space<vmem>>) attributes {dimension_semantics = [], scalar_prefetch = 0 : i64, scratch_operands = 0 : i64, tpu.core_type = #tpu.core_type<tc>} {
    %c0 = arith.constant 0 : index
    %c0_0 = arith.constant 0 : index
    %0 = vector.load %arg0[%c0, %c0_0] : memref<16x8xf32, #tpu.memory_space<vmem>>, vector<16x8xf32>
    %c0_1 = arith.constant 0 : index
    %c0_2 = arith.constant 0 : index
    %1 = vector.load %arg5[%c0_1, %c0_2] : memref<8x8xf32, #tpu.memory_space<vmem>>, vector<8x8xf32>
    %cst = arith.constant dense<0.000000e+00> : vector<16x8xf32>
    %2 = tpu.matmul %0, %1, %cst {dimension_numbers = #tpu.dot_dimension_numbers<[1], [0], [0], [1], [0, 0, 1, 1], [], []>} : vector<16x8xf32>, vector<8x8xf32>, vector<16x8xf32> -> vector<16x8xf32>
    %c0_3 = arith.constant 0 : index
    %c0_4 = arith.constant 0 : index
    %3 = vector.load %arg6[%c0_3, %c0_4] : memref<1x8xf32, #tpu.memory_space<vmem>>, vector<1x8xf32>
    %4 = vector.broadcast %3 : vector<1x8xf32> to vector<16x8xf32>
    %5 = arith.addf %2, %4 : vector<16x8xf32>
    %cst_5 = arith.constant 0.000000e+00 : f32
    %6 = vector.broadcast %cst_5 : f32 to vector<16x8xf32>
    %7 = arith.maximumf %5, %6 : vector<16x8xf32>
    %c0_6 = arith.constant 0 : index
    %c0_7 = arith.constant 0 : index
    %8 = vector.load %arg7[%c0_6, %c0_7] : memref<8x16xf32, #tpu.memory_space<vmem>>, vector<8x16xf32>
    %cst_8 = arith.constant dense<0.000000e+00> : vector<16x16xf32>
    %9 = tpu.matmul %7, %8, %cst_8 {dimension_numbers = #tpu.dot_dimension_numbers<[1], [0], [0], [1], [0, 0, 1, 1], [], []>} : vector<16x8xf32>, vector<8x16xf32>, vector<16x16xf32> -> vector<16x16xf32>
    %c0_9 = arith.constant 0 : index
    %c0_10 = arith.constant 0 : index
    %10 = vector.load %arg8[%c0_9, %c0_10] : memref<8x16xf32, #tpu.memory_space<vmem>>, vector<8x16xf32>
    %cst_11 = arith.constant dense<0.000000e+00> : vector<16x16xf32>
    %11 = tpu.matmul %7, %10, %cst_11 {dimension_numbers = #tpu.dot_dimension_numbers<[1], [0], [0], [1], [0, 0, 1, 1], [], []>} : vector<16x8xf32>, vector<8x16xf32>, vector<16x16xf32> -> vector<16x16xf32>
    %c0_12 = arith.constant 0 : index
    %c0_13 = arith.constant 0 : index
    %12 = vector.load %arg9[%c0_12, %c0_13] : memref<8x16xf32, #tpu.memory_space<vmem>>, vector<8x16xf32>
    %cst_14 = arith.constant dense<0.000000e+00> : vector<16x16xf32>
    %13 = tpu.matmul %7, %12, %cst_14 {dimension_numbers = #tpu.dot_dimension_numbers<[1], [0], [0], [1], [0, 0, 1, 1], [], []>} : vector<16x8xf32>, vector<8x16xf32>, vector<16x16xf32> -> vector<16x16xf32>
    %c0_15 = arith.constant 0 : index
    %c0_16 = arith.constant 0 : index
    %14 = vector.load %arg3[%c0_15, %c0_16] : memref<256x16xf32, #tpu.memory_space<vmem>>, vector<256x16xf32>
    %c0_17 = arith.constant 0 : index
    %c0_18 = arith.constant 0 : index
    %15 = vector.load %arg4[%c0_17, %c0_18] : memref<256x16xf32, #tpu.memory_space<vmem>>, vector<256x16xf32>
    %cst_19 = arith.constant dense<0.000000e+00> : vector<256x16xf32>
    %16 = tpu.matmul %14, %11, %cst_19 {dimension_numbers = #tpu.dot_dimension_numbers<[1], [0], [0], [1], [0, 0, 1, 1], [], []>} : vector<256x16xf32>, vector<16x16xf32>, vector<256x16xf32> -> vector<256x16xf32>
    %cst_20 = arith.constant dense<0.000000e+00> : vector<256x16xf32>
    %17 = tpu.matmul %15, %9, %cst_20 {dimension_numbers = #tpu.dot_dimension_numbers<[1], [0], [0], [1], [0, 0, 1, 1], [], []>} : vector<256x16xf32>, vector<16x16xf32>, vector<256x16xf32> -> vector<256x16xf32>
    %cst_21 = arith.constant dense<0.000000e+00> : vector<256x16xf32>
    %18 = tpu.matmul %15, %13, %cst_21 {dimension_numbers = #tpu.dot_dimension_numbers<[1], [0], [0], [1], [0, 0, 1, 1], [], []>} : vector<256x16xf32>, vector<16x16xf32>, vector<256x16xf32> -> vector<256x16xf32>
    %19 = arith.subf %14, %15 : vector<256x16xf32>
    %c0_22 = arith.constant 0 : index
    %c0_23 = arith.constant 0 : index
    %20 = vector.load %arg1[%c0_22, %c0_23] : memref<16x3xf32, #tpu.memory_space<vmem>>, vector<16x3xf32>
    %cst_24 = arith.constant dense<0.000000e+00> : vector<256x3xf32>
    %21 = tpu.matmul %19, %20, %cst_24 {dimension_numbers = #tpu.dot_dimension_numbers<[1], [0], [0], [1], [0, 0, 1, 1], [], []>} : vector<256x16xf32>, vector<16x3xf32>, vector<256x3xf32> -> vector<256x3xf32>
    %c0_25 = arith.constant 0 : index
    %c0_26 = arith.constant 0 : index
    %22 = vector.load %arg10[%c0_25, %c0_26] : memref<3x64xf32, #tpu.memory_space<vmem>>, vector<3x64xf32>
    %cst_27 = arith.constant dense<0.000000e+00> : vector<256x64xf32>
    %23 = tpu.matmul %21, %22, %cst_27 {dimension_numbers = #tpu.dot_dimension_numbers<[1], [0], [0], [1], [0, 0, 1, 1], [], []>} : vector<256x3xf32>, vector<3x64xf32>, vector<256x64xf32> -> vector<256x64xf32>
    %c0_28 = arith.constant 0 : index
    %c0_29 = arith.constant 0 : index
    %24 = vector.load %arg11[%c0_28, %c0_29] : memref<1x64xf32, #tpu.memory_space<vmem>>, vector<1x64xf32>
    %25 = vector.broadcast %24 : vector<1x64xf32> to vector<256x64xf32>
    %26 = arith.addf %23, %25 : vector<256x64xf32>
    %cst_30 = arith.constant 0.000000e+00 : f32
    %27 = vector.broadcast %cst_30 : f32 to vector<256x64xf32>
    %28 = arith.maximumf %26, %27 : vector<256x64xf32>
    %c0_31 = arith.constant 0 : index
    %c0_32 = arith.constant 0 : index
    %29 = vector.load %arg12[%c0_31, %c0_32] : memref<64x16xf32, #tpu.memory_space<vmem>>, vector<64x16xf32>
    %cst_33 = arith.constant dense<0.000000e+00> : vector<256x16xf32>
    %30 = tpu.matmul %28, %29, %cst_33 {dimension_numbers = #tpu.dot_dimension_numbers<[1], [0], [0], [1], [0, 0, 1, 1], [], []>} : vector<256x64xf32>, vector<64x16xf32>, vector<256x16xf32> -> vector<256x16xf32>
    %c0_34 = arith.constant 0 : index
    %c0_35 = arith.constant 0 : index
    %31 = vector.load %arg13[%c0_34, %c0_35] : memref<1x16xf32, #tpu.memory_space<vmem>>, vector<1x16xf32>
    %32 = vector.broadcast %31 : vector<1x16xf32> to vector<256x16xf32>
    %33 = arith.addf %30, %32 : vector<256x16xf32>
    %cst_36 = arith.constant 0.000000e+00 : f32
    %34 = vector.broadcast %cst_36 : f32 to vector<256x16xf32>
    %35 = arith.maximumf %33, %34 : vector<256x16xf32>
    %36 = arith.subf %16, %17 : vector<256x16xf32>
    %37 = arith.addf %36, %35 : vector<256x16xf32>
    %c0_37 = arith.constant 0 : index
    %c0_38 = arith.constant 0 : index
    %38 = vector.load %arg14[%c0_37, %c0_38] : memref<16x64xf32, #tpu.memory_space<vmem>>, vector<16x64xf32>
    %cst_39 = arith.constant dense<0.000000e+00> : vector<256x64xf32>
    %39 = tpu.matmul %37, %38, %cst_39 {dimension_numbers = #tpu.dot_dimension_numbers<[1], [0], [0], [1], [0, 0, 1, 1], [], []>} : vector<256x16xf32>, vector<16x64xf32>, vector<256x64xf32> -> vector<256x64xf32>
    %c0_40 = arith.constant 0 : index
    %c0_41 = arith.constant 0 : index
    %40 = vector.load %arg15[%c0_40, %c0_41] : memref<1x64xf32, #tpu.memory_space<vmem>>, vector<1x64xf32>
    %41 = vector.broadcast %40 : vector<1x64xf32> to vector<256x64xf32>
    %42 = arith.addf %39, %41 : vector<256x64xf32>
    %cst_42 = arith.constant 0.000000e+00 : f32
    %43 = vector.broadcast %cst_42 : f32 to vector<256x64xf32>
    %44 = arith.maximumf %42, %43 : vector<256x64xf32>
    %c0_43 = arith.constant 0 : index
    %c0_44 = arith.constant 0 : index
    %45 = vector.load %arg16[%c0_43, %c0_44] : memref<64x16xf32, #tpu.memory_space<vmem>>, vector<64x16xf32>
    %cst_45 = arith.constant dense<0.000000e+00> : vector<256x16xf32>
    %46 = tpu.matmul %44, %45, %cst_45 {dimension_numbers = #tpu.dot_dimension_numbers<[1], [0], [0], [1], [0, 0, 1, 1], [], []>} : vector<256x64xf32>, vector<64x16xf32>, vector<256x16xf32> -> vector<256x16xf32>
    %c0_46 = arith.constant 0 : index
    %c0_47 = arith.constant 0 : index
    %47 = vector.load %arg17[%c0_46, %c0_47] : memref<1x16xf32, #tpu.memory_space<vmem>>, vector<1x16xf32>
    %48 = vector.broadcast %47 : vector<1x16xf32> to vector<256x16xf32>
    %49 = arith.addf %46, %48 : vector<256x16xf32>
    %cst_48 = arith.constant 0.000000e+00 : f32
    %50 = vector.broadcast %cst_48 : f32 to vector<256x16xf32>
    %51 = arith.maximumf %49, %50 : vector<256x16xf32>
    %c0_49 = arith.constant 0 : index
    %c0_50 = arith.constant 0 : index
    %52 = vector.load %arg2[%c0_49, %c0_50] : memref<256x1xf32, #tpu.memory_space<vmem>>, vector<256x1xf32>
    %cst_51 = arith.constant 5.000000e-01 : f32
    %53 = vector.broadcast %cst_51 : f32 to vector<256x1xf32>
    %54 = arith.cmpf ogt, %52, %53 : vector<256x1xf32>
    %cst_52 = arith.constant 0.000000e+00 : f32
    %cst_53 = arith.constant -1.000000e+30 : f32
    %55 = vector.broadcast %cst_52 : f32 to vector<256x1xf32>
    %56 = vector.broadcast %cst_53 : f32 to vector<256x1xf32>
    %57 = arith.select %54, %55, %56 : vector<256x1xi1>, vector<256x1xf32>
    %58 = vector.broadcast %57 : vector<256x1xf32> to vector<256x16xf32>
    %59 = arith.addf %51, %58 : vector<256x16xf32>
    %60 = arith.addf %18, %35 : vector<256x16xf32>
    %61 = vector.extract_strided_slice %59 {offsets = [0, 0], sizes = [16, 16], strides = [1, 1]} : vector<256x16xf32> to vector<16x16xf32>
    %62 = vector.extract_strided_slice %59 {offsets = [16, 0], sizes = [16, 16], strides = [1, 1]} : vector<256x16xf32> to vector<16x16xf32>
    %63 = arith.maximumf %61, %62 : vector<16x16xf32>
    %64 = vector.extract_strided_slice %59 {offsets = [32, 0], sizes = [16, 16], strides = [1, 1]} : vector<256x16xf32> to vector<16x16xf32>
    %65 = arith.maximumf %63, %64 : vector<16x16xf32>
    %66 = vector.extract_strided_slice %59 {offsets = [48, 0], sizes = [16, 16], strides = [1, 1]} : vector<256x16xf32> to vector<16x16xf32>
    %67 = arith.maximumf %65, %66 : vector<16x16xf32>
    %68 = vector.extract_strided_slice %59 {offsets = [64, 0], sizes = [16, 16], strides = [1, 1]} : vector<256x16xf32> to vector<16x16xf32>
    %69 = arith.maximumf %67, %68 : vector<16x16xf32>
    %70 = vector.extract_strided_slice %59 {offsets = [80, 0], sizes = [16, 16], strides = [1, 1]} : vector<256x16xf32> to vector<16x16xf32>
    %71 = arith.maximumf %69, %70 : vector<16x16xf32>
    %72 = vector.extract_strided_slice %59 {offsets = [96, 0], sizes = [16, 16], strides = [1, 1]} : vector<256x16xf32> to vector<16x16xf32>
    %73 = arith.maximumf %71, %72 : vector<16x16xf32>
    %74 = vector.extract_strided_slice %59 {offsets = [112, 0], sizes = [16, 16], strides = [1, 1]} : vector<256x16xf32> to vector<16x16xf32>
    %75 = arith.maximumf %73, %74 : vector<16x16xf32>
    %76 = vector.extract_strided_slice %59 {offsets = [128, 0], sizes = [16, 16], strides = [1, 1]} : vector<256x16xf32> to vector<16x16xf32>
    %77 = arith.maximumf %75, %76 : vector<16x16xf32>
    %78 = vector.extract_strided_slice %59 {offsets = [144, 0], sizes = [16, 16], strides = [1, 1]} : vector<256x16xf32> to vector<16x16xf32>
    %79 = arith.maximumf %77, %78 : vector<16x16xf32>
    %80 = vector.extract_strided_slice %59 {offsets = [160, 0], sizes = [16, 16], strides = [1, 1]} : vector<256x16xf32> to vector<16x16xf32>
    %81 = arith.maximumf %79, %80 : vector<16x16xf32>
    %82 = vector.extract_strided_slice %59 {offsets = [176, 0], sizes = [16, 16], strides = [1, 1]} : vector<256x16xf32> to vector<16x16xf32>
    %83 = arith.maximumf %81, %82 : vector<16x16xf32>
    %84 = vector.extract_strided_slice %59 {offsets = [192, 0], sizes = [16, 16], strides = [1, 1]} : vector<256x16xf32> to vector<16x16xf32>
    %85 = arith.maximumf %83, %84 : vector<16x16xf32>
    %86 = vector.extract_strided_slice %59 {offsets = [208, 0], sizes = [16, 16], strides = [1, 1]} : vector<256x16xf32> to vector<16x16xf32>
    %87 = arith.maximumf %85, %86 : vector<16x16xf32>
    %88 = vector.extract_strided_slice %59 {offsets = [224, 0], sizes = [16, 16], strides = [1, 1]} : vector<256x16xf32> to vector<16x16xf32>
    %89 = arith.maximumf %87, %88 : vector<16x16xf32>
    %90 = vector.extract_strided_slice %59 {offsets = [240, 0], sizes = [16, 16], strides = [1, 1]} : vector<256x16xf32> to vector<16x16xf32>
    %91 = arith.maximumf %89, %90 : vector<16x16xf32>
    %cst_54 = arith.constant 0.000000e+00 : f32
    %92 = vector.broadcast %cst_54 : f32 to vector<16x16xf32>
    %cst_55 = arith.constant 0.000000e+00 : f32
    %93 = vector.broadcast %cst_55 : f32 to vector<16x16xf32>
    %94 = vector.extract_strided_slice %59 {offsets = [0, 0], sizes = [16, 16], strides = [1, 1]} : vector<256x16xf32> to vector<16x16xf32>
    %95 = arith.subf %94, %91 : vector<16x16xf32>
    %96 = math.exp %95 : vector<16x16xf32>
    %97 = vector.extract_strided_slice %52 {offsets = [0, 0], sizes = [16, 1], strides = [1, 1]} : vector<256x1xf32> to vector<16x1xf32>
    %98 = vector.broadcast %97 : vector<16x1xf32> to vector<16x16xf32>
    %99 = arith.mulf %96, %98 : vector<16x16xf32>
    %100 = arith.addf %93, %99 : vector<16x16xf32>
    %101 = vector.extract_strided_slice %60 {offsets = [0, 0], sizes = [16, 16], strides = [1, 1]} : vector<256x16xf32> to vector<16x16xf32>
    %102 = arith.mulf %99, %101 : vector<16x16xf32>
    %103 = arith.addf %92, %102 : vector<16x16xf32>
    %104 = vector.extract_strided_slice %59 {offsets = [16, 0], sizes = [16, 16], strides = [1, 1]} : vector<256x16xf32> to vector<16x16xf32>
    %105 = arith.subf %104, %91 : vector<16x16xf32>
    %106 = math.exp %105 : vector<16x16xf32>
    %107 = vector.extract_strided_slice %52 {offsets = [16, 0], sizes = [16, 1], strides = [1, 1]} : vector<256x1xf32> to vector<16x1xf32>
    %108 = vector.broadcast %107 : vector<16x1xf32> to vector<16x16xf32>
    %109 = arith.mulf %106, %108 : vector<16x16xf32>
    %110 = arith.addf %100, %109 : vector<16x16xf32>
    %111 = vector.extract_strided_slice %60 {offsets = [16, 0], sizes = [16, 16], strides = [1, 1]} : vector<256x16xf32> to vector<16x16xf32>
    %112 = arith.mulf %109, %111 : vector<16x16xf32>
    %113 = arith.addf %103, %112 : vector<16x16xf32>
    %114 = vector.extract_strided_slice %59 {offsets = [32, 0], sizes = [16, 16], strides = [1, 1]} : vector<256x16xf32> to vector<16x16xf32>
    %115 = arith.subf %114, %91 : vector<16x16xf32>
    %116 = math.exp %115 : vector<16x16xf32>
    %117 = vector.extract_strided_slice %52 {offsets = [32, 0], sizes = [16, 1], strides = [1, 1]} : vector<256x1xf32> to vector<16x1xf32>
    %118 = vector.broadcast %117 : vector<16x1xf32> to vector<16x16xf32>
    %119 = arith.mulf %116, %118 : vector<16x16xf32>
    %120 = arith.addf %110, %119 : vector<16x16xf32>
    %121 = vector.extract_strided_slice %60 {offsets = [32, 0], sizes = [16, 16], strides = [1, 1]} : vector<256x16xf32> to vector<16x16xf32>
    %122 = arith.mulf %119, %121 : vector<16x16xf32>
    %123 = arith.addf %113, %122 : vector<16x16xf32>
    %124 = vector.extract_strided_slice %59 {offsets = [48, 0], sizes = [16, 16], strides = [1, 1]} : vector<256x16xf32> to vector<16x16xf32>
    %125 = arith.subf %124, %91 : vector<16x16xf32>
    %126 = math.exp %125 : vector<16x16xf32>
    %127 = vector.extract_strided_slice %52 {offsets = [48, 0], sizes = [16, 1], strides = [1, 1]} : vector<256x1xf32> to vector<16x1xf32>
    %128 = vector.broadcast %127 : vector<16x1xf32> to vector<16x16xf32>
    %129 = arith.mulf %126, %128 : vector<16x16xf32>
    %130 = arith.addf %120, %129 : vector<16x16xf32>
    %131 = vector.extract_strided_slice %60 {offsets = [48, 0], sizes = [16, 16], strides = [1, 1]} : vector<256x16xf32> to vector<16x16xf32>
    %132 = arith.mulf %129, %131 : vector<16x16xf32>
    %133 = arith.addf %123, %132 : vector<16x16xf32>
    %134 = vector.extract_strided_slice %59 {offsets = [64, 0], sizes = [16, 16], strides = [1, 1]} : vector<256x16xf32> to vector<16x16xf32>
    %135 = arith.subf %134, %91 : vector<16x16xf32>
    %136 = math.exp %135 : vector<16x16xf32>
    %137 = vector.extract_strided_slice %52 {offsets = [64, 0], sizes = [16, 1], strides = [1, 1]} : vector<256x1xf32> to vector<16x1xf32>
    %138 = vector.broadcast %137 : vector<16x1xf32> to vector<16x16xf32>
    %139 = arith.mulf %136, %138 : vector<16x16xf32>
    %140 = arith.addf %130, %139 : vector<16x16xf32>
    %141 = vector.extract_strided_slice %60 {offsets = [64, 0], sizes = [16, 16], strides = [1, 1]} : vector<256x16xf32> to vector<16x16xf32>
    %142 = arith.mulf %139, %141 : vector<16x16xf32>
    %143 = arith.addf %133, %142 : vector<16x16xf32>
    %144 = vector.extract_strided_slice %59 {offsets = [80, 0], sizes = [16, 16], strides = [1, 1]} : vector<256x16xf32> to vector<16x16xf32>
    %145 = arith.subf %144, %91 : vector<16x16xf32>
    %146 = math.exp %145 : vector<16x16xf32>
    %147 = vector.extract_strided_slice %52 {offsets = [80, 0], sizes = [16, 1], strides = [1, 1]} : vector<256x1xf32> to vector<16x1xf32>
    %148 = vector.broadcast %147 : vector<16x1xf32> to vector<16x16xf32>
    %149 = arith.mulf %146, %148 : vector<16x16xf32>
    %150 = arith.addf %140, %149 : vector<16x16xf32>
    %151 = vector.extract_strided_slice %60 {offsets = [80, 0], sizes = [16, 16], strides = [1, 1]} : vector<256x16xf32> to vector<16x16xf32>
    %152 = arith.mulf %149, %151 : vector<16x16xf32>
    %153 = arith.addf %143, %152 : vector<16x16xf32>
    %154 = vector.extract_strided_slice %59 {offsets = [96, 0], sizes = [16, 16], strides = [1, 1]} : vector<256x16xf32> to vector<16x16xf32>
    %155 = arith.subf %154, %91 : vector<16x16xf32>
    %156 = math.exp %155 : vector<16x16xf32>
    %157 = vector.extract_strided_slice %52 {offsets = [96, 0], sizes = [16, 1], strides = [1, 1]} : vector<256x1xf32> to vector<16x1xf32>
    %158 = vector.broadcast %157 : vector<16x1xf32> to vector<16x16xf32>
    %159 = arith.mulf %156, %158 : vector<16x16xf32>
    %160 = arith.addf %150, %159 : vector<16x16xf32>
    %161 = vector.extract_strided_slice %60 {offsets = [96, 0], sizes = [16, 16], strides = [1, 1]} : vector<256x16xf32> to vector<16x16xf32>
    %162 = arith.mulf %159, %161 : vector<16x16xf32>
    %163 = arith.addf %153, %162 : vector<16x16xf32>
    %164 = vector.extract_strided_slice %59 {offsets = [112, 0], sizes = [16, 16], strides = [1, 1]} : vector<256x16xf32> to vector<16x16xf32>
    %165 = arith.subf %164, %91 : vector<16x16xf32>
    %166 = math.exp %165 : vector<16x16xf32>
    %167 = vector.extract_strided_slice %52 {offsets = [112, 0], sizes = [16, 1], strides = [1, 1]} : vector<256x1xf32> to vector<16x1xf32>
    %168 = vector.broadcast %167 : vector<16x1xf32> to vector<16x16xf32>
    %169 = arith.mulf %166, %168 : vector<16x16xf32>
    %170 = arith.addf %160, %169 : vector<16x16xf32>
    %171 = vector.extract_strided_slice %60 {offsets = [112, 0], sizes = [16, 16], strides = [1, 1]} : vector<256x16xf32> to vector<16x16xf32>
    %172 = arith.mulf %169, %171 : vector<16x16xf32>
    %173 = arith.addf %163, %172 : vector<16x16xf32>
    %174 = vector.extract_strided_slice %59 {offsets = [128, 0], sizes = [16, 16], strides = [1, 1]} : vector<256x16xf32> to vector<16x16xf32>
    %175 = arith.subf %174, %91 : vector<16x16xf32>
    %176 = math.exp %175 : vector<16x16xf32>
    %177 = vector.extract_strided_slice %52 {offsets = [128, 0], sizes = [16, 1], strides = [1, 1]} : vector<256x1xf32> to vector<16x1xf32>
    %178 = vector.broadcast %177 : vector<16x1xf32> to vector<16x16xf32>
    %179 = arith.mulf %176, %178 : vector<16x16xf32>
    %180 = arith.addf %170, %179 : vector<16x16xf32>
    %181 = vector.extract_strided_slice %60 {offsets = [128, 0], sizes = [16, 16], strides = [1, 1]} : vector<256x16xf32> to vector<16x16xf32>
    %182 = arith.mulf %179, %181 : vector<16x16xf32>
    %183 = arith.addf %173, %182 : vector<16x16xf32>
    %184 = vector.extract_strided_slice %59 {offsets = [144, 0], sizes = [16, 16], strides = [1, 1]} : vector<256x16xf32> to vector<16x16xf32>
    %185 = arith.subf %184, %91 : vector<16x16xf32>
    %186 = math.exp %185 : vector<16x16xf32>
    %187 = vector.extract_strided_slice %52 {offsets = [144, 0], sizes = [16, 1], strides = [1, 1]} : vector<256x1xf32> to vector<16x1xf32>
    %188 = vector.broadcast %187 : vector<16x1xf32> to vector<16x16xf32>
    %189 = arith.mulf %186, %188 : vector<16x16xf32>
    %190 = arith.addf %180, %189 : vector<16x16xf32>
    %191 = vector.extract_strided_slice %60 {offsets = [144, 0], sizes = [16, 16], strides = [1, 1]} : vector<256x16xf32> to vector<16x16xf32>
    %192 = arith.mulf %189, %191 : vector<16x16xf32>
    %193 = arith.addf %183, %192 : vector<16x16xf32>
    %194 = vector.extract_strided_slice %59 {offsets = [160, 0], sizes = [16, 16], strides = [1, 1]} : vector<256x16xf32> to vector<16x16xf32>
    %195 = arith.subf %194, %91 : vector<16x16xf32>
    %196 = math.exp %195 : vector<16x16xf32>
    %197 = vector.extract_strided_slice %52 {offsets = [160, 0], sizes = [16, 1], strides = [1, 1]} : vector<256x1xf32> to vector<16x1xf32>
    %198 = vector.broadcast %197 : vector<16x1xf32> to vector<16x16xf32>
    %199 = arith.mulf %196, %198 : vector<16x16xf32>
    %200 = arith.addf %190, %199 : vector<16x16xf32>
    %201 = vector.extract_strided_slice %60 {offsets = [160, 0], sizes = [16, 16], strides = [1, 1]} : vector<256x16xf32> to vector<16x16xf32>
    %202 = arith.mulf %199, %201 : vector<16x16xf32>
    %203 = arith.addf %193, %202 : vector<16x16xf32>
    %204 = vector.extract_strided_slice %59 {offsets = [176, 0], sizes = [16, 16], strides = [1, 1]} : vector<256x16xf32> to vector<16x16xf32>
    %205 = arith.subf %204, %91 : vector<16x16xf32>
    %206 = math.exp %205 : vector<16x16xf32>
    %207 = vector.extract_strided_slice %52 {offsets = [176, 0], sizes = [16, 1], strides = [1, 1]} : vector<256x1xf32> to vector<16x1xf32>
    %208 = vector.broadcast %207 : vector<16x1xf32> to vector<16x16xf32>
    %209 = arith.mulf %206, %208 : vector<16x16xf32>
    %210 = arith.addf %200, %209 : vector<16x16xf32>
    %211 = vector.extract_strided_slice %60 {offsets = [176, 0], sizes = [16, 16], strides = [1, 1]} : vector<256x16xf32> to vector<16x16xf32>
    %212 = arith.mulf %209, %211 : vector<16x16xf32>
    %213 = arith.addf %203, %212 : vector<16x16xf32>
    %214 = vector.extract_strided_slice %59 {offsets = [192, 0], sizes = [16, 16], strides = [1, 1]} : vector<256x16xf32> to vector<16x16xf32>
    %215 = arith.subf %214, %91 : vector<16x16xf32>
    %216 = math.exp %215 : vector<16x16xf32>
    %217 = vector.extract_strided_slice %52 {offsets = [192, 0], sizes = [16, 1], strides = [1, 1]} : vector<256x1xf32> to vector<16x1xf32>
    %218 = vector.broadcast %217 : vector<16x1xf32> to vector<16x16xf32>
    %219 = arith.mulf %216, %218 : vector<16x16xf32>
    %220 = arith.addf %210, %219 : vector<16x16xf32>
    %221 = vector.extract_strided_slice %60 {offsets = [192, 0], sizes = [16, 16], strides = [1, 1]} : vector<256x16xf32> to vector<16x16xf32>
    %222 = arith.mulf %219, %221 : vector<16x16xf32>
    %223 = arith.addf %213, %222 : vector<16x16xf32>
    %224 = vector.extract_strided_slice %59 {offsets = [208, 0], sizes = [16, 16], strides = [1, 1]} : vector<256x16xf32> to vector<16x16xf32>
    %225 = arith.subf %224, %91 : vector<16x16xf32>
    %226 = math.exp %225 : vector<16x16xf32>
    %227 = vector.extract_strided_slice %52 {offsets = [208, 0], sizes = [16, 1], strides = [1, 1]} : vector<256x1xf32> to vector<16x1xf32>
    %228 = vector.broadcast %227 : vector<16x1xf32> to vector<16x16xf32>
    %229 = arith.mulf %226, %228 : vector<16x16xf32>
    %230 = arith.addf %220, %229 : vector<16x16xf32>
    %231 = vector.extract_strided_slice %60 {offsets = [208, 0], sizes = [16, 16], strides = [1, 1]} : vector<256x16xf32> to vector<16x16xf32>
    %232 = arith.mulf %229, %231 : vector<16x16xf32>
    %233 = arith.addf %223, %232 : vector<16x16xf32>
    %234 = vector.extract_strided_slice %59 {offsets = [224, 0], sizes = [16, 16], strides = [1, 1]} : vector<256x16xf32> to vector<16x16xf32>
    %235 = arith.subf %234, %91 : vector<16x16xf32>
    %236 = math.exp %235 : vector<16x16xf32>
    %237 = vector.extract_strided_slice %52 {offsets = [224, 0], sizes = [16, 1], strides = [1, 1]} : vector<256x1xf32> to vector<16x1xf32>
    %238 = vector.broadcast %237 : vector<16x1xf32> to vector<16x16xf32>
    %239 = arith.mulf %236, %238 : vector<16x16xf32>
    %240 = arith.addf %230, %239 : vector<16x16xf32>
    %241 = vector.extract_strided_slice %60 {offsets = [224, 0], sizes = [16, 16], strides = [1, 1]} : vector<256x16xf32> to vector<16x16xf32>
    %242 = arith.mulf %239, %241 : vector<16x16xf32>
    %243 = arith.addf %233, %242 : vector<16x16xf32>
    %244 = vector.extract_strided_slice %59 {offsets = [240, 0], sizes = [16, 16], strides = [1, 1]} : vector<256x16xf32> to vector<16x16xf32>
    %245 = arith.subf %244, %91 : vector<16x16xf32>
    %246 = math.exp %245 : vector<16x16xf32>
    %247 = vector.extract_strided_slice %52 {offsets = [240, 0], sizes = [16, 1], strides = [1, 1]} : vector<256x1xf32> to vector<16x1xf32>
    %248 = vector.broadcast %247 : vector<16x1xf32> to vector<16x16xf32>
    %249 = arith.mulf %246, %248 : vector<16x16xf32>
    %250 = arith.addf %240, %249 : vector<16x16xf32>
    %251 = vector.extract_strided_slice %60 {offsets = [240, 0], sizes = [16, 16], strides = [1, 1]} : vector<256x16xf32> to vector<16x16xf32>
    %252 = arith.mulf %249, %251 : vector<16x16xf32>
    %253 = arith.addf %243, %252 : vector<16x16xf32>
    %254 = tpu.reciprocal %250 {approx = true} : vector<16x16xf32> -> vector<16x16xf32>
    %255 = arith.mulf %253, %254 : vector<16x16xf32>
    %c0_56 = arith.constant 0 : index
    %c0_57 = arith.constant 0 : index
    %256 = vector.load %arg18[%c0_56, %c0_57] : memref<16x16xf32, #tpu.memory_space<vmem>>, vector<16x16xf32>
    %cst_58 = arith.constant dense<0.000000e+00> : vector<16x16xf32>
    %257 = tpu.matmul %255, %256, %cst_58 {dimension_numbers = #tpu.dot_dimension_numbers<[1], [0], [0], [1], [0, 0, 1, 1], [], []>} : vector<16x16xf32>, vector<16x16xf32>, vector<16x16xf32> -> vector<16x16xf32>
    %c0_59 = arith.constant 0 : index
    %c0_60 = arith.constant 0 : index
    %258 = vector.load %arg19[%c0_59, %c0_60] : memref<1x16xf32, #tpu.memory_space<vmem>>, vector<1x16xf32>
    %259 = vector.broadcast %258 : vector<1x16xf32> to vector<16x16xf32>
    %260 = arith.addf %257, %259 : vector<16x16xf32>
    %cst_61 = arith.constant 0.000000e+00 : f32
    %261 = vector.broadcast %cst_61 : f32 to vector<16x16xf32>
    %262 = arith.maximumf %260, %261 : vector<16x16xf32>
    %c0_62 = arith.constant 0 : index
    %c0_63 = arith.constant 0 : index
    %263 = vector.load %arg20[%c0_62, %c0_63] : memref<16x16xf32, #tpu.memory_space<vmem>>, vector<16x16xf32>
    tpu.vector_store %arg20[%c0_62, %c0_63], %262 {strides = array<i32>} : memref<16x16xf32, #tpu.memory_space<vmem>>, vector<16x16xf32>,
    return
  }
}

</mosaic_0001>

<llo_original>
// kernel: transformer_block.1
$region0: #{transformer_block.1}
  #allocation0 [shape = 'u32[]', space=smem, size = 0x4, offset = 0x4, fixed_abs, tag = 'smem constant byte address 0x4 - core index']
  #allocation1 [shape = 'u32[144,128]{1,0:T(1,128)}', space=vmem, size = 0x12000, scoped, tag = 'internal scratch']
  %s0 = inlined_call_operand.vmem [shape: f32[16,8], index: 0, kind: input, shape index: {}]
  %s1 = inlined_call_operand.vmem [shape: f32[16,3], index: 1, kind: input, shape index: {}]
  %s2 = inlined_call_operand.vmem [shape: f32[256,1], index: 2, kind: input, shape index: {}]
  %s3 = inlined_call_operand.vmem [shape: f32[256,16], index: 3, kind: input, shape index: {}]
  %s4 = inlined_call_operand.vmem [shape: f32[256,16], index: 4, kind: input, shape index: {}]
  %s5 = inlined_call_operand.vmem [shape: f32[8,8], index: 5, kind: input, shape index: {}]
  %s6 = inlined_call_operand.vmem [shape: f32[1,8], index: 6, kind: input, shape index: {}]
  %s7 = inlined_call_operand.vmem [shape: f32[8,16], index: 7, kind: input, shape index: {}]
  %s8 = inlined_call_operand.vmem [shape: f32[8,16], index: 8, kind: input, shape index: {}]
  %s9 = inlined_call_operand.vmem [shape: f32[8,16], index: 9, kind: input, shape index: {}]
  %s10 = inlined_call_operand.vmem [shape: f32[3,64], index: 10, kind: input, shape index: {}]
  %s11 = inlined_call_operand.vmem [shape: f32[1,64], index: 11, kind: input, shape index: {}]
  %s12 = inlined_call_operand.vmem [shape: f32[64,16], index: 12, kind: input, shape index: {}]
  %s13 = inlined_call_operand.vmem [shape: f32[1,16], index: 13, kind: input, shape index: {}]
  %s14 = inlined_call_operand.vmem [shape: f32[16,64], index: 14, kind: input, shape index: {}]
  %s15 = inlined_call_operand.vmem [shape: f32[1,64], index: 15, kind: input, shape index: {}]
  %s16 = inlined_call_operand.vmem [shape: f32[64,16], index: 16, kind: input, shape index: {}]
  %s17 = inlined_call_operand.vmem [shape: f32[1,16], index: 17, kind: input, shape index: {}]
  %s18 = inlined_call_operand.vmem [shape: f32[16,16], index: 18, kind: input, shape index: {}]
  %s19 = inlined_call_operand.vmem [shape: f32[1,16], index: 19, kind: input, shape index: {}]
  %s20 = inlined_call_operand.hbm [shape: f32[16,16], index: 20, kind: output, shape index: {}]
  %s21 = sld [smem:[#allocation0]]
  $region90: #{transformer_block.1} parent=0
    _
  %s23 = ssub.s32 1, %s21
  %s24 = scalar_select 0, %s23, %s21
  $region1: #{transformer_block.1} parent=0
    #allocation2 [shape = 'u8[8192]{0}', space=vmem, size = 0x2000, scoped, tag = 'output window, operand 0, single buffered']
    #allocation3 [shape = 's32[1]{0}', space=sflag, size = 0x4, scoped, tag = 'scoped memory for transformer_block.1']
    %25 = vsyncpa [#allocation3], 0
    // Predicated region
    $region2: #{transformer_block.1} parent=1 // pred_check
      _
    $region3: #{transformer_block.1} parent=1 // pred_check_branch
      %27 = sbr.rel (0) target = $region5
    $region4: #{transformer_block.1} parent=1 // pred_region
      _
    $region5: #{transformer_block.1} parent=1 // pred_fallthru
      _
    // Predicated region
    $region6: #{transformer_block.1} parent=1 // pred_check
      _
    $region7: #{transformer_block.1} parent=1 // pred_check_branch
      %29 = sbr.rel (0) target = $region9
    $region8: #{transformer_block.1} parent=1 // pred_region
      _
    $region9: #{transformer_block.1} parent=1 // pred_fallthru
      _
    // Predicated region
    $region10: #{transformer_block.1} parent=1 // pred_check
      _
    $region11: #{transformer_block.1} parent=1 // pred_check_branch
      %31 = sbr.rel (0) target = $region13
    $region12: #{transformer_block.1} parent=1 // pred_region
      _
    $region13: #{transformer_block.1} parent=1 // pred_fallthru
      _
    // Predicated region
    $region14: #{transformer_block.1} parent=1 // pred_check
      _
    $region15: #{transformer_block.1} parent=1 // pred_check_branch
      %33 = sbr.rel (0) target = $region17
    $region16: #{transformer_block.1} parent=1 // pred_region
      _
    $region17: #{transformer_block.1} parent=1 // pred_fallthru
      _
    // Predicated region
    $region18: #{transformer_block.1} parent=1 // pred_check
      _
    $region19: #{transformer_block.1} parent=1 // pred_check_branch
      %35 = sbr.rel (0) target = $region21
    $region20: #{transformer_block.1} parent=1 // pred_region
      _
    $region21: #{transformer_block.1} parent=1 // pred_fallthru
      _
    // Predicated region
    $region22: #{transformer_block.1} parent=1 // pred_check
      _
    $region23: #{transformer_block.1} parent=1 // pred_check_branch
      %37 = sbr.rel (0) target = $region25
    $region24: #{transformer_block.1} parent=1 // pred_region
      _
    $region25: #{transformer_block.1} parent=1 // pred_fallthru
      _
    // Predicated region
    $region26: #{transformer_block.1} parent=1 // pred_check
      _
    $region27: #{transformer_block.1} parent=1 // pred_check_branch
      %39 = sbr.rel (0) target = $region29
    $region28: #{transformer_block.1} parent=1 // pred_region
      _
    $region29: #{transformer_block.1} parent=1 // pred_fallthru
      _
    // Predicated region
    $region30: #{transformer_block.1} parent=1 // pred_check
      _
    $region31: #{transformer_block.1} parent=1 // pred_check_branch
      %41 = sbr.rel (0) target = $region33
    $region32: #{transformer_block.1} parent=1 // pred_region
      _
    $region33: #{transformer_block.1} parent=1 // pred_fallthru
      _
    // Predicated region
    $region34: #{transformer_block.1} parent=1 // pred_check
      _
    $region35: #{transformer_block.1} parent=1 // pred_check_branch
      %43 = sbr.rel (0) target = $region37
    $region36: #{transformer_block.1} parent=1 // pred_region
      _
    $region37: #{transformer_block.1} parent=1 // pred_fallthru
      _
    // Predicated region
    $region38: #{transformer_block.1} parent=1 // pred_check
      _
    $region39: #{transformer_block.1} parent=1 // pred_check_branch
      %45 = sbr.rel (0) target = $region41
    $region40: #{transformer_block.1} parent=1 // pred_region
      _
    $region41: #{transformer_block.1} parent=1 // pred_fallthru
      _
    // Predicated region
    $region42: #{transformer_block.1} parent=1 // pred_check
      _
    $region43: #{transformer_block.1} parent=1 // pred_check_branch
      %47 = sbr.rel (0) target = $region45
    $region44: #{transformer_block.1} parent=1 // pred_region
      _
    $region45: #{transformer_block.1} parent=1 // pred_fallthru
      _
    // Predicated region
    $region46: #{transformer_block.1} parent=1 // pred_check
      _
    $region47: #{transformer_block.1} parent=1 // pred_check_branch
      %49 = sbr.rel (0) target = $region49
    $region48: #{transformer_block.1} parent=1 // pred_region
      _
    $region49: #{transformer_block.1} parent=1 // pred_fallthru
      _
    // Predicated region
    $region50: #{transformer_block.1} parent=1 // pred_check
      _
    $region51: #{transformer_block.1} parent=1 // pred_check_branch
      %51 = sbr.rel (0) target = $region53
    $region52: #{transformer_block.1} parent=1 // pred_region
      _
    $region53: #{transformer_block.1} parent=1 // pred_fallthru
      _
    // Predicated region
    $region54: #{transformer_block.1} parent=1 // pred_check
      _
    $region55: #{transformer_block.1} parent=1 // pred_check_branch
      %53 = sbr.rel (0) target = $region57
    $region56: #{transformer_block.1} parent=1 // pred_region
      _
    $region57: #{transformer_block.1} parent=1 // pred_fallthru
      _
    // Predicated region
    $region58: #{transformer_block.1} parent=1 // pred_check
      _
    $region59: #{transformer_block.1} parent=1 // pred_check_branch
      %55 = sbr.rel (0) target = $region61
    $region60: #{transformer_block.1} parent=1 // pred_region
      _
    $region61: #{transformer_block.1} parent=1 // pred_fallthru
      _
    // Predicated region
    $region62: #{transformer_block.1} parent=1 // pred_check
      _
    $region63: #{transformer_block.1} parent=1 // pred_check_branch
      %57 = sbr.rel (0) target = $region65
    $region64: #{transformer_block.1} parent=1 // pred_region
      _
    $region65: #{transformer_block.1} parent=1 // pred_fallthru
      _
    // Predicated region
    $region66: #{transformer_block.1} parent=1 // pred_check
      _
    $region67: #{transformer_block.1} parent=1 // pred_check_branch
      %59 = sbr.rel (0) target = $region69
    $region68: #{transformer_block.1} parent=1 // pred_region
      _
    $region69: #{transformer_block.1} parent=1 // pred_fallthru
      _
    // Predicated region
    $region70: #{transformer_block.1} parent=1 // pred_check
      _
    $region71: #{transformer_block.1} parent=1 // pred_check_branch
      %61 = sbr.rel (0) target = $region73
    $region72: #{transformer_block.1} parent=1 // pred_region
      _
    $region73: #{transformer_block.1} parent=1 // pred_fallthru
      _
    // Predicated region
    $region74: #{transformer_block.1} parent=1 // pred_check
      _
    $region75: #{transformer_block.1} parent=1 // pred_check_branch
      %63 = sbr.rel (0) target = $region77
    $region76: #{transformer_block.1} parent=1 // pred_region
      _
    $region77: #{transformer_block.1} parent=1 // pred_fallthru
      _
    // Predicated region
    $region78: #{transformer_block.1} parent=1 // pred_check
      _
    $region79: #{transformer_block.1} parent=1 // pred_check_branch
      %65 = sbr.rel (0) target = $region81
    $region80: #{transformer_block.1} parent=1 // pred_region
      _
    $region81: #{transformer_block.1} parent=1 // pred_fallthru
      _
    %v66 = vld [vmem:[%s0] sm:$0xff]
    %v67 = vld [vmem:[%s0 + $0x8] sm:$0xff]
    %v68 = vld [vmem:[%s5] sm:$0xff]
    %v69 = vld [vmem:[%s6] sm:$0x1]
    %v71 = vlaneseq
    %v72 = vshrl.u32 %v71, 7
    %v73 = vsub.s32 0, %v72
    %v74 = vrot.slane %v69, %v73
    %vm76 = vcmask 64512
    %v78 = vsel %vm76, %v66, 0
    %v81 = vsel %vm76, %v67, 0
    %83 = vmatprep.subr.mxu0 0.0
    %84 = vmatpush1.msra.mxu0 %v68
    %85 = vmatprep.subr.mxu0 0.0
    %86 = vmatpush1.msra.mxu0 0.0
    %87 = vmatprep.subr.mxu0 0.0
    %88 = vmatpush1.msra.mxu0 0.0
    %89 = vmatprep.subr.mxu0 0.0
    %90 = vmatpush1.msra.mxu0 0.0
    %91 = vmatprep.subr.mxu0 0.0
    %92 = vmatpush1.msra.mxu0 0.0
    %93 = vmatprep.subr.mxu0 0.0
    %94 = vmatpush1.msra.mxu0 0.0
    %95 = vmatprep.subr.mxu0 0.0
    %96 = vmatpush1.msra.mxu0 0.0
    %97 = vmatprep.subr.mxu0 0.0
    %98 = vmatpush1.msra.mxu0 0.0
    %99 = vmatprep.subr.mxu0 0.0
    %100 = vmatpush1.msra.mxu0 0.0
    %101 = vmatprep.subr.mxu0 0.0
    %102 = vmatpush1.msra.mxu0 0.0
    %103 = vmatprep.subr.mxu0 0.0
    %104 = vmatpush1.msra.mxu0 0.0
    %105 = vmatprep.subr.mxu0 0.0
    %106 = vmatpush1.msra.mxu0 0.0
    %107 = vmatprep.subr.mxu0 0.0
    %108 = vmatpush1.msra.mxu0 0.0
    %109 = vmatprep.subr.mxu0 0.0
    %110 = vmatpush1.msra.mxu0 0.0
    %111 = vmatprep.subr.mxu0 0.0
    %112 = vmatpush1.msra.mxu0 0.0
    %113 = vmatprep.subr.mxu0 0.0
    %114 = vmatpush1.msra.mxu0 0.0
    %115 = vmatprep.subr.mxu0 0.0
    %116 = vmatpush1.msra.mxu0 0.0
    %117 = vmatprep.subr.mxu0 0.0
    %118 = vmatpush1.msra.mxu0 0.0
    %119 = vmatprep.subr.mxu0 0.0
    %120 = vmatpush1.msra.mxu0 0.0
    %121 = vmatprep.subr.mxu0 0.0
    %122 = vmatpush1.msra.mxu0 0.0
    %123 = vmatprep.subr.mxu0 0.0
    %124 = vmatpush1.msra.mxu0 0.0
    %125 = vmatprep.subr.mxu0 0.0
    %126 = vmatpush1.msra.mxu0 0.0
    %127 = vmatprep.subr.mxu0 0.0
    %128 = vmatpush1.msra.mxu0 0.0
    %129 = vmatprep.subr.mxu0 0.0
    %130 = vmatpush1.msra.mxu0 0.0
    %131 = vmatprep.subr.mxu0 0.0
    %132 = vmatpush1.msra.mxu0 0.0
    %133 = vmatprep.subr.mxu0 0.0
    %134 = vmatpush1.msra.mxu0 0.0
    %135 = vmatprep.subr.mxu0 0.0
    %136 = vmatpush1.msra.mxu0 0.0
    %137 = vmatprep.subr.mxu0 0.0
    %138 = vmatpush1.msra.mxu0 0.0
    %139 = vmatprep.subr.mxu0 0.0
    %140 = vmatpush1.msra.mxu0 0.0
    %141 = vmatprep.subr.mxu0 0.0
    %142 = vmatpush1.msra.mxu0 0.0
    %143 = vmatprep.subr.mxu0 0.0
    %144 = vmatpush1.msra.mxu0 0.0
    %145 = vmatprep.subr.mxu0 0.0
    %146 = vmatpush1.msra.mxu0 0.0
    %147 = vmatprep.mubr.f32.mxu0 0.0
    %148 = vmatmul.mubr.f32.gmra.mrb[0].mxu0 %v78
    %v149 = vpop.f32.mrb[0].mxu0
    %v150 = vadd.f32 %v74, %v149
    %v151 = vpop.f32.mrb[0].mxu0
    %152 = vmatprep.mubr.f32.mxu0 0.0
    %153 = vmatmul.mubr.f32.gmra.mrb[0].mxu0 %v81
    %v154 = vpop.f32.mrb[0].mxu0
    %v155 = vadd.f32 %v74, %v154
    %v156 = vpop.f32.mrb[0].mxu0
    %157 = vdwg.mxu0
    %v158 = vmax.f32 %v150, 0.0
    %v159 = vmax.f32 %v155, 0.0
    %v160 = vld [vmem:[%s7] sm:$0xff]
    %v162 = vsel %vm76, %v158, 0
    %v165 = vsel %vm76, %v159, 0
    %167 = vmatprep.subr.mxu0 0.0
    %168 = vmatpush1.msra.mxu0 %v160
    %169 = vmatprep.subr.mxu0 0.0
    %170 = vmatpush1.msra.mxu0 0.0
    %171 = vmatprep.subr.mxu0 0.0
    %172 = vmatpush1.msra.mxu0 0.0
    %173 = vmatprep.subr.mxu0 0.0
    %174 = vmatpush1.msra.mxu0 0.0
    %175 = vmatprep.subr.mxu0 0.0
    %176 = vmatpush1.msra.mxu0 0.0
    %177 = vmatprep.subr.mxu0 0.0
    %178 = vmatpush1.msra.mxu0 0.0
    %179 = vmatprep.subr.mxu0 0.0
    %180 = vmatpush1.msra.mxu0 0.0
    %181 = vmatprep.subr.mxu0 0.0
    %182 = vmatpush1.msra.mxu0 0.0
    %183 = vmatprep.subr.mxu0 0.0
    %184 = vmatpush1.msra.mxu0 0.0
    %185 = vmatprep.subr.mxu0 0.0
    %186 = vmatpush1.msra.mxu0 0.0
    %187 = vmatprep.subr.mxu0 0.0
    %188 = vmatpush1.msra.mxu0 0.0
    %189 = vmatprep.subr.mxu0 0.0
    %190 = vmatpush1.msra.mxu0 0.0
    %191 = vmatprep.subr.mxu0 0.0
    %192 = vmatpush1.msra.mxu0 0.0
    %193 = vmatprep.subr.mxu0 0.0
    %194 = vmatpush1.msra.mxu0 0.0
    %195 = vmatprep.subr.mxu0 0.0
    %196 = vmatpush1.msra.mxu0 0.0
    %197 = vmatprep.subr.mxu0 0.0
    %198 = vmatpush1.msra.mxu0 0.0
    %199 = vmatprep.subr.mxu0 0.0
    %200 = vmatpush1.msra.mxu0 0.0
    %201 = vmatprep.subr.mxu0 0.0
    %202 = vmatpush1.msra.mxu0 0.0
    %203 = vmatprep.subr.mxu0 0.0
    %204 = vmatpush1.msra.mxu0 0.0
    %205 = vmatprep.subr.mxu0 0.0
    %206 = vmatpush1.msra.mxu0 0.0
    %207 = vmatprep.subr.mxu0 0.0
    %208 = vmatpush1.msra.mxu0 0.0
    %209 = vmatprep.subr.mxu0 0.0
    %210 = vmatpush1.msra.mxu0 0.0
    %211 = vmatprep.subr.mxu0 0.0
    %212 = vmatpush1.msra.mxu0 0.0
    %213 = vmatprep.subr.mxu0 0.0
    %214 = vmatpush1.msra.mxu0 0.0
    %215 = vmatprep.subr.mxu0 0.0
    %216 = vmatpush1.msra.mxu0 0.0
    %217 = vmatprep.subr.mxu0 0.0
    %218 = vmatpush1.msra.mxu0 0.0
    %219 = vmatprep.subr.mxu0 0.0
    %220 = vmatpush1.msra.mxu0 0.0
    %221 = vmatprep.subr.mxu0 0.0
    %222 = vmatpush1.msra.mxu0 0.0
    %223 = vmatprep.subr.mxu0 0.0
    %224 = vmatpush1.msra.mxu0 0.0
    %225 = vmatprep.subr.mxu0 0.0
    %226 = vmatpush1.msra.mxu0 0.0
    %227 = vmatprep.subr.mxu0 0.0
    %228 = vmatpush1.msra.mxu0 0.0
    %229 = vmatprep.subr.mxu0 0.0
    %230 = vmatpush1.msra.mxu0 0.0
    %231 = vmatprep.mubr.f32.mxu0 0.0
    %232 = vmatmul.mubr.f32.gmra.mrb[0].mxu0 %v162
    %v233 = vpop.f32.mrb[0].mxu0
    %v234 = vadd.f32 0.0, %v233
    %v235 = vpop.f32.mrb[0].mxu0
    %236 = vmatprep.mubr.f32.mxu0 0.0
    %237 = vmatmul.mubr.f32.gmra.mrb[0].mxu0 %v165
    %v238 = vpop.f32.mrb[0].mxu0
    %v239 = vadd.f32 0.0, %v238
    %v240 = vpop.f32.mrb[0].mxu0
    %241 = vdwg.mxu0
    %v242 = vld [vmem:[%s8] sm:$0xff]
    %243 = vmatprep.subr.mxu0 0.0
    %244 = vmatpush1.msra.mxu0 %v242
    %245 = vmatprep.subr.mxu0 0.0
    %246 = vmatpush1.msra.mxu0 0.0
    %247 = vmatprep.subr.mxu0 0.0
    %248 = vmatpush1.msra.mxu0 0.0
    %249 = vmatprep.subr.mxu0 0.0
    %250 = vmatpush1.msra.mxu0 0.0
    %251 = vmatprep.subr.mxu0 0.0
    %252 = vmatpush1.msra.mxu0 0.0
    %253 = vmatprep.subr.mxu0 0.0
    %254 = vmatpush1.msra.mxu0 0.0
    %255 = vmatprep.subr.mxu0 0.0
    %256 = vmatpush1.msra.mxu0 0.0
    %257 = vmatprep.subr.mxu0 0.0
    %258 = vmatpush1.msra.mxu0 0.0
    %259 = vmatprep.subr.mxu0 0.0
    %260 = vmatpush1.msra.mxu0 0.0
    %261 = vmatprep.subr.mxu0 0.0
    %262 = vmatpush1.msra.mxu0 0.0
    %263 = vmatprep.subr.mxu0 0.0
    %264 = vmatpush1.msra.mxu0 0.0
    %265 = vmatprep.subr.mxu0 0.0
    %266 = vmatpush1.msra.mxu0 0.0
    %267 = vmatprep.subr.mxu0 0.0
    %268 = vmatpush1.msra.mxu0 0.0
    %269 = vmatprep.subr.mxu0 0.0
    %270 = vmatpush1.msra.mxu0 0.0
    %271 = vmatprep.subr.mxu0 0.0
    %272 = vmatpush1.msra.mxu0 0.0
    %273 = vmatprep.subr.mxu0 0.0
    %274 = vmatpush1.msra.mxu0 0.0
    %275 = vmatprep.subr.mxu0 0.0
    %276 = vmatpush1.msra.mxu0 0.0
    %277 = vmatprep.subr.mxu0 0.0
    %278 = vmatpush1.msra.mxu0 0.0
    %279 = vmatprep.subr.mxu0 0.0
    %280 = vmatpush1.msra.mxu0 0.0
    %281 = vmatprep.subr.mxu0 0.0
    %282 = vmatpush1.msra.mxu0 0.0
    %283 = vmatprep.subr.mxu0 0.0
    %284 = vmatpush1.msra.mxu0 0.0
    %285 = vmatprep.subr.mxu0 0.0
    %286 = vmatpush1.msra.mxu0 0.0
    %287 = vmatprep.subr.mxu0 0.0
    %288 = vmatpush1.msra.mxu0 0.0
    %289 = vmatprep.subr.mxu0 0.0
    %290 = vmatpush1.msra.mxu0 0.0
    %291 = vmatprep.subr.mxu0 0.0
    %292 = vmatpush1.msra.mxu0 0.0
    %293 = vmatprep.subr.mxu0 0.0
    %294 = vmatpush1.msra.mxu0 0.0
    %295 = vmatprep.subr.mxu0 0.0
    %296 = vmatpush1.msra.mxu0 0.0
    %297 = vmatprep.subr.mxu0 0.0
    %298 = vmatpush1.msra.mxu0 0.0
    %299 = vmatprep.subr.mxu0 0.0
    %300 = vmatpush1.msra.mxu0 0.0
    %301 = vmatprep.subr.mxu0 0.0
    %302 = vmatpush1.msra.mxu0 0.0
    %303 = vmatprep.subr.mxu0 0.0
    %304 = vmatpush1.msra.mxu0 0.0
    %305 = vmatprep.subr.mxu0 0.0
    %306 = vmatpush1.msra.mxu0 0.0
    %307 = vmatprep.mubr.f32.mxu0 0.0
    %308 = vmatmul.mubr.f32.gmra.mrb[0].mxu0 %v162
    %v309 = vpop.f32.mrb[0].mxu0
    %v310 = vadd.f32 0.0, %v309
    %v311 = vpop.f32.mrb[0].mxu0
    %312 = vmatprep.mubr.f32.mxu0 0.0
    %313 = vmatmul.mubr.f32.gmra.mrb[0].mxu0 %v165
    %v314 = vpop.f32.mrb[0].mxu0
    %v315 = vadd.f32 0.0, %v314
    %v316 = vpop.f32.mrb[0].mxu0
    %317 = vdwg.mxu0
    %v318 = vld [vmem:[%s9] sm:$0xff]
    %319 = vmatprep.subr.mxu0 0.0
    %320 = vmatpush1.msra.mxu0 %v318
    %321 = vmatprep.subr.mxu0 0.0
    %322 = vmatpush1.msra.mxu0 0.0
    %323 = vmatprep.subr.mxu0 0.0
    %324 = vmatpush1.msra.mxu0 0.0
    %325 = vmatprep.subr.mxu0 0.0
    %326 = vmatpush1.msra.mxu0 0.0
    %327 = vmatprep.subr.mxu0 0.0
    %328 = vmatpush1.msra.mxu0 0.0
    %329 = vmatprep.subr.mxu0 0.0
    %330 = vmatpush1.msra.mxu0 0.0
    %331 = vmatprep.subr.mxu0 0.0
    %332 = vmatpush1.msra.mxu0 0.0
    %333 = vmatprep.subr.mxu0 0.0
    %334 = vmatpush1.msra.mxu0 0.0
    %335 = vmatprep.subr.mxu0 0.0
    %336 = vmatpush1.msra.mxu0 0.0
    %337 = vmatprep.subr.mxu0 0.0
    %338 = vmatpush1.msra.mxu0 0.0
    %339 = vmatprep.subr.mxu0 0.0
    %340 = vmatpush1.msra.mxu0 0.0
    %341 = vmatprep.subr.mxu0 0.0
    %342 = vmatpush1.msra.mxu0 0.0
    %343 = vmatprep.subr.mxu0 0.0
    %344 = vmatpush1.msra.mxu0 0.0
    %345 = vmatprep.subr.mxu0 0.0
    %346 = vmatpush1.msra.mxu0 0.0
    %347 = vmatprep.subr.mxu0 0.0
    %348 = vmatpush1.msra.mxu0 0.0
    %349 = vmatprep.subr.mxu0 0.0
    %350 = vmatpush1.msra.mxu0 0.0
    %351 = vmatprep.subr.mxu0 0.0
    %352 = vmatpush1.msra.mxu0 0.0
    %353 = vmatprep.subr.mxu0 0.0
    %354 = vmatpush1.msra.mxu0 0.0
    %355 = vmatprep.subr.mxu0 0.0
    %356 = vmatpush1.msra.mxu0 0.0
    %357 = vmatprep.subr.mxu0 0.0
    %358 = vmatpush1.msra.mxu0 0.0
    %359 = vmatprep.subr.mxu0 0.0
    %360 = vmatpush1.msra.mxu0 0.0
    %361 = vmatprep.subr.mxu0 0.0
    %362 = vmatpush1.msra.mxu0 0.0
    %363 = vmatprep.subr.mxu0 0.0
    %364 = vmatpush1.msra.mxu0 0.0
    %365 = vmatprep.subr.mxu0 0.0
    %366 = vmatpush1.msra.mxu0 0.0
    %367 = vmatprep.subr.mxu0 0.0
    %368 = vmatpush1.msra.mxu0 0.0
    %369 = vmatprep.subr.mxu0 0.0
    %370 = vmatpush1.msra.mxu0 0.0
    %371 = vmatprep.subr.mxu0 0.0
    %372 = vmatpush1.msra.mxu0 0.0
    %373 = vmatprep.subr.mxu0 0.0
    %374 = vmatpush1.msra.mxu0 0.0
    %375 = vmatprep.subr.mxu0 0.0
    %376 = vmatpush1.msra.mxu0 0.0
    %377 = vmatprep.subr.mxu0 0.0
    %378 = vmatpush1.msra.mxu0 0.0
    %379 = vmatprep.subr.mxu0 0.0
    %380 = vmatpush1.msra.mxu0 0.0
    %381 = vmatprep.subr.mxu0 0.0
    %382 = vmatpush1.msra.mxu0 0.0
    %383 = vmatprep.mubr.f32.mxu0 0.0
    %384 = vmatmul.mubr.f32.gmra.mrb[0].mxu0 %v162
    %v385 = vpop.f32.mrb[0].mxu0
    %v386 = vadd.f32 0.0, %v385
    %v387 = vpop.f32.mrb[0].mxu0
    %388 = vmatprep.mubr.f32.mxu0 0.0
    %389 = vmatmul.mubr.f32.gmra.mrb[0].mxu0 %v165
    %v390 = vpop.f32.mrb[0].mxu0
    %v391 = vadd.f32 0.0, %v390
    %v392 = vpop.f32.mrb[0].mxu0
    %393 = vdwg.mxu0
    %v394 = vld [vmem:[%s3] sm:$0xff]
    %v395 = vld [vmem:[%s3 + $0x8] sm:$0xff]
    %v396 = vld [vmem:[%s3 + $0x10] sm:$0xff]
    %v397 = vld [vmem:[%s3 + $0x18] sm:$0xff]
    %v398 = vld [vmem:[%s3 + $0x20] sm:$0xff]
    %v399 = vld [vmem:[%s3 + $0x28] sm:$0xff]
    %v400 = vld [vmem:[%s3 + $0x30] sm:$0xff]
    %v401 = vld [vmem:[%s3 + $0x38] sm:$0xff]
    %v402 = vld [vmem:[%s3 + $0x40] sm:$0xff]
    %v403 = vld [vmem:[%s3 + $0x48] sm:$0xff]
    %v404 = vld [vmem:[%s3 + $0x50] sm:$0xff]
    %v405 = vld [vmem:[%s3 + $0x58] sm:$0xff]
    %v406 = vld [vmem:[%s3 + $0x60] sm:$0xff]
    %v407 = vld [vmem:[%s3 + $0x68] sm:$0xff]
    %v408 = vld [vmem:[%s3 + $0x70] sm:$0xff]
    %v409 = vld [vmem:[%s3 + $0x78] sm:$0xff]
    %v410 = vld [vmem:[%s3 + $0x80] sm:$0xff]
    %v411 = vld [vmem:[%s3 + $0x88] sm:$0xff]
    %v412 = vld [vmem:[%s3 + $0x90] sm:$0xff]
    %v413 = vld [vmem:[%s3 + $0x98] sm:$0xff]
    %v414 = vld [vmem:[%s3 + $0xa0] sm:$0xff]
    %v415 = vld [vmem:[%s3 + $0xa8] sm:$0xff]
    %v416 = vld [vmem:[%s3 + $0xb0] sm:$0xff]
    %v417 = vld [vmem:[%s3 + $0xb8] sm:$0xff]
    %v418 = vld [vmem:[%s3 + $0xc0] sm:$0xff]
    %v419 = vld [vmem:[%s3 + $0xc8] sm:$0xff]
    %v420 = vld [vmem:[%s3 + $0xd0] sm:$0xff]
    %v421 = vld [vmem:[%s3 + $0xd8] sm:$0xff]
    %v422 = vld [vmem:[%s3 + $0xe0] sm:$0xff]
    %v423 = vld [vmem:[%s3 + $0xe8] sm:$0xff]
    %v424 = vld [vmem:[%s3 + $0xf0] sm:$0xff]
    %v425 = vld [vmem:[%s3 + $0xf8] sm:$0xff]
    %v426 = vld [vmem:[%s4] sm:$0xff]
    %v427 = vld [vmem:[%s4 + $0x8] sm:$0xff]
    %v428 = vld [vmem:[%s4 + $0x10] sm:$0xff]
    %v429 = vld [vmem:[%s4 + $0x18] sm:$0xff]
    %v430 = vld [vmem:[%s4 + $0x20] sm:$0xff]
    %v431 = vld [vmem:[%s4 + $0x28] sm:$0xff]
    %v432 = vld [vmem:[%s4 + $0x30] sm:$0xff]
    %v433 = vld [vmem:[%s4 + $0x38] sm:$0xff]
    %v434 = vld [vmem:[%s4 + $0x40] sm:$0xff]
    %v435 = vld [vmem:[%s4 + $0x48] sm:$0xff]
    %v436 = vld [vmem:[%s4 + $0x50] sm:$0xff]
    %v437 = vld [vmem:[%s4 + $0x58] sm:$0xff]
    %v438 = vld [vmem:[%s4 + $0x60] sm:$0xff]
    %v439 = vld [vmem:[%s4 + $0x68] sm:$0xff]
    %v440 = vld [vmem:[%s4 + $0x70] sm:$0xff]
    %v441 = vld [vmem:[%s4 + $0x78] sm:$0xff]
    %v442 = vld [vmem:[%s4 + $0x80] sm:$0xff]
    %v443 = vld [vmem:[%s4 + $0x88] sm:$0xff]
    %v444 = vld [vmem:[%s4 + $0x90] sm:$0xff]
    %v445 = vld [vmem:[%s4 + $0x98] sm:$0xff]
    %v446 = vld [vmem:[%s4 + $0xa0] sm:$0xff]
    %v447 = vld [vmem:[%s4 + $0xa8] sm:$0xff]
    %v448 = vld [vmem:[%s4 + $0xb0] sm:$0xff]
    %v449 = vld [vmem:[%s4 + $0xb8] sm:$0xff]
    %v450 = vld [vmem:[%s4 + $0xc0] sm:$0xff]
    %v451 = vld [vmem:[%s4 + $0xc8] sm:$0xff]
    %v452 = vld [vmem:[%s4 + $0xd0] sm:$0xff]
    %v453 = vld [vmem:[%s4 + $0xd8] sm:$0xff]
    %v454 = vld [vmem:[%s4 + $0xe0] sm:$0xff]
    %v455 = vld [vmem:[%s4 + $0xe8] sm:$0xff]
    %v456 = vld [vmem:[%s4 + $0xf0] sm:$0xff]
    %v457 = vld [vmem:[%s4 + $0xf8] sm:$0xff]
    %vm458 = vcmask 130048
    %v460 = vsel %vm458, %v394, 0
    %v463 = vsel %vm458, %v395, 0
    %v466 = vsel %vm458, %v396, 0
    %v469 = vsel %vm458, %v397, 0
    %v472 = vsel %vm458, %v398, 0
    %v475 = vsel %vm458, %v399, 0
    %v478 = vsel %vm458, %v400, 0
    %v481 = vsel %vm458, %v401, 0
    %v484 = vsel %vm458, %v402, 0
    %v487 = vsel %vm458, %v403, 0
    %v490 = vsel %vm458, %v404, 0
    %v493 = vsel %vm458, %v405, 0
    %v496 = vsel %vm458, %v406, 0
    %v499 = vsel %vm458, %v407, 0
    %v502 = vsel %vm458, %v408, 0
    %v505 = vsel %vm458, %v409, 0
    %v508 = vsel %vm458, %v410, 0
    %v511 = vsel %vm458, %v411, 0
    %v514 = vsel %vm458, %v412, 0
    %v517 = vsel %vm458, %v413, 0
    %v520 = vsel %vm458, %v414, 0
    %v523 = vsel %vm458, %v415, 0
    %v526 = vsel %vm458, %v416, 0
    %v529 = vsel %vm458, %v417, 0
    %v532 = vsel %vm458, %v418, 0
    %v535 = vsel %vm458, %v419, 0
    %v538 = vsel %vm458, %v420, 0
    %v541 = vsel %vm458, %v421, 0
    %v544 = vsel %vm458, %v422, 0
    %v547 = vsel %vm458, %v423, 0
    %v550 = vsel %vm458, %v424, 0
    %v553 = vsel %vm458, %v425, 0
    %555 = vmatprep.subr.mxu0 0.0
    %556 = vmatpush1.msra.mxu0 %v310
    %557 = vmatprep.subr.mxu0 0.0
    %558 = vmatpush1.msra.mxu0 %v315
    %559 = vmatprep.subr.mxu0 0.0
    %560 = vmatpush1.msra.mxu0 0.0
    %561 = vmatprep.subr.mxu0 0.0
    %562 = vmatpush1.msra.mxu0 0.0
    %563 = vmatprep.subr.mxu0 0.0
    %564 = vmatpush1.msra.mxu0 0.0
    %565 = vmatprep.subr.mxu0 0.0
    %566 = vmatpush1.msra.mxu0 0.0
    %567 = vmatprep.subr.mxu0 0.0
    %568 = vmatpush1.msra.mxu0 0.0
    %569 = vmatprep.subr.mxu0 0.0
    %570 = vmatpush1.msra.mxu0 0.0
    %571 = vmatprep.subr.mxu0 0.0
    %572 = vmatpush1.msra.mxu0 0.0
    %573 = vmatprep.subr.mxu0 0.0
    %574 = vmatpush1.msra.mxu0 0.0
    %575 = vmatprep.subr.mxu0 0.0
    %576 = vmatpush1.msra.mxu0 0.0
    %577 = vmatprep.subr.mxu0 0.0
    %578 = vmatpush1.msra.mxu0 0.0
    %579 = vmatprep.subr.mxu0 0.0
    %580 = vmatpush1.msra.mxu0 0.0
    %581 = vmatprep.subr.mxu0 0.0
    %582 = vmatpush1.msra.mxu0 0.0
    %583 = vmatprep.subr.mxu0 0.0
    %584 = vmatpush1.msra.mxu0 0.0
    %585 = vmatprep.subr.mxu0 0.0
    %586 = vmatpush1.msra.mxu0 0.0
    %587 = vmatprep.subr.mxu0 0.0
    %588 = vmatpush1.msra.mxu0 0.0
    %589 = vmatprep.subr.mxu0 0.0
    %590 = vmatpush1.msra.mxu0 0.0
    %591 = vmatprep.subr.mxu0 0.0
    %592 = vmatpush1.msra.mxu0 0.0
    %593 = vmatprep.subr.mxu0 0.0
    %594 = vmatpush1.msra.mxu0 0.0
    %595 = vmatprep.subr.mxu0 0.0
    %596 = vmatpush1.msra.mxu0 0.0
    %597 = vmatprep.subr.mxu0 0.0
    %598 = vmatpush1.msra.mxu0 0.0
    %599 = vmatprep.subr.mxu0 0.0
    %600 = vmatpush1.msra.mxu0 0.0
    %601 = vmatprep.subr.mxu0 0.0
    %602 = vmatpush1.msra.mxu0 0.0
    %603 = vmatprep.subr.mxu0 0.0
    %604 = vmatpush1.msra.mxu0 0.0
    %605 = vmatprep.subr.mxu0 0.0
    %606 = vmatpush1.msra.mxu0 0.0
    %607 = vmatprep.subr.mxu0 0.0
    %608 = vmatpush1.msra.mxu0 0.0
    %609 = vmatprep.subr.mxu0 0.0
    %610 = vmatpush1.msra.mxu0 0.0
    %611 = vmatprep.subr.mxu0 0.0
    %612 = vmatpush1.msra.mxu0 0.0
    %613 = vmatprep.subr.mxu0 0.0
    %614 = vmatpush1.msra.mxu0 0.0
    %615 = vmatprep.subr.mxu0 0.0
    %616 = vmatpush1.msra.mxu0 0.0
    %617 = vmatprep.subr.mxu0 0.0
    %618 = vmatpush1.msra.mxu0 0.0
    %619 = vmatprep.mubr.f32.mxu0 0.0
    %620 = vmatmul.mubr.f32.gmra.mrb[0].mxu0 %v460
    %v621 = vpop.f32.mrb[0].mxu0
    %v622 = vadd.f32 0.0, %v621
    %v623 = vpop.f32.mrb[0].mxu0
    %624 = vmatprep.mubr.f32.mxu0 0.0
    %625 = vmatmul.mubr.f32.gmra.mrb[0].mxu0 %v463
    %v626 = vpop.f32.mrb[0].mxu0
    %v627 = vadd.f32 0.0, %v626
    %v628 = vpop.f32.mrb[0].mxu0
    %629 = vmatprep.mubr.f32.mxu0 0.0
    %630 = vmatmul.mubr.f32.gmra.mrb[0].mxu0 %v466
    %v631 = vpop.f32.mrb[0].mxu0
    %v632 = vadd.f32 0.0, %v631
    %v633 = vpop.f32.mrb[0].mxu0
    %634 = vmatprep.mubr.f32.mxu0 0.0
    %635 = vmatmul.mubr.f32.gmra.mrb[0].mxu0 %v469
    %v636 = vpop.f32.mrb[0].mxu0
    %v637 = vadd.f32 0.0, %v636
    %v638 = vpop.f32.mrb[0].mxu0
    %639 = vmatprep.mubr.f32.mxu0 0.0
    %640 = vmatmul.mubr.f32.gmra.mrb[0].mxu0 %v472
    %v641 = vpop.f32.mrb[0].mxu0
    %v642 = vadd.f32 0.0, %v641
    %v643 = vpop.f32.mrb[0].mxu0
    %644 = vmatprep.mubr.f32.mxu0 0.0
    %645 = vmatmul.mubr.f32.gmra.mrb[0].mxu0 %v475
    %v646 = vpop.f32.mrb[0].mxu0
    %v647 = vadd.f32 0.0, %v646
    %v648 = vpop.f32.mrb[0].mxu0
    %649 = vmatprep.mubr.f32.mxu0 0.0
    %650 = vmatmul.mubr.f32.gmra.mrb[0].mxu0 %v478
    %v651 = vpop.f32.mrb[0].mxu0
    %v652 = vadd.f32 0.0, %v651
    %v653 = vpop.f32.mrb[0].mxu0
    %654 = vmatprep.mubr.f32.mxu0 0.0
    %655 = vmatmul.mubr.f32.gmra.mrb[0].mxu0 %v481
    %v656 = vpop.f32.mrb[0].mxu0
    %v657 = vadd.f32 0.0, %v656
    %v658 = vpop.f32.mrb[0].mxu0
    %659 = vmatprep.mubr.f32.mxu0 0.0
    %660 = vmatmul.mubr.f32.gmra.mrb[0].mxu0 %v484
    %v661 = vpop.f32.mrb[0].mxu0
    %v662 = vadd.f32 0.0, %v661
    %v663 = vpop.f32.mrb[0].mxu0
    %664 = vmatprep.mubr.f32.mxu0 0.0
    %665 = vmatmul.mubr.f32.gmra.mrb[0].mxu0 %v487
    %v666 = vpop.f32.mrb[0].mxu0
    %v667 = vadd.f32 0.0, %v666
    %v668 = vpop.f32.mrb[0].mxu0
    %669 = vmatprep.mubr.f32.mxu0 0.0
    %670 = vmatmul.mubr.f32.gmra.mrb[0].mxu0 %v490
    %v671 = vpop.f32.mrb[0].mxu0
    %v672 = vadd.f32 0.0, %v671
    %v673 = vpop.f32.mrb[0].mxu0
    %674 = vmatprep.mubr.f32.mxu0 0.0
    %675 = vmatmul.mubr.f32.gmra.mrb[0].mxu0 %v493
    %v676 = vpop.f32.mrb[0].mxu0
    %v677 = vadd.f32 0.0, %v676
    %v678 = vpop.f32.mrb[0].mxu0
    %679 = vmatprep.mubr.f32.mxu0 0.0
    %680 = vmatmul.mubr.f32.gmra.mrb[0].mxu0 %v496
    %v681 = vpop.f32.mrb[0].mxu0
    %v682 = vadd.f32 0.0, %v681
    %v683 = vpop.f32.mrb[0].mxu0
    %684 = vmatprep.mubr.f32.mxu0 0.0
    %685 = vmatmul.mubr.f32.gmra.mrb[0].mxu0 %v499
    %v686 = vpop.f32.mrb[0].mxu0
    %v687 = vadd.f32 0.0, %v686
    %v688 = vpop.f32.mrb[0].mxu0
    %689 = vmatprep.mubr.f32.mxu0 0.0
    %690 = vmatmul.mubr.f32.gmra.mrb[0].mxu0 %v502
    %v691 = vpop.f32.mrb[0].mxu0
    %v692 = vadd.f32 0.0, %v691
    %v693 = vpop.f32.mrb[0].mxu0
    %694 = vmatprep.mubr.f32.mxu0 0.0
    %695 = vmatmul.mubr.f32.gmra.mrb[0].mxu0 %v505
    %v696 = vpop.f32.mrb[0].mxu0
    %v697 = vadd.f32 0.0, %v696
    %v698 = vpop.f32.mrb[0].mxu0
    %699 = vmatprep.mubr.f32.mxu0 0.0
    %700 = vmatmul.mubr.f32.gmra.mrb[0].mxu0 %v508
    %v701 = vpop.f32.mrb[0].mxu0
    %v702 = vadd.f32 0.0, %v701
    %v703 = vpop.f32.mrb[0].mxu0
    %704 = vmatprep.mubr.f32.mxu0 0.0
    %705 = vmatmul.mubr.f32.gmra.mrb[0].mxu0 %v511
    %v706 = vpop.f32.mrb[0].mxu0
    %v707 = vadd.f32 0.0, %v706
    %v708 = vpop.f32.mrb[0].mxu0
    %709 = vmatprep.mubr.f32.mxu0 0.0
    %710 = vmatmul.mubr.f32.gmra.mrb[0].mxu0 %v514
    %v711 = vpop.f32.mrb[0].mxu0
    %v712 = vadd.f32 0.0, %v711
    %v713 = vpop.f32.mrb[0].mxu0
    %714 = vmatprep.mubr.f32.mxu0 0.0
    %715 = vmatmul.mubr.f32.gmra.mrb[0].mxu0 %v517
    %v716 = vpop.f32.mrb[0].mxu0
    %v717 = vadd.f32 0.0, %v716
    %v718 = vpop.f32.mrb[0].mxu0
    %719 = vmatprep.mubr.f32.mxu0 0.0
    %720 = vmatmul.mubr.f32.gmra.mrb[0].mxu0 %v520
    %v721 = vpop.f32.mrb[0].mxu0
    %v722 = vadd.f32 0.0, %v721
    %v723 = vpop.f32.mrb[0].mxu0
    %724 = vmatprep.mubr.f32.mxu0 0.0
    %725 = vmatmul.mubr.f32.gmra.mrb[0].mxu0 %v523
    %v726 = vpop.f32.mrb[0].mxu0
    %v727 = vadd.f32 0.0, %v726
    %v728 = vpop.f32.mrb[0].mxu0
    %729 = vmatprep.mubr.f32.mxu0 0.0
    %730 = vmatmul.mubr.f32.gmra.mrb[0].mxu0 %v526
    %v731 = vpop.f32.mrb[0].mxu0
    %v732 = vadd.f32 0.0, %v731
    %v733 = vpop.f32.mrb[0].mxu0
    %734 = vmatprep.mubr.f32.mxu0 0.0
    %735 = vmatmul.mubr.f32.gmra.mrb[0].mxu0 %v529
    %v736 = vpop.f32.mrb[0].mxu0
    %v737 = vadd.f32 0.0, %v736
    %v738 = vpop.f32.mrb[0].mxu0
    %739 = vmatprep.mubr.f32.mxu0 0.0
    %740 = vmatmul.mubr.f32.gmra.mrb[0].mxu0 %v532
    %v741 = vpop.f32.mrb[0].mxu0
    %v742 = vadd.f32 0.0, %v741
    %v743 = vpop.f32.mrb[0].mxu0
    %744 = vmatprep.mubr.f32.mxu0 0.0
    %745 = vmatmul.mubr.f32.gmra.mrb[0].mxu0 %v535
    %v746 = vpop.f32.mrb[0].mxu0
    %v747 = vadd.f32 0.0, %v746
    %v748 = vpop.f32.mrb[0].mxu0
    %749 = vmatprep.mubr.f32.mxu0 0.0
    %750 = vmatmul.mubr.f32.gmra.mrb[0].mxu0 %v538
    %v751 = vpop.f32.mrb[0].mxu0
    %v752 = vadd.f32 0.0, %v751
    %v753 = vpop.f32.mrb[0].mxu0
    %754 = vmatprep.mubr.f32.mxu0 0.0
    %755 = vmatmul.mubr.f32.gmra.mrb[0].mxu0 %v541
    %v756 = vpop.f32.mrb[0].mxu0
    %v757 = vadd.f32 0.0, %v756
    %v758 = vpop.f32.mrb[0].mxu0
    %759 = vmatprep.mubr.f32.mxu0 0.0
    %760 = vmatmul.mubr.f32.gmra.mrb[0].mxu0 %v544
    %v761 = vpop.f32.mrb[0].mxu0
    %v762 = vadd.f32 0.0, %v761
    %v763 = vpop.f32.mrb[0].mxu0
    %764 = vmatprep.mubr.f32.mxu0 0.0
    %765 = vmatmul.mubr.f32.gmra.mrb[0].mxu0 %v547
    %v766 = vpop.f32.mrb[0].mxu0
    %v767 = vadd.f32 0.0, %v766
    %v768 = vpop.f32.mrb[0].mxu0
    %769 = vmatprep.mubr.f32.mxu0 0.0
    %770 = vmatmul.mubr.f32.gmra.mrb[0].mxu0 %v550
    %v771 = vpop.f32.mrb[0].mxu0
    %v772 = vadd.f32 0.0, %v771
    %v773 = vpop.f32.mrb[0].mxu0
    %774 = vmatprep.mubr.f32.mxu0 0.0
    %775 = vmatmul.mubr.f32.gmra.mrb[0].mxu0 %v553
    %v776 = vpop.f32.mrb[0].mxu0
    %v777 = vadd.f32 0.0, %v776
    %v778 = vpop.f32.mrb[0].mxu0
    %779 = vdwg.mxu0
    %v781 = vsel %vm458, %v426, 0
    %v784 = vsel %vm458, %v427, 0
    %v787 = vsel %vm458, %v428, 0
    %v790 = vsel %vm458, %v429, 0
    %v793 = vsel %vm458, %v430, 0
    %v796 = vsel %vm458, %v431, 0
    %v799 = vsel %vm458, %v432, 0
    %v802 = vsel %vm458, %v433, 0
    %v805 = vsel %vm458, %v434, 0
    %v808 = vsel %vm458, %v435, 0
    %v811 = vsel %vm458, %v436, 0
    %v814 = vsel %vm458, %v437, 0
    %v817 = vsel %vm458, %v438, 0
    %v820 = vsel %vm458, %v439, 0
    %v823 = vsel %vm458, %v440, 0
    %v826 = vsel %vm458, %v441, 0
    %v829 = vsel %vm458, %v442, 0
    %v832 = vsel %vm458, %v443, 0
    %v835 = vsel %vm458, %v444, 0
    %v838 = vsel %vm458, %v445, 0
    %v841 = vsel %vm458, %v446, 0
    %v844 = vsel %vm458, %v447, 0
    %v847 = vsel %vm458, %v448, 0
    %v850 = vsel %vm458, %v449, 0
    %v853 = vsel %vm458, %v450, 0
    %v856 = vsel %vm458, %v451, 0
    %v859 = vsel %vm458, %v452, 0
    %v862 = vsel %vm458, %v453, 0
    %v865 = vsel %vm458, %v454, 0
    %v868 = vsel %vm458, %v455, 0
    %v871 = vsel %vm458, %v456, 0
    %v874 = vsel %vm458, %v457, 0
    %876 = vmatprep.subr.mxu0 0.0
    %877 = vmatpush1.msra.mxu0 %v234
    %878 = vmatprep.subr.mxu0 0.0
    %879 = vmatpush1.msra.mxu0 %v239
    %880 = vmatprep.subr.mxu0 0.0
    %881 = vmatpush1.msra.mxu0 0.0
    %882 = vmatprep.subr.mxu0 0.0
    %883 = vmatpush1.msra.mxu0 0.0
    %884 = vmatprep.subr.mxu0 0.0
    %885 = vmatpush1.msra.mxu0 0.0
    %886 = vmatprep.subr.mxu0 0.0
    %887 = vmatpush1.msra.mxu0 0.0
    %888 = vmatprep.subr.mxu0 0.0
    %889 = vmatpush1.msra.mxu0 0.0
    %890 = vmatprep.subr.mxu0 0.0
    %891 = vmatpush1.msra.mxu0 0.0
    %892 = vmatprep.subr.mxu0 0.0
    %893 = vmatpush1.msra.mxu0 0.0
    %894 = vmatprep.subr.mxu0 0.0
    %895 = vmatpush1.msra.mxu0 0.0
    %896 = vmatprep.subr.mxu0 0.0
    %897 = vmatpush1.msra.mxu0 0.0
    %898 = vmatprep.subr.mxu0 0.0
    %899 = vmatpush1.msra.mxu0 0.0
    %900 = vmatprep.subr.mxu0 0.0
    %901 = vmatpush1.msra.mxu0 0.0
    %902 = vmatprep.subr.mxu0 0.0
    %903 = vmatpush1.msra.mxu0 0.0
    %904 = vmatprep.subr.mxu0 0.0
    %905 = vmatpush1.msra.mxu0 0.0
    %906 = vmatprep.subr.mxu0 0.0
    %907 = vmatpush1.msra.mxu0 0.0
    %908 = vmatprep.subr.mxu0 0.0
    %909 = vmatpush1.msra.mxu0 0.0
    %910 = vmatprep.subr.mxu0 0.0
    %911 = vmatpush1.msra.mxu0 0.0
    %912 = vmatprep.subr.mxu0 0.0
    %913 = vmatpush1.msra.mxu0 0.0
    %914 = vmatprep.subr.mxu0 0.0
    %915 = vmatpush1.msra.mxu0 0.0
    %916 = vmatprep.subr.mxu0 0.0
    %917 = vmatpush1.msra.mxu0 0.0
    %918 = vmatprep.subr.mxu0 0.0
    %919 = vmatpush1.msra.mxu0 0.0
    %920 = vmatprep.subr.mxu0 0.0
    %921 = vmatpush1.msra.mxu0 0.0
    %922 = vmatprep.subr.mxu0 0.0
    %923 = vmatpush1.msra.mxu0 0.0
    %924 = vmatprep.subr.mxu0 0.0
    %925 = vmatpush1.msra.mxu0 0.0
    %926 = vmatprep.subr.mxu0 0.0
    %927 = vmatpush1.msra.mxu0 0.0
    %928 = vmatprep.subr.mxu0 0.0
    %929 = vmatpush1.msra.mxu0 0.0
    %930 = vmatprep.subr.mxu0 0.0
    %931 = vmatpush1.msra.mxu0 0.0
    %932 = vmatprep.subr.mxu0 0.0
    %933 = vmatpush1.msra.mxu0 0.0
    %934 = vmatprep.subr.mxu0 0.0
    %935 = vmatpush1.msra.mxu0 0.0
    %936 = vmatprep.subr.mxu0 0.0
    %937 = vmatpush1.msra.mxu0 0.0
    %938 = vmatprep.subr.mxu0 0.0
    %939 = vmatpush1.msra.mxu0 0.0
    %940 = vmatprep.mubr.f32.mxu0 0.0
    %941 = vmatmul.mubr.f32.gmra.mrb[0].mxu0 %v781
    %v942 = vpop.f32.mrb[0].mxu0
    %v943 = vadd.f32 0.0, %v942
    %v944 = vpop.f32.mrb[0].mxu0
    %945 = vmatprep.mubr.f32.mxu0 0.0
    %946 = vmatmul.mubr.f32.gmra.mrb[0].mxu0 %v784
    %v947 = vpop.f32.mrb[0].mxu0
    %v948 = vadd.f32 0.0, %v947
    %v949 = vpop.f32.mrb[0].mxu0
    %950 = vmatprep.mubr.f32.mxu0 0.0
    %951 = vmatmul.mubr.f32.gmra.mrb[0].mxu0 %v787
    %v952 = vpop.f32.mrb[0].mxu0
    %v953 = vadd.f32 0.0, %v952
    %v954 = vpop.f32.mrb[0].mxu0
    %955 = vmatprep.mubr.f32.mxu0 0.0
    %956 = vmatmul.mubr.f32.gmra.mrb[0].mxu0 %v790
    %v957 = vpop.f32.mrb[0].mxu0
    %v958 = vadd.f32 0.0, %v957
    %v959 = vpop.f32.mrb[0].mxu0
    %960 = vmatprep.mubr.f32.mxu0 0.0
    %961 = vmatmul.mubr.f32.gmra.mrb[0].mxu0 %v793
    %v962 = vpop.f32.mrb[0].mxu0
    %v963 = vadd.f32 0.0, %v962
    %v964 = vpop.f32.mrb[0].mxu0
    %965 = vmatprep.mubr.f32.mxu0 0.0
    %966 = vmatmul.mubr.f32.gmra.mrb[0].mxu0 %v796
    %v967 = vpop.f32.mrb[0].mxu0
    %v968 = vadd.f32 0.0, %v967
    %v969 = vpop.f32.mrb[0].mxu0
    %970 = vmatprep.mubr.f32.mxu0 0.0
    %971 = vmatmul.mubr.f32.gmra.mrb[0].mxu0 %v799
    %v972 = vpop.f32.mrb[0].mxu0
    %v973 = vadd.f32 0.0, %v972
    %v974 = vpop.f32.mrb[0].mxu0
    %975 = vmatprep.mubr.f32.mxu0 0.0
    %976 = vmatmul.mubr.f32.gmra.mrb[0].mxu0 %v802
    %v977 = vpop.f32.mrb[0].mxu0
    %v978 = vadd.f32 0.0, %v977
    %v979 = vpop.f32.mrb[0].mxu0
    %980 = vmatprep.mubr.f32.mxu0 0.0
    %981 = vmatmul.mubr.f32.gmra.mrb[0].mxu0 %v805
    %v982 = vpop.f32.mrb[0].mxu0
    %v983 = vadd.f32 0.0, %v982
    %v984 = vpop.f32.mrb[0].mxu0
    %985 = vmatprep.mubr.f32.mxu0 0.0
    %986 = vmatmul.mubr.f32.gmra.mrb[0].mxu0 %v808
    %v987 = vpop.f32.mrb[0].mxu0
    %v988 = vadd.f32 0.0, %v987
    %v989 = vpop.f32.mrb[0].mxu0
    %990 = vmatprep.mubr.f32.mxu0 0.0
    %991 = vmatmul.mubr.f32.gmra.mrb[0].mxu0 %v811
    %v992 = vpop.f32.mrb[0].mxu0
    %v993 = vadd.f32 0.0, %v992
    %v994 = vpop.f32.mrb[0].mxu0
    %995 = vmatprep.mubr.f32.mxu0 0.0
    %996 = vmatmul.mubr.f32.gmra.mrb[0].mxu0 %v814
    %v997 = vpop.f32.mrb[0].mxu0
    %v998 = vadd.f32 0.0, %v997
    %v999 = vpop.f32.mrb[0].mxu0
    %1000 = vmatprep.mubr.f32.mxu0 0.0
    %1001 = vmatmul.mubr.f32.gmra.mrb[0].mxu0 %v817
    %v1002 = vpop.f32.mrb[0].mxu0
    %v1003 = vadd.f32 0.0, %v1002
    %v1004 = vpop.f32.mrb[0].mxu0
    %1005 = vmatprep.mubr.f32.mxu0 0.0
    %1006 = vmatmul.mubr.f32.gmra.mrb[0].mxu0 %v820
    %v1007 = vpop.f32.mrb[0].mxu0
    %v1008 = vadd.f32 0.0, %v1007
    %v1009 = vpop.f32.mrb[0].mxu0
    %1010 = vmatprep.mubr.f32.mxu0 0.0
    %1011 = vmatmul.mubr.f32.gmra.mrb[0].mxu0 %v823
    %v1012 = vpop.f32.mrb[0].mxu0
    %v1013 = vadd.f32 0.0, %v1012
    %v1014 = vpop.f32.mrb[0].mxu0
    %1015 = vmatprep.mubr.f32.mxu0 0.0
    %1016 = vmatmul.mubr.f32.gmra.mrb[0].mxu0 %v826
    %v1017 = vpop.f32.mrb[0].mxu0
    %v1018 = vadd.f32 0.0, %v1017
    %v1019 = vpop.f32.mrb[0].mxu0
    %1020 = vmatprep.mubr.f32.mxu0 0.0
    %1021 = vmatmul.mubr.f32.gmra.mrb[0].mxu0 %v829
    %v1022 = vpop.f32.mrb[0].mxu0
    %v1023 = vadd.f32 0.0, %v1022
    %v1024 = vpop.f32.mrb[0].mxu0
    %1025 = vmatprep.mubr.f32.mxu0 0.0
    %1026 = vmatmul.mubr.f32.gmra.mrb[0].mxu0 %v832
    %v1027 = vpop.f32.mrb[0].mxu0
    %v1028 = vadd.f32 0.0, %v1027
    %v1029 = vpop.f32.mrb[0].mxu0
    %1030 = vmatprep.mubr.f32.mxu0 0.0
    %1031 = vmatmul.mubr.f32.gmra.mrb[0].mxu0 %v835
    %v1032 = vpop.f32.mrb[0].mxu0
    %v1033 = vadd.f32 0.0, %v1032
    %v1034 = vpop.f32.mrb[0].mxu0
    %1035 = vmatprep.mubr.f32.mxu0 0.0
    %1036 = vmatmul.mubr.f32.gmra.mrb[0].mxu0 %v838
    %v1037 = vpop.f32.mrb[0].mxu0
    %v1038 = vadd.f32 0.0, %v1037
    %v1039 = vpop.f32.mrb[0].mxu0
    %1040 = vmatprep.mubr.f32.mxu0 0.0
    %1041 = vmatmul.mubr.f32.gmra.mrb[0].mxu0 %v841
    %v1042 = vpop.f32.mrb[0].mxu0
    %v1043 = vadd.f32 0.0, %v1042
    %v1044 = vpop.f32.mrb[0].mxu0
    %1045 = vmatprep.mubr.f32.mxu0 0.0
    %1046 = vmatmul.mubr.f32.gmra.mrb[0].mxu0 %v844
    %v1047 = vpop.f32.mrb[0].mxu0
    %v1048 = vadd.f32 0.0, %v1047
    %v1049 = vpop.f32.mrb[0].mxu0
    %1050 = vmatprep.mubr.f32.mxu0 0.0
    %1051 = vmatmul.mubr.f32.gmra.mrb[0].mxu0 %v847
    %v1052 = vpop.f32.mrb[0].mxu0
    %v1053 = vadd.f32 0.0, %v1052
    %v1054 = vpop.f32.mrb[0].mxu0
    %1055 = vmatprep.mubr.f32.mxu0 0.0
    %1056 = vmatmul.mubr.f32.gmra.mrb[0].mxu0 %v850
    %v1057 = vpop.f32.mrb[0].mxu0
    %v1058 = vadd.f32 0.0, %v1057
    %v1059 = vpop.f32.mrb[0].mxu0
    %1060 = vmatprep.mubr.f32.mxu0 0.0
    %1061 = vmatmul.mubr.f32.gmra.mrb[0].mxu0 %v853
    %v1062 = vpop.f32.mrb[0].mxu0
    %v1063 = vadd.f32 0.0, %v1062
    %v1064 = vpop.f32.mrb[0].mxu0
    %1065 = vmatprep.mubr.f32.mxu0 0.0
    %1066 = vmatmul.mubr.f32.gmra.mrb[0].mxu0 %v856
    %v1067 = vpop.f32.mrb[0].mxu0
    %v1068 = vadd.f32 0.0, %v1067
    %v1069 = vpop.f32.mrb[0].mxu0
    %1070 = vmatprep.mubr.f32.mxu0 0.0
    %1071 = vmatmul.mubr.f32.gmra.mrb[0].mxu0 %v859
    %v1072 = vpop.f32.mrb[0].mxu0
    %v1073 = vadd.f32 0.0, %v1072
    %v1074 = vpop.f32.mrb[0].mxu0
    %1075 = vmatprep.mubr.f32.mxu0 0.0
    %1076 = vmatmul.mubr.f32.gmra.mrb[0].mxu0 %v862
    %v1077 = vpop.f32.mrb[0].mxu0
    %v1078 = vadd.f32 0.0, %v1077
    %v1079 = vpop.f32.mrb[0].mxu0
    %1080 = vmatprep.mubr.f32.mxu0 0.0
    %1081 = vmatmul.mubr.f32.gmra.mrb[0].mxu0 %v865
    %v1082 = vpop.f32.mrb[0].mxu0
    %v1083 = vadd.f32 0.0, %v1082
    %v1084 = vpop.f32.mrb[0].mxu0
    %1085 = vmatprep.mubr.f32.mxu0 0.0
    %1086 = vmatmul.mubr.f32.gmra.mrb[0].mxu0 %v868
    %v1087 = vpop.f32.mrb[0].mxu0
    %v1088 = vadd.f32 0.0, %v1087
    %v1089 = vpop.f32.mrb[0].mxu0
    %1090 = vmatprep.mubr.f32.mxu0 0.0
    %1091 = vmatmul.mubr.f32.gmra.mrb[0].mxu0 %v871
    %v1092 = vpop.f32.mrb[0].mxu0
    %v1093 = vadd.f32 0.0, %v1092
    %v1094 = vpop.f32.mrb[0].mxu0
    %1095 = vmatprep.mubr.f32.mxu0 0.0
    %1096 = vmatmul.mubr.f32.gmra.mrb[0].mxu0 %v874
    %v1097 = vpop.f32.mrb[0].mxu0
    %v1098 = vadd.f32 0.0, %v1097
    %v1099 = vpop.f32.mrb[0].mxu0
    %1100 = vdwg.mxu0
    %v1101 = vsub.f32 %v394, %v426
    %v1102 = vsub.f32 %v395, %v427
    %v1103 = vsub.f32 %v396, %v428
    %v1104 = vsub.f32 %v397, %v429
    %v1105 = vsub.f32 %v398, %v430
    %v1106 = vsub.f32 %v399, %v431
    %v1107 = vsub.f32 %v400, %v432
    %v1108 = vsub.f32 %v401, %v433
    %v1109 = vsub.f32 %v402, %v434
    %v1110 = vsub.f32 %v403, %v435
    %v1111 = vsub.f32 %v404, %v436
    %v1112 = vsub.f32 %v405, %v437
    %v1113 = vsub.f32 %v406, %v438
    %v1114 = vsub.f32 %v407, %v439
    %v1115 = vsub.f32 %v408, %v440
    %v1116 = vsub.f32 %v409, %v441
    %v1117 = vsub.f32 %v410, %v442
    %v1118 = vsub.f32 %v411, %v443
    %v1119 = vsub.f32 %v412, %v444
    %v1120 = vsub.f32 %v413, %v445
    %v1121 = vsub.f32 %v414, %v446
    %v1122 = vsub.f32 %v415, %v447
    %v1123 = vsub.f32 %v416, %v448
    %v1124 = vsub.f32 %v417, %v449
    %v1125 = vsub.f32 %v418, %v450
    %v1126 = vsub.f32 %v419, %v451
    %v1127 = vsub.f32 %v420, %v452
    %v1128 = vsub.f32 %v421, %v453
    %v1129 = vsub.f32 %v422, %v454
    %v1130 = vsub.f32 %v423, %v455
    %v1131 = vsub.f32 %v424, %v456
    %v1132 = vsub.f32 %v425, %v457
    %v1133 = vld [vmem:[%s1] sm:$0xff]
    %v1134 = vld [vmem:[%s1 + $0x8] sm:$0xff]
    %v1136 = vsel %vm458, %v1101, 0
    %v1139 = vsel %vm458, %v1102, 0
    %v1142 = vsel %vm458, %v1103, 0
    %v1145 = vsel %vm458, %v1104, 0
    %v1148 = vsel %vm458, %v1105, 0
    %v1151 = vsel %vm458, %v1106, 0
    %v1154 = vsel %vm458, %v1107, 0
    %v1157 = vsel %vm458, %v1108, 0
    %v1160 = vsel %vm458, %v1109, 0
    %v1163 = vsel %vm458, %v1110, 0
    %v1166 = vsel %vm458, %v1111, 0
    %v1169 = vsel %vm458, %v1112, 0
    %v1172 = vsel %vm458, %v1113, 0
    %v1175 = vsel %vm458, %v1114, 0
    %v1178 = vsel %vm458, %v1115, 0
    %v1181 = vsel %vm458, %v1116, 0
    %v1184 = vsel %vm458, %v1117, 0
    %v1187 = vsel %vm458, %v1118, 0
    %v1190 = vsel %vm458, %v1119, 0
    %v1193 = vsel %vm458, %v1120, 0
    %v1196 = vsel %vm458, %v1121, 0
    %v1199 = vsel %vm458, %v1122, 0
    %v1202 = vsel %vm458, %v1123, 0
    %v1205 = vsel %vm458, %v1124, 0
    %v1208 = vsel %vm458, %v1125, 0
    %v1211 = vsel %vm458, %v1126, 0
    %v1214 = vsel %vm458, %v1127, 0
    %v1217 = vsel %vm458, %v1128, 0
    %v1220 = vsel %vm458, %v1129, 0
    %v1223 = vsel %vm458, %v1130, 0
    %v1226 = vsel %vm458, %v1131, 0
    %v1229 = vsel %vm458, %v1132, 0
    %1231 = vmatprep.subr.mxu0 0.0
    %1232 = vmatpush1.msra.mxu0 %v1133
    %1233 = vmatprep.subr.mxu0 0.0
    %1234 = vmatpush1.msra.mxu0 %v1134
    %1235 = vmatprep.subr.mxu0 0.0
    %1236 = vmatpush1.msra.mxu0 0.0
    %1237 = vmatprep.subr.mxu0 0.0
    %1238 = vmatpush1.msra.mxu0 0.0
    %1239 = vmatprep.subr.mxu0 0.0
    %1240 = vmatpush1.msra.mxu0 0.0
    %1241 = vmatprep.subr.mxu0 0.0
    %1242 = vmatpush1.msra.mxu0 0.0
    %1243 = vmatprep.subr.mxu0 0.0
    %1244 = vmatpush1.msra.mxu0 0.0
    %1245 = vmatprep.subr.mxu0 0.0
    %1246 = vmatpush1.msra.mxu0 0.0
    %1247 = vmatprep.subr.mxu0 0.0
    %1248 = vmatpush1.msra.mxu0 0.0
    %1249 = vmatprep.subr.mxu0 0.0
    %1250 = vmatpush1.msra.mxu0 0.0
    %1251 = vmatprep.subr.mxu0 0.0
    %1252 = vmatpush1.msra.mxu0 0.0
    %1253 = vmatprep.subr.mxu0 0.0
    %1254 = vmatpush1.msra.mxu0 0.0
    %1255 = vmatprep.subr.mxu0 0.0
    %1256 = vmatpush1.msra.mxu0 0.0
    %1257 = vmatprep.subr.mxu0 0.0
    %1258 = vmatpush1.msra.mxu0 0.0
    %1259 = vmatprep.subr.mxu0 0.0
    %1260 = vmatpush1.msra.mxu0 0.0
    %1261 = vmatprep.subr.mxu0 0.0
    %1262 = vmatpush1.msra.mxu0 0.0
    %1263 = vmatprep.subr.mxu0 0.0
    %1264 = vmatpush1.msra.mxu0 0.0
    %1265 = vmatprep.subr.mxu0 0.0
    %1266 = vmatpush1.msra.mxu0 0.0
    %1267 = vmatprep.subr.mxu0 0.0
    %1268 = vmatpush1.msra.mxu0 0.0
    %1269 = vmatprep.subr.mxu0 0.0
    %1270 = vmatpush1.msra.mxu0 0.0
    %1271 = vmatprep.subr.mxu0 0.0
    %1272 = vmatpush1.msra.mxu0 0.0
    %1273 = vmatprep.subr.mxu0 0.0
    %1274 = vmatpush1.msra.mxu0 0.0
    %1275 = vmatprep.subr.mxu0 0.0
    %1276 = vmatpush1.msra.mxu0 0.0
    %1277 = vmatprep.subr.mxu0 0.0
    %1278 = vmatpush1.msra.mxu0 0.0
    %1279 = vmatprep.subr.mxu0 0.0
    %1280 = vmatpush1.msra.mxu0 0.0
    %1281 = vmatprep.subr.mxu0 0.0
    %1282 = vmatpush1.msra.mxu0 0.0
    %1283 = vmatprep.subr.mxu0 0.0
    %1284 = vmatpush1.msra.mxu0 0.0
    %1285 = vmatprep.subr.mxu0 0.0
    %1286 = vmatpush1.msra.mxu0 0.0
    %1287 = vmatprep.subr.mxu0 0.0
    %1288 = vmatpush1.msra.mxu0 0.0
    %1289 = vmatprep.subr.mxu0 0.0
    %1290 = vmatpush1.msra.mxu0 0.0
    %1291 = vmatprep.subr.mxu0 0.0
    %1292 = vmatpush1.msra.mxu0 0.0
    %1293 = vmatprep.subr.mxu0 0.0
    %1294 = vmatpush1.msra.mxu0 0.0
    %1295 = vmatprep.mubr.f32.mxu0 0.0
    %1296 = vmatmul.mubr.f32.gmra.mrb[0].mxu0 %v1136
    %v1297 = vpop.f32.mrb[0].mxu0
    %v1298 = vadd.f32 0.0, %v1297
    %v1299 = vpop.f32.mrb[0].mxu0
    %1300 = vmatprep.mubr.f32.mxu0 0.0
    %1301 = vmatmul.mubr.f32.gmra.mrb[0].mxu0 %v1139
    %v1302 = vpop.f32.mrb[0].mxu0
    %v1303 = vadd.f32 0.0, %v1302
    %v1304 = vpop.f32.mrb[0].mxu0
    %1305 = vmatprep.mubr.f32.mxu0 0.0
    %1306 = vmatmul.mubr.f32.gmra.mrb[0].mxu0 %v1142
    %v1307 = vpop.f32.mrb[0].mxu0
    %v1308 = vadd.f32 0.0, %v1307
    %v1309 = vpop.f32.mrb[0].mxu0
    %1310 = vmatprep.mubr.f32.mxu0 0.0
    %1311 = vmatmul.mubr.f32.gmra.mrb[0].mxu0 %v1145
    %v1312 = vpop.f32.mrb[0].mxu0
    %v1313 = vadd.f32 0.0, %v1312
    %v1314 = vpop.f32.mrb[0].mxu0
    %1315 = vmatprep.mubr.f32.mxu0 0.0
    %1316 = vmatmul.mubr.f32.gmra.mrb[0].mxu0 %v1148
    %v1317 = vpop.f32.mrb[0].mxu0
    %v1318 = vadd.f32 0.0, %v1317
    %v1319 = vpop.f32.mrb[0].mxu0
    %1320 = vmatprep.mubr.f32.mxu0 0.0
    %1321 = vmatmul.mubr.f32.gmra.mrb[0].mxu0 %v1151
    %v1322 = vpop.f32.mrb[0].mxu0
    %v1323 = vadd.f32 0.0, %v1322
    %v1324 = vpop.f32.mrb[0].mxu0
    %1325 = vmatprep.mubr.f32.mxu0 0.0
    %1326 = vmatmul.mubr.f32.gmra.mrb[0].mxu0 %v1154
    %v1327 = vpop.f32.mrb[0].mxu0
    %v1328 = vadd.f32 0.0, %v1327
    %v1329 = vpop.f32.mrb[0].mxu0
    %1330 = vmatprep.mubr.f32.mxu0 0.0
    %1331 = vmatmul.mubr.f32.gmra.mrb[0].mxu0 %v1157
    %v1332 = vpop.f32.mrb[0].mxu0
    %v1333 = vadd.f32 0.0, %v1332
    %v1334 = vpop.f32.mrb[0].mxu0
    %1335 = vmatprep.mubr.f32.mxu0 0.0
    %1336 = vmatmul.mubr.f32.gmra.mrb[0].mxu0 %v1160
    %v1337 = vpop.f32.mrb[0].mxu0
    %v1338 = vadd.f32 0.0, %v1337
    %v1339 = vpop.f32.mrb[0].mxu0
    %1340 = vmatprep.mubr.f32.mxu0 0.0
    %1341 = vmatmul.mubr.f32.gmra.mrb[0].mxu0 %v1163
    %v1342 = vpop.f32.mrb[0].mxu0
    %v1343 = vadd.f32 0.0, %v1342
    %v1344 = vpop.f32.mrb[0].mxu0
    %1345 = vmatprep.mubr.f32.mxu0 0.0
    %1346 = vmatmul.mubr.f32.gmra.mrb[0].mxu0 %v1166
    %v1347 = vpop.f32.mrb[0].mxu0
    %v1348 = vadd.f32 0.0, %v1347
    %v1349 = vpop.f32.mrb[0].mxu0
    %1350 = vmatprep.mubr.f32.mxu0 0.0
    %1351 = vmatmul.mubr.f32.gmra.mrb[0].mxu0 %v1169
    %v1352 = vpop.f32.mrb[0].mxu0
    %v1353 = vadd.f32 0.0, %v1352
    %v1354 = vpop.f32.mrb[0].mxu0
    %1355 = vmatprep.mubr.f32.mxu0 0.0
    %1356 = vmatmul.mubr.f32.gmra.mrb[0].mxu0 %v1172
    %v1357 = vpop.f32.mrb[0].mxu0
    %v1358 = vadd.f32 0.0, %v1357
    %v1359 = vpop.f32.mrb[0].mxu0
    %1360 = vmatprep.mubr.f32.mxu0 0.0
    %1361 = vmatmul.mubr.f32.gmra.mrb[0].mxu0 %v1175
    %v1362 = vpop.f32.mrb[0].mxu0
    %v1363 = vadd.f32 0.0, %v1362
    %v1364 = vpop.f32.mrb[0].mxu0
    %1365 = vmatprep.mubr.f32.mxu0 0.0
    %1366 = vmatmul.mubr.f32.gmra.mrb[0].mxu0 %v1178
    %v1367 = vpop.f32.mrb[0].mxu0
    %v1368 = vadd.f32 0.0, %v1367
    %v1369 = vpop.f32.mrb[0].mxu0
    %1370 = vmatprep.mubr.f32.mxu0 0.0
    %1371 = vmatmul.mubr.f32.gmra.mrb[0].mxu0 %v1181
    %v1372 = vpop.f32.mrb[0].mxu0
    %v1373 = vadd.f32 0.0, %v1372
    %v1374 = vpop.f32.mrb[0].mxu0
    %1375 = vmatprep.mubr.f32.mxu0 0.0
    %1376 = vmatmul.mubr.f32.gmra.mrb[0].mxu0 %v1184
    %v1377 = vpop.f32.mrb[0].mxu0
    %v1378 = vadd.f32 0.0, %v1377
    %v1379 = vpop.f32.mrb[0].mxu0
    %1380 = vmatprep.mubr.f32.mxu0 0.0
    %1381 = vmatmul.mubr.f32.gmra.mrb[0].mxu0 %v1187
    %v1382 = vpop.f32.mrb[0].mxu0
    %v1383 = vadd.f32 0.0, %v1382
    %v1384 = vpop.f32.mrb[0].mxu0
    %1385 = vmatprep.mubr.f32.mxu0 0.0
    %1386 = vmatmul.mubr.f32.gmra.mrb[0].mxu0 %v1190
    %v1387 = vpop.f32.mrb[0].mxu0
    %v1388 = vadd.f32 0.0, %v1387
    %v1389 = vpop.f32.mrb[0].mxu0
    %1390 = vmatprep.mubr.f32.mxu0 0.0
    %1391 = vmatmul.mubr.f32.gmra.mrb[0].mxu0 %v1193
    %v1392 = vpop.f32.mrb[0].mxu0
    %v1393 = vadd.f32 0.0, %v1392
    %v1394 = vpop.f32.mrb[0].mxu0
    %1395 = vmatprep.mubr.f32.mxu0 0.0
    %1396 = vmatmul.mubr.f32.gmra.mrb[0].mxu0 %v1196
    %v1397 = vpop.f32.mrb[0].mxu0
    %v1398 = vadd.f32 0.0, %v1397
    %v1399 = vpop.f32.mrb[0].mxu0
    %1400 = vmatprep.mubr.f32.mxu0 0.0
    %1401 = vmatmul.mubr.f32.gmra.mrb[0].mxu0 %v1199
    %v1402 = vpop.f32.mrb[0].mxu0
    %v1403 = vadd.f32 0.0, %v1402
    %v1404 = vpop.f32.mrb[0].mxu0
    %1405 = vmatprep.mubr.f32.mxu0 0.0
    %1406 = vmatmul.mubr.f32.gmra.mrb[0].mxu0 %v1202
    %v1407 = vpop.f32.mrb[0].mxu0
    %v1408 = vadd.f32 0.0, %v1407
    %v1409 = vpop.f32.mrb[0].mxu0
    %1410 = vmatprep.mubr.f32.mxu0 0.0
    %1411 = vmatmul.mubr.f32.gmra.mrb[0].mxu0 %v1205
    %v1412 = vpop.f32.mrb[0].mxu0
    %v1413 = vadd.f32 0.0, %v1412
    %v1414 = vpop.f32.mrb[0].mxu0
    %1415 = vmatprep.mubr.f32.mxu0 0.0
    %1416 = vmatmul.mubr.f32.gmra.mrb[0].mxu0 %v1208
    %v1417 = vpop.f32.mrb[0].mxu0
    %v1418 = vadd.f32 0.0, %v1417
    %v1419 = vpop.f32.mrb[0].mxu0
    %1420 = vmatprep.mubr.f32.mxu0 0.0
    %1421 = vmatmul.mubr.f32.gmra.mrb[0].mxu0 %v1211
    %v1422 = vpop.f32.mrb[0].mxu0
    %v1423 = vadd.f32 0.0, %v1422
    %v1424 = vpop.f32.mrb[0].mxu0
    %1425 = vmatprep.mubr.f32.mxu0 0.0
    %1426 = vmatmul.mubr.f32.gmra.mrb[0].mxu0 %v1214
    %v1427 = vpop.f32.mrb[0].mxu0
    %v1428 = vadd.f32 0.0, %v1427
    %v1429 = vpop.f32.mrb[0].mxu0
    %1430 = vmatprep.mubr.f32.mxu0 0.0
    %1431 = vmatmul.mubr.f32.gmra.mrb[0].mxu0 %v1217
    %v1432 = vpop.f32.mrb[0].mxu0
    %v1433 = vadd.f32 0.0, %v1432
    %v1434 = vpop.f32.mrb[0].mxu0
    %1435 = vmatprep.mubr.f32.mxu0 0.0
    %1436 = vmatmul.mubr.f32.gmra.mrb[0].mxu0 %v1220
    %v1437 = vpop.f32.mrb[0].mxu0
    %v1438 = vadd.f32 0.0, %v1437
    %v1439 = vpop.f32.mrb[0].mxu0
    %1440 = vmatprep.mubr.f32.mxu0 0.0
    %1441 = vmatmul.mubr.f32.gmra.mrb[0].mxu0 %v1223
    %v1442 = vpop.f32.mrb[0].mxu0
    %v1443 = vadd.f32 0.0, %v1442
    %v1444 = vpop.f32.mrb[0].mxu0
    %1445 = vmatprep.mubr.f32.mxu0 0.0
    %1446 = vmatmul.mubr.f32.gmra.mrb[0].mxu0 %v1226
    %v1447 = vpop.f32.mrb[0].mxu0
    %v1448 = vadd.f32 0.0, %v1447
    %v1449 = vpop.f32.mrb[0].mxu0
    %1450 = vmatprep.mubr.f32.mxu0 0.0
    %1451 = vmatmul.mubr.f32.gmra.mrb[0].mxu0 %v1229
    %v1452 = vpop.f32.mrb[0].mxu0
    %v1453 = vadd.f32 0.0, %v1452
    %v1454 = vpop.f32.mrb[0].mxu0
    %1455 = vdwg.mxu0
    %v1456 = vld [vmem:[%s10] sm:$0x7]
    %v1457 = vld [vmem:[%s11] sm:$0x1]
    %v1459 = vlaneseq
    %v1460 = vshrl.u32 %v1459, 7
    %v1461 = vsub.s32 0, %v1460
    %v1462 = vrot.slane %v1457, %v1461
    %vm1464 = vcmask 23552
    %v1466 = vsel %vm1464, %v1298, 0
    %v1469 = vsel %vm1464, %v1303, 0
    %v1472 = vsel %vm1464, %v1308, 0
    %v1475 = vsel %vm1464, %v1313, 0
    %v1478 = vsel %vm1464, %v1318, 0
    %v1481 = vsel %vm1464, %v1323, 0
    %v1484 = vsel %vm1464, %v1328, 0
    %v1487 = vsel %vm1464, %v1333, 0
    %v1490 = vsel %vm1464, %v1338, 0
    %v1493 = vsel %vm1464, %v1343, 0
    %v1496 = vsel %vm1464, %v1348, 0
    %v1499 = vsel %vm1464, %v1353, 0
    %v1502 = vsel %vm1464, %v1358, 0
    %v1505 = vsel %vm1464, %v1363, 0
    %v1508 = vsel %vm1464, %v1368, 0
    %v1511 = vsel %vm1464, %v1373, 0
    %v1514 = vsel %vm1464, %v1378, 0
    %v1517 = vsel %vm1464, %v1383, 0
    %v1520 = vsel %vm1464, %v1388, 0
    %v1523 = vsel %vm1464, %v1393, 0
    %v1526 = vsel %vm1464, %v1398, 0
    %v1529 = vsel %vm1464, %v1403, 0
    %v1532 = vsel %vm1464, %v1408, 0
    %v1535 = vsel %vm1464, %v1413, 0
    %v1538 = vsel %vm1464, %v1418, 0
    %v1541 = vsel %vm1464, %v1423, 0
    %v1544 = vsel %vm1464, %v1428, 0
    %v1547 = vsel %vm1464, %v1433, 0
    %v1550 = vsel %vm1464, %v1438, 0
    %v1553 = vsel %vm1464, %v1443, 0
    %v1556 = vsel %vm1464, %v1448, 0
    %v1559 = vsel %vm1464, %v1453, 0
    %vm1561 = vcmask 1042432
    %v1563 = vsel %vm1561, %v1456, 0
    %1565 = vmatprep.subr.mxu0 0.0
    %1566 = vmatpush1.msra.mxu0 %v1563
    %1567 = vmatprep.subr.mxu0 0.0
    %1568 = vmatpush1.msra.mxu0 0.0
    %1569 = vmatprep.subr.mxu0 0.0
    %1570 = vmatpush1.msra.mxu0 0.0
    %1571 = vmatprep.subr.mxu0 0.0
    %1572 = vmatpush1.msra.mxu0 0.0
    %1573 = vmatprep.subr.mxu0 0.0
    %1574 = vmatpush1.msra.mxu0 0.0
    %1575 = vmatprep.subr.mxu0 0.0
    %1576 = vmatpush1.msra.mxu0 0.0
    %1577 = vmatprep.subr.mxu0 0.0
    %1578 = vmatpush1.msra.mxu0 0.0
    %1579 = vmatprep.subr.mxu0 0.0
    %1580 = vmatpush1.msra.mxu0 0.0
    %1581 = vmatprep.subr.mxu0 0.0
    %1582 = vmatpush1.msra.mxu0 0.0
    %1583 = vmatprep.subr.mxu0 0.0
    %1584 = vmatpush1.msra.mxu0 0.0
    %1585 = vmatprep.subr.mxu0 0.0
    %1586 = vmatpush1.msra.mxu0 0.0
    %1587 = vmatprep.subr.mxu0 0.0
    %1588 = vmatpush1.msra.mxu0 0.0
    %1589 = vmatprep.subr.mxu0 0.0
    %1590 = vmatpush1.msra.mxu0 0.0
    %1591 = vmatprep.subr.mxu0 0.0
    %1592 = vmatpush1.msra.mxu0 0.0
    %1593 = vmatprep.subr.mxu0 0.0
    %1594 = vmatpush1.msra.mxu0 0.0
    %1595 = vmatprep.subr.mxu0 0.0
    %1596 = vmatpush1.msra.mxu0 0.0
    %1597 = vmatprep.subr.mxu0 0.0
    %1598 = vmatpush1.msra.mxu0 0.0
    %1599 = vmatprep.subr.mxu0 0.0
    %1600 = vmatpush1.msra.mxu0 0.0
    %1601 = vmatprep.subr.mxu0 0.0
    %1602 = vmatpush1.msra.mxu0 0.0
    %1603 = vmatprep.subr.mxu0 0.0
    %1604 = vmatpush1.msra.mxu0 0.0
    %1605 = vmatprep.subr.mxu0 0.0
    %1606 = vmatpush1.msra.mxu0 0.0
    %1607 = vmatprep.subr.mxu0 0.0
    %1608 = vmatpush1.msra.mxu0 0.0
    %1609 = vmatprep.subr.mxu0 0.0
    %1610 = vmatpush1.msra.mxu0 0.0
    %1611 = vmatprep.subr.mxu0 0.0
    %1612 = vmatpush1.msra.mxu0 0.0
    %1613 = vmatprep.subr.mxu0 0.0
    %1614 = vmatpush1.msra.mxu0 0.0
    %1615 = vmatprep.subr.mxu0 0.0
    %1616 = vmatpush1.msra.mxu0 0.0
    %1617 = vmatprep.subr.mxu0 0.0
    %1618 = vmatpush1.msra.mxu0 0.0
    %1619 = vmatprep.subr.mxu0 0.0
    %1620 = vmatpush1.msra.mxu0 0.0
    %1621 = vmatprep.subr.mxu0 0.0
    %1622 = vmatpush1.msra.mxu0 0.0
    %1623 = vmatprep.subr.mxu0 0.0
    %1624 = vmatpush1.msra.mxu0 0.0
    %1625 = vmatprep.subr.mxu0 0.0
    %1626 = vmatpush1.msra.mxu0 0.0
    %1627 = vmatprep.subr.mxu0 0.0
    %1628 = vmatpush1.msra.mxu0 0.0
    %1629 = vmatprep.mubr.f32.mxu0 0.0
    %1630 = vmatmul.mubr.f32.gmra.mrb[0].mxu0 %v1466
    %v1631 = vpop.f32.mrb[0].mxu0
    %v1632 = vadd.f32 %v1462, %v1631
    %v1633 = vpop.f32.mrb[0].mxu0
    %1634 = vmatprep.mubr.f32.mxu0 0.0
    %1635 = vmatmul.mubr.f32.gmra.mrb[0].mxu0 %v1469
    %v1636 = vpop.f32.mrb[0].mxu0
    %v1637 = vadd.f32 %v1462, %v1636
    %v1638 = vpop.f32.mrb[0].mxu0
    %1639 = vmatprep.mubr.f32.mxu0 0.0
    %1640 = vmatmul.mubr.f32.gmra.mrb[0].mxu0 %v1472
    %v1641 = vpop.f32.mrb[0].mxu0
    %v1642 = vadd.f32 %v1462, %v1641
    %v1643 = vpop.f32.mrb[0].mxu0
    %1644 = vmatprep.mubr.f32.mxu0 0.0
    %1645 = vmatmul.mubr.f32.gmra.mrb[0].mxu0 %v1475
    %v1646 = vpop.f32.mrb[0].mxu0
    %v1647 = vadd.f32 %v1462, %v1646
    %v1648 = vpop.f32.mrb[0].mxu0
    %1649 = vmatprep.mubr.f32.mxu0 0.0
    %1650 = vmatmul.mubr.f32.gmra.mrb[0].mxu0 %v1478
    %v1651 = vpop.f32.mrb[0].mxu0
    %v1652 = vadd.f32 %v1462, %v1651
    %v1653 = vpop.f32.mrb[0].mxu0
    %1654 = vmatprep.mubr.f32.mxu0 0.0
    %1655 = vmatmul.mubr.f32.gmra.mrb[0].mxu0 %v1481
    %v1656 = vpop.f32.mrb[0].mxu0
    %v1657 = vadd.f32 %v1462, %v1656
    %v1658 = vpop.f32.mrb[0].mxu0
    %1659 = vmatprep.mubr.f32.mxu0 0.0
    %1660 = vmatmul.mubr.f32.gmra.mrb[0].mxu0 %v1484
    %v1661 = vpop.f32.mrb[0].mxu0
    %v1662 = vadd.f32 %v1462, %v1661
    %v1663 = vpop.f32.mrb[0].mxu0
    %1664 = vmatprep.mubr.f32.mxu0 0.0
    %1665 = vmatmul.mubr.f32.gmra.mrb[0].mxu0 %v1487
    %v1666 = vpop.f32.mrb[0].mxu0
    %v1667 = vadd.f32 %v1462, %v1666
    %v1668 = vpop.f32.mrb[0].mxu0
    %1669 = vmatprep.mubr.f32.mxu0 0.0
    %1670 = vmatmul.mubr.f32.gmra.mrb[0].mxu0 %v1490
    %v1671 = vpop.f32.mrb[0].mxu0
    %v1672 = vadd.f32 %v1462, %v1671
    %v1673 = vpop.f32.mrb[0].mxu0
    %1674 = vmatprep.mubr.f32.mxu0 0.0
    %1675 = vmatmul.mubr.f32.gmra.mrb[0].mxu0 %v1493
    %v1676 = vpop.f32.mrb[0].mxu0
    %v1677 = vadd.f32 %v1462, %v1676
    %v1678 = vpop.f32.mrb[0].mxu0
    %1679 = vmatprep.mubr.f32.mxu0 0.0
    %1680 = vmatmul.mubr.f32.gmra.mrb[0].mxu0 %v1496
    %v1681 = vpop.f32.mrb[0].mxu0
    %v1682 = vadd.f32 %v1462, %v1681
    %v1683 = vpop.f32.mrb[0].mxu0
    %1684 = vmatprep.mubr.f32.mxu0 0.0
    %1685 = vmatmul.mubr.f32.gmra.mrb[0].mxu0 %v1499
    %v1686 = vpop.f32.mrb[0].mxu0
    %v1687 = vadd.f32 %v1462, %v1686
    %v1688 = vpop.f32.mrb[0].mxu0
    %1689 = vmatprep.mubr.f32.mxu0 0.0
    %1690 = vmatmul.mubr.f32.gmra.mrb[0].mxu0 %v1502
    %v1691 = vpop.f32.mrb[0].mxu0
    %v1692 = vadd.f32 %v1462, %v1691
    %v1693 = vpop.f32.mrb[0].mxu0
    %1694 = vmatprep.mubr.f32.mxu0 0.0
    %1695 = vmatmul.mubr.f32.gmra.mrb[0].mxu0 %v1505
    %v1696 = vpop.f32.mrb[0].mxu0
    %v1697 = vadd.f32 %v1462, %v1696
    %v1698 = vpop.f32.mrb[0].mxu0
    %1699 = vmatprep.mubr.f32.mxu0 0.0
    %1700 = vmatmul.mubr.f32.gmra.mrb[0].mxu0 %v1508
    %v1701 = vpop.f32.mrb[0].mxu0
    %v1702 = vadd.f32 %v1462, %v1701
    %v1703 = vpop.f32.mrb[0].mxu0
    %1704 = vmatprep.mubr.f32.mxu0 0.0
    %1705 = vmatmul.mubr.f32.gmra.mrb[0].mxu0 %v1511
    %v1706 = vpop.f32.mrb[0].mxu0
    %v1707 = vadd.f32 %v1462, %v1706
    %v1708 = vpop.f32.mrb[0].mxu0
    %1709 = vmatprep.mubr.f32.mxu0 0.0
    %1710 = vmatmul.mubr.f32.gmra.mrb[0].mxu0 %v1514
    %v1711 = vpop.f32.mrb[0].mxu0
    %v1712 = vadd.f32 %v1462, %v1711
    %v1713 = vpop.f32.mrb[0].mxu0
    %1714 = vmatprep.mubr.f32.mxu0 0.0
    %1715 = vmatmul.mubr.f32.gmra.mrb[0].mxu0 %v1517
    %v1716 = vpop.f32.mrb[0].mxu0
    %v1717 = vadd.f32 %v1462, %v1716
    %v1718 = vpop.f32.mrb[0].mxu0
    %1719 = vmatprep.mubr.f32.mxu0 0.0
    %1720 = vmatmul.mubr.f32.gmra.mrb[0].mxu0 %v1520
    %v1721 = vpop.f32.mrb[0].mxu0
    %v1722 = vadd.f32 %v1462, %v1721
    %v1723 = vpop.f32.mrb[0].mxu0
    %1724 = vmatprep.mubr.f32.mxu0 0.0
    %1725 = vmatmul.mubr.f32.gmra.mrb[0].mxu0 %v1523
    %v1726 = vpop.f32.mrb[0].mxu0
    %v1727 = vadd.f32 %v1462, %v1726
    %v1728 = vpop.f32.mrb[0].mxu0
    %1729 = vmatprep.mubr.f32.mxu0 0.0
    %1730 = vmatmul.mubr.f32.gmra.mrb[0].mxu0 %v1526
    %v1731 = vpop.f32.mrb[0].mxu0
    %v1732 = vadd.f32 %v1462, %v1731
    %v1733 = vpop.f32.mrb[0].mxu0
    %1734 = vmatprep.mubr.f32.mxu0 0.0
    %1735 = vmatmul.mubr.f32.gmra.mrb[0].mxu0 %v1529
    %v1736 = vpop.f32.mrb[0].mxu0
    %v1737 = vadd.f32 %v1462, %v1736
    %v1738 = vpop.f32.mrb[0].mxu0
    %1739 = vmatprep.mubr.f32.mxu0 0.0
    %1740 = vmatmul.mubr.f32.gmra.mrb[0].mxu0 %v1532
    %v1741 = vpop.f32.mrb[0].mxu0
    %v1742 = vadd.f32 %v1462, %v1741
    %v1743 = vpop.f32.mrb[0].mxu0
    %1744 = vmatprep.mubr.f32.mxu0 0.0
    %1745 = vmatmul.mubr.f32.gmra.mrb[0].mxu0 %v1535
    %v1746 = vpop.f32.mrb[0].mxu0
    %v1747 = vadd.f32 %v1462, %v1746
    %v1748 = vpop.f32.mrb[0].mxu0
    %1749 = vmatprep.mubr.f32.mxu0 0.0
    %1750 = vmatmul.mubr.f32.gmra.mrb[0].mxu0 %v1538
    %v1751 = vpop.f32.mrb[0].mxu0
    %v1752 = vadd.f32 %v1462, %v1751
    %v1753 = vpop.f32.mrb[0].mxu0
    %1754 = vmatprep.mubr.f32.mxu0 0.0
    %1755 = vmatmul.mubr.f32.gmra.mrb[0].mxu0 %v1541
    %v1756 = vpop.f32.mrb[0].mxu0
    %v1757 = vadd.f32 %v1462, %v1756
    %v1758 = vpop.f32.mrb[0].mxu0
    %1759 = vmatprep.mubr.f32.mxu0 0.0
    %1760 = vmatmul.mubr.f32.gmra.mrb[0].mxu0 %v1544
    %v1761 = vpop.f32.mrb[0].mxu0
    %v1762 = vadd.f32 %v1462, %v1761
    %v1763 = vpop.f32.mrb[0].mxu0
    %1764 = vmatprep.mubr.f32.mxu0 0.0
    %1765 = vmatmul.mubr.f32.gmra.mrb[0].mxu0 %v1547
    %v1766 = vpop.f32.mrb[0].mxu0
    %v1767 = vadd.f32 %v1462, %v1766
    %v1768 = vpop.f32.mrb[0].mxu0
    %1769 = vmatprep.mubr.f32.mxu0 0.0
    %1770 = vmatmul.mubr.f32.gmra.mrb[0].mxu0 %v1550
    %v1771 = vpop.f32.mrb[0].mxu0
    %v1772 = vadd.f32 %v1462, %v1771
    %v1773 = vpop.f32.mrb[0].mxu0
    %1774 = vmatprep.mubr.f32.mxu0 0.0
    %1775 = vmatmul.mubr.f32.gmra.mrb[0].mxu0 %v1553
    %v1776 = vpop.f32.mrb[0].mxu0
    %v1777 = vadd.f32 %v1462, %v1776
    %v1778 = vpop.f32.mrb[0].mxu0
    %1779 = vmatprep.mubr.f32.mxu0 0.0
    %1780 = vmatmul.mubr.f32.gmra.mrb[0].mxu0 %v1556
    %v1781 = vpop.f32.mrb[0].mxu0
    %v1782 = vadd.f32 %v1462, %v1781
    %v1783 = vpop.f32.mrb[0].mxu0
    %1784 = vmatprep.mubr.f32.mxu0 0.0
    %1785 = vmatmul.mubr.f32.gmra.mrb[0].mxu0 %v1559
    %v1786 = vpop.f32.mrb[0].mxu0
    %v1787 = vadd.f32 %v1462, %v1786
    %v1788 = vpop.f32.mrb[0].mxu0
    %1789 = vdwg.mxu0
    %v1790 = vmax.f32 %v1632, 0.0
    %v1791 = vmax.f32 %v1637, 0.0
    %v1792 = vmax.f32 %v1642, 0.0
    %v1793 = vmax.f32 %v1647, 0.0
    %v1794 = vmax.f32 %v1652, 0.0
    %v1795 = vmax.f32 %v1657, 0.0
    %v1796 = vmax.f32 %v1662, 0.0
    %v1797 = vmax.f32 %v1667, 0.0
    %v1798 = vmax.f32 %v1672, 0.0
    %v1799 = vmax.f32 %v1677, 0.0
    %v1800 = vmax.f32 %v1682, 0.0
    %v1801 = vmax.f32 %v1687, 0.0
    %v1802 = vmax.f32 %v1692, 0.0
    %v1803 = vmax.f32 %v1697, 0.0
    %v1804 = vmax.f32 %v1702, 0.0
    %v1805 = vmax.f32 %v1707, 0.0
    %v1806 = vmax.f32 %v1712, 0.0
    %v1807 = vmax.f32 %v1717, 0.0
    %v1808 = vmax.f32 %v1722, 0.0
    %v1809 = vmax.f32 %v1727, 0.0
    %v1810 = vmax.f32 %v1732, 0.0
    %v1811 = vmax.f32 %v1737, 0.0
    %v1812 = vmax.f32 %v1742, 0.0
    %v1813 = vmax.f32 %v1747, 0.0
    %v1814 = vmax.f32 %v1752, 0.0
    %v1815 = vmax.f32 %v1757, 0.0
    %v1816 = vmax.f32 %v1762, 0.0
    %v1817 = vmax.f32 %v1767, 0.0
    %v1818 = vmax.f32 %v1772, 0.0
    %v1819 = vmax.f32 %v1777, 0.0
    %v1820 = vmax.f32 %v1782, 0.0
    %v1821 = vmax.f32 %v1787, 0.0
    %v1822 = vld [vmem:[%s12] sm:$0xff]
    %v1823 = vld [vmem:[%s12 + $0x8] sm:$0xff]
    %v1824 = vld [vmem:[%s12 + $0x10] sm:$0xff]
    %v1825 = vld [vmem:[%s12 + $0x18] sm:$0xff]
    %v1826 = vld [vmem:[%s12 + $0x20] sm:$0xff]
    %v1827 = vld [vmem:[%s12 + $0x28] sm:$0xff]
    %v1828 = vld [vmem:[%s12 + $0x30] sm:$0xff]
    %v1829 = vld [vmem:[%s12 + $0x38] sm:$0xff]
    %v1830 = vld [vmem:[%s13] sm:$0x1]
    %v1832 = vlaneseq
    %v1833 = vshrl.u32 %v1832, 7
    %v1834 = vsub.s32 0, %v1833
    %v1835 = vrot.slane %v1830, %v1834
    %vm1837 = vcmask 523264
    %v1839 = vsel %vm1837, %v1790, 0
    %v1842 = vsel %vm1837, %v1791, 0
    %v1845 = vsel %vm1837, %v1792, 0
    %v1848 = vsel %vm1837, %v1793, 0
    %v1851 = vsel %vm1837, %v1794, 0
    %v1854 = vsel %vm1837, %v1795, 0
    %v1857 = vsel %vm1837, %v1796, 0
    %v1860 = vsel %vm1837, %v1797, 0
    %v1863 = vsel %vm1837, %v1798, 0
    %v1866 = vsel %vm1837, %v1799, 0
    %v1869 = vsel %vm1837, %v1800, 0
    %v1872 = vsel %vm1837, %v1801, 0
    %v1875 = vsel %vm1837, %v1802, 0
    %v1878 = vsel %vm1837, %v1803, 0
    %v1881 = vsel %vm1837, %v1804, 0
    %v1884 = vsel %vm1837, %v1805, 0
    %v1887 = vsel %vm1837, %v1806, 0
    %v1890 = vsel %vm1837, %v1807, 0
    %v1893 = vsel %vm1837, %v1808, 0
    %v1896 = vsel %vm1837, %v1809, 0
    %v1899 = vsel %vm1837, %v1810, 0
    %v1902 = vsel %vm1837, %v1811, 0
    %v1905 = vsel %vm1837, %v1812, 0
    %v1908 = vsel %vm1837, %v1813, 0
    %v1911 = vsel %vm1837, %v1814, 0
    %v1914 = vsel %vm1837, %v1815, 0
    %v1917 = vsel %vm1837, %v1816, 0
    %v1920 = vsel %vm1837, %v1817, 0
    %v1923 = vsel %vm1837, %v1818, 0
    %v1926 = vsel %vm1837, %v1819, 0
    %v1929 = vsel %vm1837, %v1820, 0
    %v1932 = vsel %vm1837, %v1821, 0
    %1934 = vmatprep.subr.mxu0 0.0
    %1935 = vmatpush1.msra.mxu0 %v1822
    %1936 = vmatprep.subr.mxu0 0.0
    %1937 = vmatpush1.msra.mxu0 %v1823
    %1938 = vmatprep.subr.mxu0 0.0
    %1939 = vmatpush1.msra.mxu0 %v1824
    %1940 = vmatprep.subr.mxu0 0.0
    %1941 = vmatpush1.msra.mxu0 %v1825
    %1942 = vmatprep.subr.mxu0 0.0
    %1943 = vmatpush1.msra.mxu0 %v1826
    %1944 = vmatprep.subr.mxu0 0.0
    %1945 = vmatpush1.msra.mxu0 %v1827
    %1946 = vmatprep.subr.mxu0 0.0
    %1947 = vmatpush1.msra.mxu0 %v1828
    %1948 = vmatprep.subr.mxu0 0.0
    %1949 = vmatpush1.msra.mxu0 %v1829
    %1950 = vmatprep.subr.mxu0 0.0
    %1951 = vmatpush1.msra.mxu0 0.0
    %1952 = vmatprep.subr.mxu0 0.0
    %1953 = vmatpush1.msra.mxu0 0.0
    %1954 = vmatprep.subr.mxu0 0.0
    %1955 = vmatpush1.msra.mxu0 0.0
    %1956 = vmatprep.subr.mxu0 0.0
    %1957 = vmatpush1.msra.mxu0 0.0
    %1958 = vmatprep.subr.mxu0 0.0
    %1959 = vmatpush1.msra.mxu0 0.0
    %1960 = vmatprep.subr.mxu0 0.0
    %1961 = vmatpush1.msra.mxu0 0.0
    %1962 = vmatprep.subr.mxu0 0.0
    %1963 = vmatpush1.msra.mxu0 0.0
    %1964 = vmatprep.subr.mxu0 0.0
    %1965 = vmatpush1.msra.mxu0 0.0
    %1966 = vmatprep.subr.mxu0 0.0
    %1967 = vmatpush1.msra.mxu0 0.0
    %1968 = vmatprep.subr.mxu0 0.0
    %1969 = vmatpush1.msra.mxu0 0.0
    %1970 = vmatprep.subr.mxu0 0.0
    %1971 = vmatpush1.msra.mxu0 0.0
    %1972 = vmatprep.subr.mxu0 0.0
    %1973 = vmatpush1.msra.mxu0 0.0
    %1974 = vmatprep.subr.mxu0 0.0
    %1975 = vmatpush1.msra.mxu0 0.0
    %1976 = vmatprep.subr.mxu0 0.0
    %1977 = vmatpush1.msra.mxu0 0.0
    %1978 = vmatprep.subr.mxu0 0.0
    %1979 = vmatpush1.msra.mxu0 0.0
    %1980 = vmatprep.subr.mxu0 0.0
    %1981 = vmatpush1.msra.mxu0 0.0
    %1982 = vmatprep.subr.mxu0 0.0
    %1983 = vmatpush1.msra.mxu0 0.0
    %1984 = vmatprep.subr.mxu0 0.0
    %1985 = vmatpush1.msra.mxu0 0.0
    %1986 = vmatprep.subr.mxu0 0.0
    %1987 = vmatpush1.msra.mxu0 0.0
    %1988 = vmatprep.subr.mxu0 0.0
    %1989 = vmatpush1.msra.mxu0 0.0
    %1990 = vmatprep.subr.mxu0 0.0
    %1991 = vmatpush1.msra.mxu0 0.0
    %1992 = vmatprep.subr.mxu0 0.0
    %1993 = vmatpush1.msra.mxu0 0.0
    %1994 = vmatprep.subr.mxu0 0.0
    %1995 = vmatpush1.msra.mxu0 0.0
    %1996 = vmatprep.subr.mxu0 0.0
    %1997 = vmatpush1.msra.mxu0 0.0
    %1998 = vmatprep.mubr.f32.mxu0 0.0
    %1999 = vmatmul.mubr.f32.gmra.mrb[0].mxu0 %v1839
    %v2000 = vpop.f32.mrb[0].mxu0
    %v2001 = vadd.f32 %v1835, %v2000
    %v2002 = vpop.f32.mrb[0].mxu0
    %2003 = vmatprep.mubr.f32.mxu0 0.0
    %2004 = vmatmul.mubr.f32.gmra.mrb[0].mxu0 %v1842
    %v2005 = vpop.f32.mrb[0].mxu0
    %v2006 = vadd.f32 %v1835, %v2005
    %v2007 = vpop.f32.mrb[0].mxu0
    %2008 = vmatprep.mubr.f32.mxu0 0.0
    %2009 = vmatmul.mubr.f32.gmra.mrb[0].mxu0 %v1845
    %v2010 = vpop.f32.mrb[0].mxu0
    %v2011 = vadd.f32 %v1835, %v2010
    %v2012 = vpop.f32.mrb[0].mxu0
    %2013 = vmatprep.mubr.f32.mxu0 0.0
    %2014 = vmatmul.mubr.f32.gmra.mrb[0].mxu0 %v1848
    %v2015 = vpop.f32.mrb[0].mxu0
    %v2016 = vadd.f32 %v1835, %v2015
    %v2017 = vpop.f32.mrb[0].mxu0
    %2018 = vmatprep.mubr.f32.mxu0 0.0
    %2019 = vmatmul.mubr.f32.gmra.mrb[0].mxu0 %v1851
    %v2020 = vpop.f32.mrb[0].mxu0
    %v2021 = vadd.f32 %v1835, %v2020
    %v2022 = vpop.f32.mrb[0].mxu0
    %2023 = vmatprep.mubr.f32.mxu0 0.0
    %2024 = vmatmul.mubr.f32.gmra.mrb[0].mxu0 %v1854
    %v2025 = vpop.f32.mrb[0].mxu0
    %v2026 = vadd.f32 %v1835, %v2025
    %v2027 = vpop.f32.mrb[0].mxu0
    %2028 = vmatprep.mubr.f32.mxu0 0.0
    %2029 = vmatmul.mubr.f32.gmra.mrb[0].mxu0 %v1857
    %v2030 = vpop.f32.mrb[0].mxu0
    %v2031 = vadd.f32 %v1835, %v2030
    %v2032 = vpop.f32.mrb[0].mxu0
    %2033 = vmatprep.mubr.f32.mxu0 0.0
    %2034 = vmatmul.mubr.f32.gmra.mrb[0].mxu0 %v1860
    %v2035 = vpop.f32.mrb[0].mxu0
    %v2036 = vadd.f32 %v1835, %v2035
    %v2037 = vpop.f32.mrb[0].mxu0
    %2038 = vmatprep.mubr.f32.mxu0 0.0
    %2039 = vmatmul.mubr.f32.gmra.mrb[0].mxu0 %v1863
    %v2040 = vpop.f32.mrb[0].mxu0
    %v2041 = vadd.f32 %v1835, %v2040
    %v2042 = vpop.f32.mrb[0].mxu0
    %2043 = vmatprep.mubr.f32.mxu0 0.0
    %2044 = vmatmul.mubr.f32.gmra.mrb[0].mxu0 %v1866
    %v2045 = vpop.f32.mrb[0].mxu0
    %v2046 = vadd.f32 %v1835, %v2045
    %v2047 = vpop.f32.mrb[0].mxu0
    %2048 = vmatprep.mubr.f32.mxu0 0.0
    %2049 = vmatmul.mubr.f32.gmra.mrb[0].mxu0 %v1869
    %v2050 = vpop.f32.mrb[0].mxu0
    %v2051 = vadd.f32 %v1835, %v2050
    %v2052 = vpop.f32.mrb[0].mxu0
    %2053 = vmatprep.mubr.f32.mxu0 0.0
    %2054 = vmatmul.mubr.f32.gmra.mrb[0].mxu0 %v1872
    %v2055 = vpop.f32.mrb[0].mxu0
    %v2056 = vadd.f32 %v1835, %v2055
    %v2057 = vpop.f32.mrb[0].mxu0
    %2058 = vmatprep.mubr.f32.mxu0 0.0
    %2059 = vmatmul.mubr.f32.gmra.mrb[0].mxu0 %v1875
    %v2060 = vpop.f32.mrb[0].mxu0
    %v2061 = vadd.f32 %v1835, %v2060
    %v2062 = vpop.f32.mrb[0].mxu0
    %2063 = vmatprep.mubr.f32.mxu0 0.0
    %2064 = vmatmul.mubr.f32.gmra.mrb[0].mxu0 %v1878
    %v2065 = vpop.f32.mrb[0].mxu0
    %v2066 = vadd.f32 %v1835, %v2065
    %v2067 = vpop.f32.mrb[0].mxu0
    %2068 = vmatprep.mubr.f32.mxu0 0.0
    %2069 = vmatmul.mubr.f32.gmra.mrb[0].mxu0 %v1881
    %v2070 = vpop.f32.mrb[0].mxu0
    %v2071 = vadd.f32 %v1835, %v2070
    %v2072 = vpop.f32.mrb[0].mxu0
    %2073 = vmatprep.mubr.f32.mxu0 0.0
    %2074 = vmatmul.mubr.f32.gmra.mrb[0].mxu0 %v1884
    %v2075 = vpop.f32.mrb[0].mxu0
    %v2076 = vadd.f32 %v1835, %v2075
    %v2077 = vpop.f32.mrb[0].mxu0
    %2078 = vmatprep.mubr.f32.mxu0 0.0
    %2079 = vmatmul.mubr.f32.gmra.mrb[0].mxu0 %v1887
    %v2080 = vpop.f32.mrb[0].mxu0
    %v2081 = vadd.f32 %v1835, %v2080
    %v2082 = vpop.f32.mrb[0].mxu0
    %2083 = vmatprep.mubr.f32.mxu0 0.0
    %2084 = vmatmul.mubr.f32.gmra.mrb[0].mxu0 %v1890
    %v2085 = vpop.f32.mrb[0].mxu0
    %v2086 = vadd.f32 %v1835, %v2085
    %v2087 = vpop.f32.mrb[0].mxu0
    %2088 = vmatprep.mubr.f32.mxu0 0.0
    %2089 = vmatmul.mubr.f32.gmra.mrb[0].mxu0 %v1893
    %v2090 = vpop.f32.mrb[0].mxu0
    %v2091 = vadd.f32 %v1835, %v2090
    %v2092 = vpop.f32.mrb[0].mxu0
    %2093 = vmatprep.mubr.f32.mxu0 0.0
    %2094 = vmatmul.mubr.f32.gmra.mrb[0].mxu0 %v1896
    %v2095 = vpop.f32.mrb[0].mxu0
    %v2096 = vadd.f32 %v1835, %v2095
    %v2097 = vpop.f32.mrb[0].mxu0
    %2098 = vmatprep.mubr.f32.mxu0 0.0
    %2099 = vmatmul.mubr.f32.gmra.mrb[0].mxu0 %v1899
    %v2100 = vpop.f32.mrb[0].mxu0
    %v2101 = vadd.f32 %v1835, %v2100
    %v2102 = vpop.f32.mrb[0].mxu0
    %2103 = vmatprep.mubr.f32.mxu0 0.0
    %2104 = vmatmul.mubr.f32.gmra.mrb[0].mxu0 %v1902
    %v2105 = vpop.f32.mrb[0].mxu0
    %v2106 = vadd.f32 %v1835, %v2105
    %v2107 = vpop.f32.mrb[0].mxu0
    %2108 = vmatprep.mubr.f32.mxu0 0.0
    %2109 = vmatmul.mubr.f32.gmra.mrb[0].mxu0 %v1905
    %v2110 = vpop.f32.mrb[0].mxu0
    %v2111 = vadd.f32 %v1835, %v2110
    %v2112 = vpop.f32.mrb[0].mxu0
    %2113 = vmatprep.mubr.f32.mxu0 0.0
    %2114 = vmatmul.mubr.f32.gmra.mrb[0].mxu0 %v1908
    %v2115 = vpop.f32.mrb[0].mxu0
    %v2116 = vadd.f32 %v1835, %v2115
    %v2117 = vpop.f32.mrb[0].mxu0
    %2118 = vmatprep.mubr.f32.mxu0 0.0
    %2119 = vmatmul.mubr.f32.gmra.mrb[0].mxu0 %v1911
    %v2120 = vpop.f32.mrb[0].mxu0
    %v2121 = vadd.f32 %v1835, %v2120
    %v2122 = vpop.f32.mrb[0].mxu0
    %2123 = vmatprep.mubr.f32.mxu0 0.0
    %2124 = vmatmul.mubr.f32.gmra.mrb[0].mxu0 %v1914
    %v2125 = vpop.f32.mrb[0].mxu0
    %v2126 = vadd.f32 %v1835, %v2125
    %v2127 = vpop.f32.mrb[0].mxu0
    %2128 = vmatprep.mubr.f32.mxu0 0.0
    %2129 = vmatmul.mubr.f32.gmra.mrb[0].mxu0 %v1917
    %v2130 = vpop.f32.mrb[0].mxu0
    %v2131 = vadd.f32 %v1835, %v2130
    %v2132 = vpop.f32.mrb[0].mxu0
    %2133 = vmatprep.mubr.f32.mxu0 0.0
    %2134 = vmatmul.mubr.f32.gmra.mrb[0].mxu0 %v1920
    %v2135 = vpop.f32.mrb[0].mxu0
    %v2136 = vadd.f32 %v1835, %v2135
    %v2137 = vpop.f32.mrb[0].mxu0
    %2138 = vmatprep.mubr.f32.mxu0 0.0
    %2139 = vmatmul.mubr.f32.gmra.mrb[0].mxu0 %v1923
    %v2140 = vpop.f32.mrb[0].mxu0
    %v2141 = vadd.f32 %v1835, %v2140
    %v2142 = vpop.f32.mrb[0].mxu0
    %2143 = vmatprep.mubr.f32.mxu0 0.0
    %2144 = vmatmul.mubr.f32.gmra.mrb[0].mxu0 %v1926
    %v2145 = vpop.f32.mrb[0].mxu0
    %v2146 = vadd.f32 %v1835, %v2145
    %v2147 = vpop.f32.mrb[0].mxu0
    %2148 = vmatprep.mubr.f32.mxu0 0.0
    %2149 = vmatmul.mubr.f32.gmra.mrb[0].mxu0 %v1929
    %v2150 = vpop.f32.mrb[0].mxu0
    %v2151 = vadd.f32 %v1835, %v2150
    %v2152 = vpop.f32.mrb[0].mxu0
    %2153 = vmatprep.mubr.f32.mxu0 0.0
    %2154 = vmatmul.mubr.f32.gmra.mrb[0].mxu0 %v1932
    %v2155 = vpop.f32.mrb[0].mxu0
    %v2156 = vadd.f32 %v1835, %v2155
    %v2157 = vpop.f32.mrb[0].mxu0
    %2158 = vdwg.mxu0
    %v2159 = vmax.f32 %v2001, 0.0
    %v2160 = vmax.f32 %v2006, 0.0
    %v2161 = vmax.f32 %v2011, 0.0
    %v2162 = vmax.f32 %v2016, 0.0
    %v2163 = vmax.f32 %v2021, 0.0
    %v2164 = vmax.f32 %v2026, 0.0
    %v2165 = vmax.f32 %v2031, 0.0
    %v2166 = vmax.f32 %v2036, 0.0
    %v2167 = vmax.f32 %v2041, 0.0
    %v2168 = vmax.f32 %v2046, 0.0
    %v2169 = vmax.f32 %v2051, 0.0
    %v2170 = vmax.f32 %v2056, 0.0
    %v2171 = vmax.f32 %v2061, 0.0
    %v2172 = vmax.f32 %v2066, 0.0
    %v2173 = vmax.f32 %v2071, 0.0
    %v2174 = vmax.f32 %v2076, 0.0
    %v2175 = vmax.f32 %v2081, 0.0
    %v2176 = vmax.f32 %v2086, 0.0
    %v2177 = vmax.f32 %v2091, 0.0
    %v2178 = vmax.f32 %v2096, 0.0
    %v2179 = vmax.f32 %v2101, 0.0
    %v2180 = vmax.f32 %v2106, 0.0
    %v2181 = vmax.f32 %v2111, 0.0
    %v2182 = vmax.f32 %v2116, 0.0
    %v2183 = vmax.f32 %v2121, 0.0
    %v2184 = vmax.f32 %v2126, 0.0
    %v2185 = vmax.f32 %v2131, 0.0
    %v2186 = vmax.f32 %v2136, 0.0
    %v2187 = vmax.f32 %v2141, 0.0
    %v2188 = vmax.f32 %v2146, 0.0
    %v2189 = vmax.f32 %v2151, 0.0
    %v2190 = vmax.f32 %v2156, 0.0
    %v2191 = vsub.f32 %v622, %v943
    %v2192 = vsub.f32 %v627, %v948
    %v2193 = vsub.f32 %v632, %v953
    %v2194 = vsub.f32 %v637, %v958
    %v2195 = vsub.f32 %v642, %v963
    %v2196 = vsub.f32 %v647, %v968
    %v2197 = vsub.f32 %v652, %v973
    %v2198 = vsub.f32 %v657, %v978
    %v2199 = vsub.f32 %v662, %v983
    %v2200 = vsub.f32 %v667, %v988
    %v2201 = vsub.f32 %v672, %v993
    %v2202 = vsub.f32 %v677, %v998
    %v2203 = vsub.f32 %v682, %v1003
    %v2204 = vsub.f32 %v687, %v1008
    %v2205 = vsub.f32 %v692, %v1013
    %v2206 = vsub.f32 %v697, %v1018
    %v2207 = vsub.f32 %v702, %v1023
    %v2208 = vsub.f32 %v707, %v1028
    %v2209 = vsub.f32 %v712, %v1033
    %v2210 = vsub.f32 %v717, %v1038
    %v2211 = vsub.f32 %v722, %v1043
    %v2212 = vsub.f32 %v727, %v1048
    %v2213 = vsub.f32 %v732, %v1053
    %v2214 = vsub.f32 %v737, %v1058
    %v2215 = vsub.f32 %v742, %v1063
    %v2216 = vsub.f32 %v747, %v1068
    %v2217 = vsub.f32 %v752, %v1073
    %v2218 = vsub.f32 %v757, %v1078
    %v2219 = vsub.f32 %v762, %v1083
    %v2220 = vsub.f32 %v767, %v1088
    %v2221 = vsub.f32 %v772, %v1093
    %v2222 = vsub.f32 %v777, %v1098
    %v2223 = vadd.f32 %v2191, %v2159
    %v2224 = vadd.f32 %v2192, %v2160
    %v2225 = vadd.f32 %v2193, %v2161
    %v2226 = vadd.f32 %v2194, %v2162
    %v2227 = vadd.f32 %v2195, %v2163
    %v2228 = vadd.f32 %v2196, %v2164
    %v2229 = vadd.f32 %v2197, %v2165
    %v2230 = vadd.f32 %v2198, %v2166
    %v2231 = vadd.f32 %v2199, %v2167
    %v2232 = vadd.f32 %v2200, %v2168
    %v2233 = vadd.f32 %v2201, %v2169
    %v2234 = vadd.f32 %v2202, %v2170
    %v2235 = vadd.f32 %v2203, %v2171
    %v2236 = vadd.f32 %v2204, %v2172
    %v2237 = vadd.f32 %v2205, %v2173
    %v2238 = vadd.f32 %v2206, %v2174
    %v2239 = vadd.f32 %v2207, %v2175
    %v2240 = vadd.f32 %v2208, %v2176
    %v2241 = vadd.f32 %v2209, %v2177
    %v2242 = vadd.f32 %v2210, %v2178
    %v2243 = vadd.f32 %v2211, %v2179
    %v2244 = vadd.f32 %v2212, %v2180
    %v2245 = vadd.f32 %v2213, %v2181
    %v2246 = vadd.f32 %v2214, %v2182
    %v2247 = vadd.f32 %v2215, %v2183
    %v2248 = vadd.f32 %v2216, %v2184
    %v2249 = vadd.f32 %v2217, %v2185
    %v2250 = vadd.f32 %v2218, %v2186
    %v2251 = vadd.f32 %v2219, %v2187
    %v2252 = vadd.f32 %v2220, %v2188
    %v2253 = vadd.f32 %v2221, %v2189
    %v2254 = vadd.f32 %v2222, %v2190
    %v2255 = vld [vmem:[%s14] sm:$0xff]
    %v2256 = vld [vmem:[%s14 + $0x8] sm:$0xff]
    %v2257 = vld [vmem:[%s15] sm:$0x1]
    %v2259 = vlaneseq
    %v2260 = vshrl.u32 %v2259, 7
    %v2261 = vsub.s32 0, %v2260
    %v2262 = vrot.slane %v2257, %v2261
    %v2265 = vsel %vm458, %v2223, 0
    %v2268 = vsel %vm458, %v2224, 0
    %v2271 = vsel %vm458, %v2225, 0
    %v2274 = vsel %vm458, %v2226, 0
    %v2277 = vsel %vm458, %v2227, 0
    %v2280 = vsel %vm458, %v2228, 0
    %v2283 = vsel %vm458, %v2229, 0
    %v2286 = vsel %vm458, %v2230, 0
    %v2289 = vsel %vm458, %v2231, 0
    %v2292 = vsel %vm458, %v2232, 0
    %v2295 = vsel %vm458, %v2233, 0
    %v2298 = vsel %vm458, %v2234, 0
    %v2301 = vsel %vm458, %v2235, 0
    %v2304 = vsel %vm458, %v2236, 0
    %v2307 = vsel %vm458, %v2237, 0
    %v2310 = vsel %vm458, %v2238, 0
    %v2313 = vsel %vm458, %v2239, 0
    %v2316 = vsel %vm458, %v2240, 0
    %v2319 = vsel %vm458, %v2241, 0
    %v2322 = vsel %vm458, %v2242, 0
    %v2325 = vsel %vm458, %v2243, 0
    %v2328 = vsel %vm458, %v2244, 0
    %v2331 = vsel %vm458, %v2245, 0
    %v2334 = vsel %vm458, %v2246, 0
    %v2337 = vsel %vm458, %v2247, 0
    %v2340 = vsel %vm458, %v2248, 0
    %v2343 = vsel %vm458, %v2249, 0
    %v2346 = vsel %vm458, %v2250, 0
    %v2349 = vsel %vm458, %v2251, 0
    %v2352 = vsel %vm458, %v2252, 0
    %v2355 = vsel %vm458, %v2253, 0
    %v2358 = vsel %vm458, %v2254, 0
    %2360 = vmatprep.subr.mxu0 0.0
    %2361 = vmatpush1.msra.mxu0 %v2255
    %2362 = vmatprep.subr.mxu0 0.0
    %2363 = vmatpush1.msra.mxu0 %v2256
    %2364 = vmatprep.subr.mxu0 0.0
    %2365 = vmatpush1.msra.mxu0 0.0
    %2366 = vmatprep.subr.mxu0 0.0
    %2367 = vmatpush1.msra.mxu0 0.0
    %2368 = vmatprep.subr.mxu0 0.0
    %2369 = vmatpush1.msra.mxu0 0.0
    %2370 = vmatprep.subr.mxu0 0.0
    %2371 = vmatpush1.msra.mxu0 0.0
    %2372 = vmatprep.subr.mxu0 0.0
    %2373 = vmatpush1.msra.mxu0 0.0
    %2374 = vmatprep.subr.mxu0 0.0
    %2375 = vmatpush1.msra.mxu0 0.0
    %2376 = vmatprep.subr.mxu0 0.0
    %2377 = vmatpush1.msra.mxu0 0.0
    %2378 = vmatprep.subr.mxu0 0.0
    %2379 = vmatpush1.msra.mxu0 0.0
    %2380 = vmatprep.subr.mxu0 0.0
    %2381 = vmatpush1.msra.mxu0 0.0
    %2382 = vmatprep.subr.mxu0 0.0
    %2383 = vmatpush1.msra.mxu0 0.0
    %2384 = vmatprep.subr.mxu0 0.0
    %2385 = vmatpush1.msra.mxu0 0.0
    %2386 = vmatprep.subr.mxu0 0.0
    %2387 = vmatpush1.msra.mxu0 0.0
    %2388 = vmatprep.subr.mxu0 0.0
    %2389 = vmatpush1.msra.mxu0 0.0
    %2390 = vmatprep.subr.mxu0 0.0
    %2391 = vmatpush1.msra.mxu0 0.0
    %2392 = vmatprep.subr.mxu0 0.0
    %2393 = vmatpush1.msra.mxu0 0.0
    %2394 = vmatprep.subr.mxu0 0.0
    %2395 = vmatpush1.msra.mxu0 0.0
    %2396 = vmatprep.subr.mxu0 0.0
    %2397 = vmatpush1.msra.mxu0 0.0
    %2398 = vmatprep.subr.mxu0 0.0
    %2399 = vmatpush1.msra.mxu0 0.0
    %2400 = vmatprep.subr.mxu0 0.0
    %2401 = vmatpush1.msra.mxu0 0.0
    %2402 = vmatprep.subr.mxu0 0.0
    %2403 = vmatpush1.msra.mxu0 0.0
    %2404 = vmatprep.subr.mxu0 0.0
    %2405 = vmatpush1.msra.mxu0 0.0
    %2406 = vmatprep.subr.mxu0 0.0
    %2407 = vmatpush1.msra.mxu0 0.0
    %2408 = vmatprep.subr.mxu0 0.0
    %2409 = vmatpush1.msra.mxu0 0.0
    %2410 = vmatprep.subr.mxu0 0.0
    %2411 = vmatpush1.msra.mxu0 0.0
    %2412 = vmatprep.subr.mxu0 0.0
    %2413 = vmatpush1.msra.mxu0 0.0
    %2414 = vmatprep.subr.mxu0 0.0
    %2415 = vmatpush1.msra.mxu0 0.0
    %2416 = vmatprep.subr.mxu0 0.0
    %2417 = vmatpush1.msra.mxu0 0.0
    %2418 = vmatprep.subr.mxu0 0.0
    %2419 = vmatpush1.msra.mxu0 0.0
    %2420 = vmatprep.subr.mxu0 0.0
    %2421 = vmatpush1.msra.mxu0 0.0
    %2422 = vmatprep.subr.mxu0 0.0
    %2423 = vmatpush1.msra.mxu0 0.0
    %2424 = vmatprep.mubr.f32.mxu0 0.0
    %2425 = vmatmul.mubr.f32.gmra.mrb[0].mxu0 %v2265
    %v2426 = vpop.f32.mrb[0].mxu0
    %v2427 = vadd.f32 %v2262, %v2426
    %v2428 = vpop.f32.mrb[0].mxu0
    %2429 = vmatprep.mubr.f32.mxu0 0.0
    %2430 = vmatmul.mubr.f32.gmra.mrb[0].mxu0 %v2268
    %v2431 = vpop.f32.mrb[0].mxu0
    %v2432 = vadd.f32 %v2262, %v2431
    %v2433 = vpop.f32.mrb[0].mxu0
    %2434 = vmatprep.mubr.f32.mxu0 0.0
    %2435 = vmatmul.mubr.f32.gmra.mrb[0].mxu0 %v2271
    %v2436 = vpop.f32.mrb[0].mxu0
    %v2437 = vadd.f32 %v2262, %v2436
    %v2438 = vpop.f32.mrb[0].mxu0
    %2439 = vmatprep.mubr.f32.mxu0 0.0
    %2440 = vmatmul.mubr.f32.gmra.mrb[0].mxu0 %v2274
    %v2441 = vpop.f32.mrb[0].mxu0
    %v2442 = vadd.f32 %v2262, %v2441
    %v2443 = vpop.f32.mrb[0].mxu0
    %2444 = vmatprep.mubr.f32.mxu0 0.0
    %2445 = vmatmul.mubr.f32.gmra.mrb[0].mxu0 %v2277
    %v2446 = vpop.f32.mrb[0].mxu0
    %v2447 = vadd.f32 %v2262, %v2446
    %v2448 = vpop.f32.mrb[0].mxu0
    %2449 = vmatprep.mubr.f32.mxu0 0.0
    %2450 = vmatmul.mubr.f32.gmra.mrb[0].mxu0 %v2280
    %v2451 = vpop.f32.mrb[0].mxu0
    %v2452 = vadd.f32 %v2262, %v2451
    %v2453 = vpop.f32.mrb[0].mxu0
    %2454 = vmatprep.mubr.f32.mxu0 0.0
    %2455 = vmatmul.mubr.f32.gmra.mrb[0].mxu0 %v2283
    %v2456 = vpop.f32.mrb[0].mxu0
    %v2457 = vadd.f32 %v2262, %v2456
    %v2458 = vpop.f32.mrb[0].mxu0
    %2459 = vmatprep.mubr.f32.mxu0 0.0
    %2460 = vmatmul.mubr.f32.gmra.mrb[0].mxu0 %v2286
    %v2461 = vpop.f32.mrb[0].mxu0
    %v2462 = vadd.f32 %v2262, %v2461
    %v2463 = vpop.f32.mrb[0].mxu0
    %2464 = vmatprep.mubr.f32.mxu0 0.0
    %2465 = vmatmul.mubr.f32.gmra.mrb[0].mxu0 %v2289
    %v2466 = vpop.f32.mrb[0].mxu0
    %v2467 = vadd.f32 %v2262, %v2466
    %v2468 = vpop.f32.mrb[0].mxu0
    %2469 = vmatprep.mubr.f32.mxu0 0.0
    %2470 = vmatmul.mubr.f32.gmra.mrb[0].mxu0 %v2292
    %v2471 = vpop.f32.mrb[0].mxu0
    %v2472 = vadd.f32 %v2262, %v2471
    %v2473 = vpop.f32.mrb[0].mxu0
    %2474 = vmatprep.mubr.f32.mxu0 0.0
    %2475 = vmatmul.mubr.f32.gmra.mrb[0].mxu0 %v2295
    %v2476 = vpop.f32.mrb[0].mxu0
    %v2477 = vadd.f32 %v2262, %v2476
    %v2478 = vpop.f32.mrb[0].mxu0
    %2479 = vmatprep.mubr.f32.mxu0 0.0
    %2480 = vmatmul.mubr.f32.gmra.mrb[0].mxu0 %v2298
    %v2481 = vpop.f32.mrb[0].mxu0
    %v2482 = vadd.f32 %v2262, %v2481
    %v2483 = vpop.f32.mrb[0].mxu0
    %2484 = vmatprep.mubr.f32.mxu0 0.0
    %2485 = vmatmul.mubr.f32.gmra.mrb[0].mxu0 %v2301
    %v2486 = vpop.f32.mrb[0].mxu0
    %v2487 = vadd.f32 %v2262, %v2486
    %v2488 = vpop.f32.mrb[0].mxu0
    %2489 = vmatprep.mubr.f32.mxu0 0.0
    %2490 = vmatmul.mubr.f32.gmra.mrb[0].mxu0 %v2304
    %v2491 = vpop.f32.mrb[0].mxu0
    %v2492 = vadd.f32 %v2262, %v2491
    %v2493 = vpop.f32.mrb[0].mxu0
    %2494 = vmatprep.mubr.f32.mxu0 0.0
    %2495 = vmatmul.mubr.f32.gmra.mrb[0].mxu0 %v2307
    %v2496 = vpop.f32.mrb[0].mxu0
    %v2497 = vadd.f32 %v2262, %v2496
    %v2498 = vpop.f32.mrb[0].mxu0
    %2499 = vmatprep.mubr.f32.mxu0 0.0
    %2500 = vmatmul.mubr.f32.gmra.mrb[0].mxu0 %v2310
    %v2501 = vpop.f32.mrb[0].mxu0
    %v2502 = vadd.f32 %v2262, %v2501
    %v2503 = vpop.f32.mrb[0].mxu0
    %2504 = vmatprep.mubr.f32.mxu0 0.0
    %2505 = vmatmul.mubr.f32.gmra.mrb[0].mxu0 %v2313
    %v2506 = vpop.f32.mrb[0].mxu0
    %v2507 = vadd.f32 %v2262, %v2506
    %v2508 = vpop.f32.mrb[0].mxu0
    %2509 = vmatprep.mubr.f32.mxu0 0.0
    %2510 = vmatmul.mubr.f32.gmra.mrb[0].mxu0 %v2316
    %v2511 = vpop.f32.mrb[0].mxu0
    %v2512 = vadd.f32 %v2262, %v2511
    %v2513 = vpop.f32.mrb[0].mxu0
    %2514 = vmatprep.mubr.f32.mxu0 0.0
    %2515 = vmatmul.mubr.f32.gmra.mrb[0].mxu0 %v2319
    %v2516 = vpop.f32.mrb[0].mxu0
    %v2517 = vadd.f32 %v2262, %v2516
    %v2518 = vpop.f32.mrb[0].mxu0
    %2519 = vmatprep.mubr.f32.mxu0 0.0
    %2520 = vmatmul.mubr.f32.gmra.mrb[0].mxu0 %v2322
    %v2521 = vpop.f32.mrb[0].mxu0
    %v2522 = vadd.f32 %v2262, %v2521
    %v2523 = vpop.f32.mrb[0].mxu0
    %2524 = vmatprep.mubr.f32.mxu0 0.0
    %2525 = vmatmul.mubr.f32.gmra.mrb[0].mxu0 %v2325
    %v2526 = vpop.f32.mrb[0].mxu0
    %v2527 = vadd.f32 %v2262, %v2526
    %v2528 = vpop.f32.mrb[0].mxu0
    %2529 = vmatprep.mubr.f32.mxu0 0.0
    %2530 = vmatmul.mubr.f32.gmra.mrb[0].mxu0 %v2328
    %v2531 = vpop.f32.mrb[0].mxu0
    %v2532 = vadd.f32 %v2262, %v2531
    %v2533 = vpop.f32.mrb[0].mxu0
    %2534 = vmatprep.mubr.f32.mxu0 0.0
    %2535 = vmatmul.mubr.f32.gmra.mrb[0].mxu0 %v2331
    %v2536 = vpop.f32.mrb[0].mxu0
    %v2537 = vadd.f32 %v2262, %v2536
    %v2538 = vpop.f32.mrb[0].mxu0
    %2539 = vmatprep.mubr.f32.mxu0 0.0
    %2540 = vmatmul.mubr.f32.gmra.mrb[0].mxu0 %v2334
    %v2541 = vpop.f32.mrb[0].mxu0
    %v2542 = vadd.f32 %v2262, %v2541
    %v2543 = vpop.f32.mrb[0].mxu0
    %2544 = vmatprep.mubr.f32.mxu0 0.0
    %2545 = vmatmul.mubr.f32.gmra.mrb[0].mxu0 %v2337
    %v2546 = vpop.f32.mrb[0].mxu0
    %v2547 = vadd.f32 %v2262, %v2546
    %v2548 = vpop.f32.mrb[0].mxu0
    %2549 = vmatprep.mubr.f32.mxu0 0.0
    %2550 = vmatmul.mubr.f32.gmra.mrb[0].mxu0 %v2340
    %v2551 = vpop.f32.mrb[0].mxu0
    %v2552 = vadd.f32 %v2262, %v2551
    %v2553 = vpop.f32.mrb[0].mxu0
    %2554 = vmatprep.mubr.f32.mxu0 0.0
    %2555 = vmatmul.mubr.f32.gmra.mrb[0].mxu0 %v2343
    %v2556 = vpop.f32.mrb[0].mxu0
    %v2557 = vadd.f32 %v2262, %v2556
    %v2558 = vpop.f32.mrb[0].mxu0
    %2559 = vmatprep.mubr.f32.mxu0 0.0
    %2560 = vmatmul.mubr.f32.gmra.mrb[0].mxu0 %v2346
    %v2561 = vpop.f32.mrb[0].mxu0
    %v2562 = vadd.f32 %v2262, %v2561
    %v2563 = vpop.f32.mrb[0].mxu0
    %2564 = vmatprep.mubr.f32.mxu0 0.0
    %2565 = vmatmul.mubr.f32.gmra.mrb[0].mxu0 %v2349
    %v2566 = vpop.f32.mrb[0].mxu0
    %v2567 = vadd.f32 %v2262, %v2566
    %v2568 = vpop.f32.mrb[0].mxu0
    %2569 = vmatprep.mubr.f32.mxu0 0.0
    %2570 = vmatmul.mubr.f32.gmra.mrb[0].mxu0 %v2352
    %v2571 = vpop.f32.mrb[0].mxu0
    %v2572 = vadd.f32 %v2262, %v2571
    %v2573 = vpop.f32.mrb[0].mxu0
    %2574 = vmatprep.mubr.f32.mxu0 0.0
    %2575 = vmatmul.mubr.f32.gmra.mrb[0].mxu0 %v2355
    %v2576 = vpop.f32.mrb[0].mxu0
    %v2577 = vadd.f32 %v2262, %v2576
    %v2578 = vpop.f32.mrb[0].mxu0
    %2579 = vmatprep.mubr.f32.mxu0 0.0
    %2580 = vmatmul.mubr.f32.gmra.mrb[0].mxu0 %v2358
    %v2581 = vpop.f32.mrb[0].mxu0
    %v2582 = vadd.f32 %v2262, %v2581
    %v2583 = vpop.f32.mrb[0].mxu0
    %2584 = vdwg.mxu0
    %v2585 = vmax.f32 %v2427, 0.0
    %v2586 = vmax.f32 %v2432, 0.0
    %v2587 = vmax.f32 %v2437, 0.0
    %v2588 = vmax.f32 %v2442, 0.0
    %v2589 = vmax.f32 %v2447, 0.0
    %v2590 = vmax.f32 %v2452, 0.0
    %v2591 = vmax.f32 %v2457, 0.0
    %v2592 = vmax.f32 %v2462, 0.0
    %v2593 = vmax.f32 %v2467, 0.0
    %v2594 = vmax.f32 %v2472, 0.0
    %v2595 = vmax.f32 %v2477, 0.0
    %v2596 = vmax.f32 %v2482, 0.0
    %v2597 = vmax.f32 %v2487, 0.0
    %v2598 = vmax.f32 %v2492, 0.0
    %v2599 = vmax.f32 %v2497, 0.0
    %v2600 = vmax.f32 %v2502, 0.0
    %v2601 = vmax.f32 %v2507, 0.0
    %v2602 = vmax.f32 %v2512, 0.0
    %v2603 = vmax.f32 %v2517, 0.0
    %v2604 = vmax.f32 %v2522, 0.0
    %v2605 = vmax.f32 %v2527, 0.0
    %v2606 = vmax.f32 %v2532, 0.0
    %v2607 = vmax.f32 %v2537, 0.0
    %v2608 = vmax.f32 %v2542, 0.0
    %v2609 = vmax.f32 %v2547, 0.0
    %v2610 = vmax.f32 %v2552, 0.0
    %v2611 = vmax.f32 %v2557, 0.0
    %v2612 = vmax.f32 %v2562, 0.0
    %v2613 = vmax.f32 %v2567, 0.0
    %v2614 = vmax.f32 %v2572, 0.0
    %v2615 = vmax.f32 %v2577, 0.0
    %v2616 = vmax.f32 %v2582, 0.0
    %v2617 = vld [vmem:[%s16] sm:$0xff]
    %v2618 = vld [vmem:[%s16 + $0x8] sm:$0xff]
    %v2619 = vld [vmem:[%s16 + $0x10] sm:$0xff]
    %v2620 = vld [vmem:[%s16 + $0x18] sm:$0xff]
    %v2621 = vld [vmem:[%s16 + $0x20] sm:$0xff]
    %v2622 = vld [vmem:[%s16 + $0x28] sm:$0xff]
    %v2623 = vld [vmem:[%s16 + $0x30] sm:$0xff]
    %v2624 = vld [vmem:[%s16 + $0x38] sm:$0xff]
    %v2625 = vld [vmem:[%s17] sm:$0x1]
    %v2627 = vlaneseq
    %v2628 = vshrl.u32 %v2627, 7
    %v2629 = vsub.s32 0, %v2628
    %v2630 = vrot.slane %v2625, %v2629
    %v2633 = vsel %vm1837, %v2585, 0
    %v2636 = vsel %vm1837, %v2586, 0
    %v2639 = vsel %vm1837, %v2587, 0
    %v2642 = vsel %vm1837, %v2588, 0
    %v2645 = vsel %vm1837, %v2589, 0
    %v2648 = vsel %vm1837, %v2590, 0
    %v2651 = vsel %vm1837, %v2591, 0
    %v2654 = vsel %vm1837, %v2592, 0
    %v2657 = vsel %vm1837, %v2593, 0
    %v2660 = vsel %vm1837, %v2594, 0
    %v2663 = vsel %vm1837, %v2595, 0
    %v2666 = vsel %vm1837, %v2596, 0
    %v2669 = vsel %vm1837, %v2597, 0
    %v2672 = vsel %vm1837, %v2598, 0
    %v2675 = vsel %vm1837, %v2599, 0
    %v2678 = vsel %vm1837, %v2600, 0
    %v2681 = vsel %vm1837, %v2601, 0
    %v2684 = vsel %vm1837, %v2602, 0
    %v2687 = vsel %vm1837, %v2603, 0
    %v2690 = vsel %vm1837, %v2604, 0
    %v2693 = vsel %vm1837, %v2605, 0
    %v2696 = vsel %vm1837, %v2606, 0
    %v2699 = vsel %vm1837, %v2607, 0
    %v2702 = vsel %vm1837, %v2608, 0
    %v2705 = vsel %vm1837, %v2609, 0
    %v2708 = vsel %vm1837, %v2610, 0
    %v2711 = vsel %vm1837, %v2611, 0
    %v2714 = vsel %vm1837, %v2612, 0
    %v2717 = vsel %vm1837, %v2613, 0
    %v2720 = vsel %vm1837, %v2614, 0
    %v2723 = vsel %vm1837, %v2615, 0
    %v2726 = vsel %vm1837, %v2616, 0
    %2728 = vmatprep.subr.mxu0 0.0
    %2729 = vmatpush1.msra.mxu0 %v2617
    %2730 = vmatprep.subr.mxu0 0.0
    %2731 = vmatpush1.msra.mxu0 %v2618
    %2732 = vmatprep.subr.mxu0 0.0
    %2733 = vmatpush1.msra.mxu0 %v2619
    %2734 = vmatprep.subr.mxu0 0.0
    %2735 = vmatpush1.msra.mxu0 %v2620
    %2736 = vmatprep.subr.mxu0 0.0
    %2737 = vmatpush1.msra.mxu0 %v2621
    %2738 = vmatprep.subr.mxu0 0.0
    %2739 = vmatpush1.msra.mxu0 %v2622
    %2740 = vmatprep.subr.mxu0 0.0
    %2741 = vmatpush1.msra.mxu0 %v2623
    %2742 = vmatprep.subr.mxu0 0.0
    %2743 = vmatpush1.msra.mxu0 %v2624
    %2744 = vmatprep.subr.mxu0 0.0
    %2745 = vmatpush1.msra.mxu0 0.0
    %2746 = vmatprep.subr.mxu0 0.0
    %2747 = vmatpush1.msra.mxu0 0.0
    %2748 = vmatprep.subr.mxu0 0.0
    %2749 = vmatpush1.msra.mxu0 0.0
    %2750 = vmatprep.subr.mxu0 0.0
    %2751 = vmatpush1.msra.mxu0 0.0
    %2752 = vmatprep.subr.mxu0 0.0
    %2753 = vmatpush1.msra.mxu0 0.0
    %2754 = vmatprep.subr.mxu0 0.0
    %2755 = vmatpush1.msra.mxu0 0.0
    %2756 = vmatprep.subr.mxu0 0.0
    %2757 = vmatpush1.msra.mxu0 0.0
    %2758 = vmatprep.subr.mxu0 0.0
    %2759 = vmatpush1.msra.mxu0 0.0
    %2760 = vmatprep.subr.mxu0 0.0
    %2761 = vmatpush1.msra.mxu0 0.0
    %2762 = vmatprep.subr.mxu0 0.0
    %2763 = vmatpush1.msra.mxu0 0.0
    %2764 = vmatprep.subr.mxu0 0.0
    %2765 = vmatpush1.msra.mxu0 0.0
    %2766 = vmatprep.subr.mxu0 0.0
    %2767 = vmatpush1.msra.mxu0 0.0
    %2768 = vmatprep.subr.mxu0 0.0
    %2769 = vmatpush1.msra.mxu0 0.0
    %2770 = vmatprep.subr.mxu0 0.0
    %2771 = vmatpush1.msra.mxu0 0.0
    %2772 = vmatprep.subr.mxu0 0.0
    %2773 = vmatpush1.msra.mxu0 0.0
    %2774 = vmatprep.subr.mxu0 0.0
    %2775 = vmatpush1.msra.mxu0 0.0
    %2776 = vmatprep.subr.mxu0 0.0
    %2777 = vmatpush1.msra.mxu0 0.0
    %2778 = vmatprep.subr.mxu0 0.0
    %2779 = vmatpush1.msra.mxu0 0.0
    %2780 = vmatprep.subr.mxu0 0.0
    %2781 = vmatpush1.msra.mxu0 0.0
    %2782 = vmatprep.subr.mxu0 0.0
    %2783 = vmatpush1.msra.mxu0 0.0
    %2784 = vmatprep.subr.mxu0 0.0
    %2785 = vmatpush1.msra.mxu0 0.0
    %2786 = vmatprep.subr.mxu0 0.0
    %2787 = vmatpush1.msra.mxu0 0.0
    %2788 = vmatprep.subr.mxu0 0.0
    %2789 = vmatpush1.msra.mxu0 0.0
    %2790 = vmatprep.subr.mxu0 0.0
    %2791 = vmatpush1.msra.mxu0 0.0
    %2792 = vmatprep.mubr.f32.mxu0 0.0
    %2793 = vmatmul.mubr.f32.gmra.mrb[0].mxu0 %v2633
    %v2794 = vpop.f32.mrb[0].mxu0
    %v2795 = vadd.f32 %v2630, %v2794
    %v2796 = vpop.f32.mrb[0].mxu0
    %2797 = vmatprep.mubr.f32.mxu0 0.0
    %2798 = vmatmul.mubr.f32.gmra.mrb[0].mxu0 %v2636
    %v2799 = vpop.f32.mrb[0].mxu0
    %v2800 = vadd.f32 %v2630, %v2799
    %v2801 = vpop.f32.mrb[0].mxu0
    %2802 = vmatprep.mubr.f32.mxu0 0.0
    %2803 = vmatmul.mubr.f32.gmra.mrb[0].mxu0 %v2639
    %v2804 = vpop.f32.mrb[0].mxu0
    %v2805 = vadd.f32 %v2630, %v2804
    %v2806 = vpop.f32.mrb[0].mxu0
    %2807 = vmatprep.mubr.f32.mxu0 0.0
    %2808 = vmatmul.mubr.f32.gmra.mrb[0].mxu0 %v2642
    %v2809 = vpop.f32.mrb[0].mxu0
    %v2810 = vadd.f32 %v2630, %v2809
    %v2811 = vpop.f32.mrb[0].mxu0
    %2812 = vmatprep.mubr.f32.mxu0 0.0
    %2813 = vmatmul.mubr.f32.gmra.mrb[0].mxu0 %v2645
    %v2814 = vpop.f32.mrb[0].mxu0
    %v2815 = vadd.f32 %v2630, %v2814
    %v2816 = vpop.f32.mrb[0].mxu0
    %2817 = vmatprep.mubr.f32.mxu0 0.0
    %2818 = vmatmul.mubr.f32.gmra.mrb[0].mxu0 %v2648
    %v2819 = vpop.f32.mrb[0].mxu0
    %v2820 = vadd.f32 %v2630, %v2819
    %v2821 = vpop.f32.mrb[0].mxu0
    %2822 = vmatprep.mubr.f32.mxu0 0.0
    %2823 = vmatmul.mubr.f32.gmra.mrb[0].mxu0 %v2651
    %v2824 = vpop.f32.mrb[0].mxu0
    %v2825 = vadd.f32 %v2630, %v2824
    %v2826 = vpop.f32.mrb[0].mxu0
    %2827 = vmatprep.mubr.f32.mxu0 0.0
    %2828 = vmatmul.mubr.f32.gmra.mrb[0].mxu0 %v2654
    %v2829 = vpop.f32.mrb[0].mxu0
    %v2830 = vadd.f32 %v2630, %v2829
    %v2831 = vpop.f32.mrb[0].mxu0
    %2832 = vmatprep.mubr.f32.mxu0 0.0
    %2833 = vmatmul.mubr.f32.gmra.mrb[0].mxu0 %v2657
    %v2834 = vpop.f32.mrb[0].mxu0
    %v2835 = vadd.f32 %v2630, %v2834
    %v2836 = vpop.f32.mrb[0].mxu0
    %2837 = vmatprep.mubr.f32.mxu0 0.0
    %2838 = vmatmul.mubr.f32.gmra.mrb[0].mxu0 %v2660
    %v2839 = vpop.f32.mrb[0].mxu0
    %v2840 = vadd.f32 %v2630, %v2839
    %v2841 = vpop.f32.mrb[0].mxu0
    %2842 = vmatprep.mubr.f32.mxu0 0.0
    %2843 = vmatmul.mubr.f32.gmra.mrb[0].mxu0 %v2663
    %v2844 = vpop.f32.mrb[0].mxu0
    %v2845 = vadd.f32 %v2630, %v2844
    %v2846 = vpop.f32.mrb[0].mxu0
    %2847 = vmatprep.mubr.f32.mxu0 0.0
    %2848 = vmatmul.mubr.f32.gmra.mrb[0].mxu0 %v2666
    %v2849 = vpop.f32.mrb[0].mxu0
    %v2850 = vadd.f32 %v2630, %v2849
    %v2851 = vpop.f32.mrb[0].mxu0
    %2852 = vmatprep.mubr.f32.mxu0 0.0
    %2853 = vmatmul.mubr.f32.gmra.mrb[0].mxu0 %v2669
    %v2854 = vpop.f32.mrb[0].mxu0
    %v2855 = vadd.f32 %v2630, %v2854
    %v2856 = vpop.f32.mrb[0].mxu0
    %2857 = vmatprep.mubr.f32.mxu0 0.0
    %2858 = vmatmul.mubr.f32.gmra.mrb[0].mxu0 %v2672
    %v2859 = vpop.f32.mrb[0].mxu0
    %v2860 = vadd.f32 %v2630, %v2859
    %v2861 = vpop.f32.mrb[0].mxu0
    %2862 = vmatprep.mubr.f32.mxu0 0.0
    %2863 = vmatmul.mubr.f32.gmra.mrb[0].mxu0 %v2675
    %v2864 = vpop.f32.mrb[0].mxu0
    %v2865 = vadd.f32 %v2630, %v2864
    %v2866 = vpop.f32.mrb[0].mxu0
    %2867 = vmatprep.mubr.f32.mxu0 0.0
    %2868 = vmatmul.mubr.f32.gmra.mrb[0].mxu0 %v2678
    %v2869 = vpop.f32.mrb[0].mxu0
    %v2870 = vadd.f32 %v2630, %v2869
    %v2871 = vpop.f32.mrb[0].mxu0
    %2872 = vmatprep.mubr.f32.mxu0 0.0
    %2873 = vmatmul.mubr.f32.gmra.mrb[0].mxu0 %v2681
    %v2874 = vpop.f32.mrb[0].mxu0
    %v2875 = vadd.f32 %v2630, %v2874
    %v2876 = vpop.f32.mrb[0].mxu0
    %2877 = vmatprep.mubr.f32.mxu0 0.0
    %2878 = vmatmul.mubr.f32.gmra.mrb[0].mxu0 %v2684
    %v2879 = vpop.f32.mrb[0].mxu0
    %v2880 = vadd.f32 %v2630, %v2879
    %v2881 = vpop.f32.mrb[0].mxu0
    %2882 = vmatprep.mubr.f32.mxu0 0.0
    %2883 = vmatmul.mubr.f32.gmra.mrb[0].mxu0 %v2687
    %v2884 = vpop.f32.mrb[0].mxu0
    %v2885 = vadd.f32 %v2630, %v2884
    %v2886 = vpop.f32.mrb[0].mxu0
    %2887 = vmatprep.mubr.f32.mxu0 0.0
    %2888 = vmatmul.mubr.f32.gmra.mrb[0].mxu0 %v2690
    %v2889 = vpop.f32.mrb[0].mxu0
    %v2890 = vadd.f32 %v2630, %v2889
    %v2891 = vpop.f32.mrb[0].mxu0
    %2892 = vmatprep.mubr.f32.mxu0 0.0
    %2893 = vmatmul.mubr.f32.gmra.mrb[0].mxu0 %v2693
    %v2894 = vpop.f32.mrb[0].mxu0
    %v2895 = vadd.f32 %v2630, %v2894
    %v2896 = vpop.f32.mrb[0].mxu0
    %2897 = vmatprep.mubr.f32.mxu0 0.0
    %2898 = vmatmul.mubr.f32.gmra.mrb[0].mxu0 %v2696
    %v2899 = vpop.f32.mrb[0].mxu0
    %v2900 = vadd.f32 %v2630, %v2899
    %v2901 = vpop.f32.mrb[0].mxu0
    %2902 = vmatprep.mubr.f32.mxu0 0.0
    %2903 = vmatmul.mubr.f32.gmra.mrb[0].mxu0 %v2699
    %v2904 = vpop.f32.mrb[0].mxu0
    %v2905 = vadd.f32 %v2630, %v2904
    %v2906 = vpop.f32.mrb[0].mxu0
    %2907 = vmatprep.mubr.f32.mxu0 0.0
    %2908 = vmatmul.mubr.f32.gmra.mrb[0].mxu0 %v2702
    %v2909 = vpop.f32.mrb[0].mxu0
    %v2910 = vadd.f32 %v2630, %v2909
    %v2911 = vpop.f32.mrb[0].mxu0
    %2912 = vmatprep.mubr.f32.mxu0 0.0
    %2913 = vmatmul.mubr.f32.gmra.mrb[0].mxu0 %v2705
    %v2914 = vpop.f32.mrb[0].mxu0
    %v2915 = vadd.f32 %v2630, %v2914
    %v2916 = vpop.f32.mrb[0].mxu0
    %2917 = vmatprep.mubr.f32.mxu0 0.0
    %2918 = vmatmul.mubr.f32.gmra.mrb[0].mxu0 %v2708
    %v2919 = vpop.f32.mrb[0].mxu0
    %v2920 = vadd.f32 %v2630, %v2919
    %v2921 = vpop.f32.mrb[0].mxu0
    %2922 = vmatprep.mubr.f32.mxu0 0.0
    %2923 = vmatmul.mubr.f32.gmra.mrb[0].mxu0 %v2711
    %v2924 = vpop.f32.mrb[0].mxu0
    %v2925 = vadd.f32 %v2630, %v2924
    %v2926 = vpop.f32.mrb[0].mxu0
    %2927 = vmatprep.mubr.f32.mxu0 0.0
    %2928 = vmatmul.mubr.f32.gmra.mrb[0].mxu0 %v2714
    %v2929 = vpop.f32.mrb[0].mxu0
    %v2930 = vadd.f32 %v2630, %v2929
    %v2931 = vpop.f32.mrb[0].mxu0
    %2932 = vmatprep.mubr.f32.mxu0 0.0
    %2933 = vmatmul.mubr.f32.gmra.mrb[0].mxu0 %v2717
    %v2934 = vpop.f32.mrb[0].mxu0
    %v2935 = vadd.f32 %v2630, %v2934
    %v2936 = vpop.f32.mrb[0].mxu0
    %2937 = vmatprep.mubr.f32.mxu0 0.0
    %2938 = vmatmul.mubr.f32.gmra.mrb[0].mxu0 %v2720
    %v2939 = vpop.f32.mrb[0].mxu0
    %v2940 = vadd.f32 %v2630, %v2939
    %v2941 = vpop.f32.mrb[0].mxu0
    %2942 = vmatprep.mubr.f32.mxu0 0.0
    %2943 = vmatmul.mubr.f32.gmra.mrb[0].mxu0 %v2723
    %v2944 = vpop.f32.mrb[0].mxu0
    %v2945 = vadd.f32 %v2630, %v2944
    %v2946 = vpop.f32.mrb[0].mxu0
    %2947 = vmatprep.mubr.f32.mxu0 0.0
    %2948 = vmatmul.mubr.f32.gmra.mrb[0].mxu0 %v2726
    %v2949 = vpop.f32.mrb[0].mxu0
    %v2950 = vadd.f32 %v2630, %v2949
    %v2951 = vpop.f32.mrb[0].mxu0
    %2952 = vdwg.mxu0
    %v2953 = vmax.f32 %v2795, 0.0
    %v2954 = vmax.f32 %v2800, 0.0
    %v2955 = vmax.f32 %v2805, 0.0
    %v2956 = vmax.f32 %v2810, 0.0
    %v2957 = vmax.f32 %v2815, 0.0
    %v2958 = vmax.f32 %v2820, 0.0
    %v2959 = vmax.f32 %v2825, 0.0
    %v2960 = vmax.f32 %v2830, 0.0
    %v2961 = vmax.f32 %v2835, 0.0
    %v2962 = vmax.f32 %v2840, 0.0
    %v2963 = vmax.f32 %v2845, 0.0
    %v2964 = vmax.f32 %v2850, 0.0
    %v2965 = vmax.f32 %v2855, 0.0
    %v2966 = vmax.f32 %v2860, 0.0
    %v2967 = vmax.f32 %v2865, 0.0
    %v2968 = vmax.f32 %v2870, 0.0
    %v2969 = vmax.f32 %v2875, 0.0
    %v2970 = vmax.f32 %v2880, 0.0
    %v2971 = vmax.f32 %v2885, 0.0
    %v2972 = vmax.f32 %v2890, 0.0
    %v2973 = vmax.f32 %v2895, 0.0
    %v2974 = vmax.f32 %v2900, 0.0
    %v2975 = vmax.f32 %v2905, 0.0
    %v2976 = vmax.f32 %v2910, 0.0
    %v2977 = vmax.f32 %v2915, 0.0
    %v2978 = vmax.f32 %v2920, 0.0
    %v2979 = vmax.f32 %v2925, 0.0
    %v2980 = vmax.f32 %v2930, 0.0
    %v2981 = vmax.f32 %v2935, 0.0
    %v2982 = vmax.f32 %v2940, 0.0
    %v2983 = vmax.f32 %v2945, 0.0
    %v2984 = vmax.f32 %v2950, 0.0
    %v2985 = vld [vmem:[%s2] sm:$0xff]
    %v2986 = vld [vmem:[%s2 + $0x8] sm:$0xff]
    %v2987 = vld [vmem:[%s2 + $0x10] sm:$0xff]
    %v2988 = vld [vmem:[%s2 + $0x18] sm:$0xff]
    %v2989 = vld [vmem:[%s2 + $0x20] sm:$0xff]
    %v2990 = vld [vmem:[%s2 + $0x28] sm:$0xff]
    %v2991 = vld [vmem:[%s2 + $0x30] sm:$0xff]
    %v2992 = vld [vmem:[%s2 + $0x38] sm:$0xff]
    %v2993 = vld [vmem:[%s2 + $0x40] sm:$0xff]
    %v2994 = vld [vmem:[%s2 + $0x48] sm:$0xff]
    %v2995 = vld [vmem:[%s2 + $0x50] sm:$0xff]
    %v2996 = vld [vmem:[%s2 + $0x58] sm:$0xff]
    %v2997 = vld [vmem:[%s2 + $0x60] sm:$0xff]
    %v2998 = vld [vmem:[%s2 + $0x68] sm:$0xff]
    %v2999 = vld [vmem:[%s2 + $0x70] sm:$0xff]
    %v3000 = vld [vmem:[%s2 + $0x78] sm:$0xff]
    %v3001 = vld [vmem:[%s2 + $0x80] sm:$0xff]
    %v3002 = vld [vmem:[%s2 + $0x88] sm:$0xff]
    %v3003 = vld [vmem:[%s2 + $0x90] sm:$0xff]
    %v3004 = vld [vmem:[%s2 + $0x98] sm:$0xff]
    %v3005 = vld [vmem:[%s2 + $0xa0] sm:$0xff]
    %v3006 = vld [vmem:[%s2 + $0xa8] sm:$0xff]
    %v3007 = vld [vmem:[%s2 + $0xb0] sm:$0xff]
    %v3008 = vld [vmem:[%s2 + $0xb8] sm:$0xff]
    %v3009 = vld [vmem:[%s2 + $0xc0] sm:$0xff]
    %v3010 = vld [vmem:[%s2 + $0xc8] sm:$0xff]
    %v3011 = vld [vmem:[%s2 + $0xd0] sm:$0xff]
    %v3012 = vld [vmem:[%s2 + $0xd8] sm:$0xff]
    %v3013 = vld [vmem:[%s2 + $0xe0] sm:$0xff]
    %v3014 = vld [vmem:[%s2 + $0xe8] sm:$0xff]
    %v3015 = vld [vmem:[%s2 + $0xf0] sm:$0xff]
    %v3016 = vld [vmem:[%s2 + $0xf8] sm:$0xff]
    %vm3017 = vcmp.gt.f32.partialorder %v2985, 0.5
    %vm3018 = vcmp.gt.f32.partialorder %v2986, 0.5
    %vm3019 = vcmp.gt.f32.partialorder %v2987, 0.5
    %vm3020 = vcmp.gt.f32.partialorder %v2988, 0.5
    %vm3021 = vcmp.gt.f32.partialorder %v2989, 0.5
    %vm3022 = vcmp.gt.f32.partialorder %v2990, 0.5
    %vm3023 = vcmp.gt.f32.partialorder %v2991, 0.5
    %vm3024 = vcmp.gt.f32.partialorder %v2992, 0.5
    %vm3025 = vcmp.gt.f32.partialorder %v2993, 0.5
    %vm3026 = vcmp.gt.f32.partialorder %v2994, 0.5
    %vm3027 = vcmp.gt.f32.partialorder %v2995, 0.5
    %vm3028 = vcmp.gt.f32.partialorder %v2996, 0.5
    %vm3029 = vcmp.gt.f32.partialorder %v2997, 0.5
    %vm3030 = vcmp.gt.f32.partialorder %v2998, 0.5
    %vm3031 = vcmp.gt.f32.partialorder %v2999, 0.5
    %vm3032 = vcmp.gt.f32.partialorder %v3000, 0.5
    %vm3033 = vcmp.gt.f32.partialorder %v3001, 0.5
    %vm3034 = vcmp.gt.f32.partialorder %v3002, 0.5
    %vm3035 = vcmp.gt.f32.partialorder %v3003, 0.5
    %vm3036 = vcmp.gt.f32.partialorder %v3004, 0.5
    %vm3037 = vcmp.gt.f32.partialorder %v3005, 0.5
    %vm3038 = vcmp.gt.f32.partialorder %v3006, 0.5
    %vm3039 = vcmp.gt.f32.partialorder %v3007, 0.5
    %vm3040 = vcmp.gt.f32.partialorder %v3008, 0.5
    %vm3041 = vcmp.gt.f32.partialorder %v3009, 0.5
    %vm3042 = vcmp.gt.f32.partialorder %v3010, 0.5
    %vm3043 = vcmp.gt.f32.partialorder %v3011, 0.5
    %vm3044 = vcmp.gt.f32.partialorder %v3012, 0.5
    %vm3045 = vcmp.gt.f32.partialorder %v3013, 0.5
    %vm3046 = vcmp.gt.f32.partialorder %v3014, 0.5
    %vm3047 = vcmp.gt.f32.partialorder %v3015, 0.5
    %vm3048 = vcmp.gt.f32.partialorder %v3016, 0.5
    %v3049 = vsel %vm3017, 0.0, -1e+30
    %v3050 = vsel %vm3018, 0.0, -1e+30
    %v3051 = vsel %vm3019, 0.0, -1e+30
    %v3052 = vsel %vm3020, 0.0, -1e+30
    %v3053 = vsel %vm3021, 0.0, -1e+30
    %v3054 = vsel %vm3022, 0.0, -1e+30
    %v3055 = vsel %vm3023, 0.0, -1e+30
    %v3056 = vsel %vm3024, 0.0, -1e+30
    %v3057 = vsel %vm3025, 0.0, -1e+30
    %v3058 = vsel %vm3026, 0.0, -1e+30
    %v3059 = vsel %vm3027, 0.0, -1e+30
    %v3060 = vsel %vm3028, 0.0, -1e+30
    %v3061 = vsel %vm3029, 0.0, -1e+30
    %v3062 = vsel %vm3030, 0.0, -1e+30
    %v3063 = vsel %vm3031, 0.0, -1e+30
    %v3064 = vsel %vm3032, 0.0, -1e+30
    %v3065 = vsel %vm3033, 0.0, -1e+30
    %v3066 = vsel %vm3034, 0.0, -1e+30
    %v3067 = vsel %vm3035, 0.0, -1e+30
    %v3068 = vsel %vm3036, 0.0, -1e+30
    %v3069 = vsel %vm3037, 0.0, -1e+30
    %v3070 = vsel %vm3038, 0.0, -1e+30
    %v3071 = vsel %vm3039, 0.0, -1e+30
    %v3072 = vsel %vm3040, 0.0, -1e+30
    %v3073 = vsel %vm3041, 0.0, -1e+30
    %v3074 = vsel %vm3042, 0.0, -1e+30
    %v3075 = vsel %vm3043, 0.0, -1e+30
    %v3076 = vsel %vm3044, 0.0, -1e+30
    %v3077 = vsel %vm3045, 0.0, -1e+30
    %v3078 = vsel %vm3046, 0.0, -1e+30
    %v3079 = vsel %vm3047, 0.0, -1e+30
    %v3080 = vsel %vm3048, 0.0, -1e+30
    %3082 = vset.pattern.permute.xlu0 0
    %3083 = vperm.xlu0 %3082, %v3049
    %v3084 = vpop.permute.xlu0 %3083
    %3087 = vset.pattern.permute.xlu0 0
    %3088 = vperm.xlu0 %3087, %v3050
    %v3089 = vpop.permute.xlu0 %3088
    %3092 = vset.pattern.permute.xlu0 0
    %3093 = vperm.xlu0 %3092, %v3051
    %v3094 = vpop.permute.xlu0 %3093
    %3097 = vset.pattern.permute.xlu0 0
    %3098 = vperm.xlu0 %3097, %v3052
    %v3099 = vpop.permute.xlu0 %3098
    %3102 = vset.pattern.permute.xlu0 0
    %3103 = vperm.xlu0 %3102, %v3053
    %v3104 = vpop.permute.xlu0 %3103
    %3107 = vset.pattern.permute.xlu0 0
    %3108 = vperm.xlu0 %3107, %v3054
    %v3109 = vpop.permute.xlu0 %3108
    %3112 = vset.pattern.permute.xlu0 0
    %3113 = vperm.xlu0 %3112, %v3055
    %v3114 = vpop.permute.xlu0 %3113
    %3117 = vset.pattern.permute.xlu0 0
    %3118 = vperm.xlu0 %3117, %v3056
    %v3119 = vpop.permute.xlu0 %3118
    %3122 = vset.pattern.permute.xlu0 0
    %3123 = vperm.xlu0 %3122, %v3057
    %v3124 = vpop.permute.xlu0 %3123
    %3127 = vset.pattern.permute.xlu0 0
    %3128 = vperm.xlu0 %3127, %v3058
    %v3129 = vpop.permute.xlu0 %3128
    %3132 = vset.pattern.permute.xlu0 0
    %3133 = vperm.xlu0 %3132, %v3059
    %v3134 = vpop.permute.xlu0 %3133
    %3137 = vset.pattern.permute.xlu0 0
    %3138 = vperm.xlu0 %3137, %v3060
    %v3139 = vpop.permute.xlu0 %3138
    %3142 = vset.pattern.permute.xlu0 0
    %3143 = vperm.xlu0 %3142, %v3061
    %v3144 = vpop.permute.xlu0 %3143
    %3147 = vset.pattern.permute.xlu0 0
    %3148 = vperm.xlu0 %3147, %v3062
    %v3149 = vpop.permute.xlu0 %3148
    %3152 = vset.pattern.permute.xlu0 0
    %3153 = vperm.xlu0 %3152, %v3063
    %v3154 = vpop.permute.xlu0 %3153
    %3157 = vset.pattern.permute.xlu0 0
    %3158 = vperm.xlu0 %3157, %v3064
    %v3159 = vpop.permute.xlu0 %3158
    %3162 = vset.pattern.permute.xlu0 0
    %3163 = vperm.xlu0 %3162, %v3065
    %v3164 = vpop.permute.xlu0 %3163
    %3167 = vset.pattern.permute.xlu0 0
    %3168 = vperm.xlu0 %3167, %v3066
    %v3169 = vpop.permute.xlu0 %3168
    %3172 = vset.pattern.permute.xlu0 0
    %3173 = vperm.xlu0 %3172, %v3067
    %v3174 = vpop.permute.xlu0 %3173
    %3177 = vset.pattern.permute.xlu0 0
    %3178 = vperm.xlu0 %3177, %v3068
    %v3179 = vpop.permute.xlu0 %3178
    %3182 = vset.pattern.permute.xlu0 0
    %3183 = vperm.xlu0 %3182, %v3069
    %v3184 = vpop.permute.xlu0 %3183
    %3187 = vset.pattern.permute.xlu0 0
    %3188 = vperm.xlu0 %3187, %v3070
    %v3189 = vpop.permute.xlu0 %3188
    %3192 = vset.pattern.permute.xlu0 0
    %3193 = vperm.xlu0 %3192, %v3071
    %v3194 = vpop.permute.xlu0 %3193
    %3197 = vset.pattern.permute.xlu0 0
    %3198 = vperm.xlu0 %3197, %v3072
    %v3199 = vpop.permute.xlu0 %3198
    %3202 = vset.pattern.permute.xlu0 0
    %3203 = vperm.xlu0 %3202, %v3073
    %v3204 = vpop.permute.xlu0 %3203
    %3207 = vset.pattern.permute.xlu0 0
    %3208 = vperm.xlu0 %3207, %v3074
    %v3209 = vpop.permute.xlu0 %3208
    %3212 = vset.pattern.permute.xlu0 0
    %3213 = vperm.xlu0 %3212, %v3075
    %v3214 = vpop.permute.xlu0 %3213
    %3217 = vset.pattern.permute.xlu0 0
    %3218 = vperm.xlu0 %3217, %v3076
    %v3219 = vpop.permute.xlu0 %3218
    %3222 = vset.pattern.permute.xlu0 0
    %3223 = vperm.xlu0 %3222, %v3077
    %v3224 = vpop.permute.xlu0 %3223
    %3227 = vset.pattern.permute.xlu0 0
    %3228 = vperm.xlu0 %3227, %v3078
    %v3229 = vpop.permute.xlu0 %3228
    %3232 = vset.pattern.permute.xlu0 0
    %3233 = vperm.xlu0 %3232, %v3079
    %v3234 = vpop.permute.xlu0 %3233
    %3237 = vset.pattern.permute.xlu0 0
    %3238 = vperm.xlu0 %3237, %v3080
    %v3239 = vpop.permute.xlu0 %3238
    %v3241 = vadd.f32 %v2953, %v3084
    %v3242 = vadd.f32 %v2954, %v3089
    %v3243 = vadd.f32 %v2955, %v3094
    %v3244 = vadd.f32 %v2956, %v3099
    %v3245 = vadd.f32 %v2957, %v3104
    %v3246 = vadd.f32 %v2958, %v3109
    %v3247 = vadd.f32 %v2959, %v3114
    %v3248 = vadd.f32 %v2960, %v3119
    %v3249 = vadd.f32 %v2961, %v3124
    %v3250 = vadd.f32 %v2962, %v3129
    %v3251 = vadd.f32 %v2963, %v3134
    %v3252 = vadd.f32 %v2964, %v3139
    %v3253 = vadd.f32 %v2965, %v3144
    %v3254 = vadd.f32 %v2966, %v3149
    %v3255 = vadd.f32 %v2967, %v3154
    %v3256 = vadd.f32 %v2968, %v3159
    %v3257 = vadd.f32 %v2969, %v3164
    %v3258 = vadd.f32 %v2970, %v3169
    %v3259 = vadd.f32 %v2971, %v3174
    %v3260 = vadd.f32 %v2972, %v3179
    %v3261 = vadd.f32 %v2973, %v3184
    %v3262 = vadd.f32 %v2974, %v3189
    %v3263 = vadd.f32 %v2975, %v3194
    %v3264 = vadd.f32 %v2976, %v3199
    %v3265 = vadd.f32 %v2977, %v3204
    %v3266 = vadd.f32 %v2978, %v3209
    %v3267 = vadd.f32 %v2979, %v3214
    %v3268 = vadd.f32 %v2980, %v3219
    %v3269 = vadd.f32 %v2981, %v3224
    %v3270 = vadd.f32 %v2982, %v3229
    %v3271 = vadd.f32 %v2983, %v3234
    %v3272 = vadd.f32 %v2984, %v3239
    %3273 = vmatprep.subr.mxu0 0.0
    %3274 = vmatpush1.msra.mxu0 %v386
    %3275 = vmatprep.subr.mxu0 0.0
    %3276 = vmatpush1.msra.mxu0 %v391
    %3277 = vmatprep.subr.mxu0 0.0
    %3278 = vmatpush1.msra.mxu0 0.0
    %3279 = vmatprep.subr.mxu0 0.0
    %3280 = vmatpush1.msra.mxu0 0.0
    %3281 = vmatprep.subr.mxu0 0.0
    %3282 = vmatpush1.msra.mxu0 0.0
    %3283 = vmatprep.subr.mxu0 0.0
    %3284 = vmatpush1.msra.mxu0 0.0
    %3285 = vmatprep.subr.mxu0 0.0
    %3286 = vmatpush1.msra.mxu0 0.0
    %3287 = vmatprep.subr.mxu0 0.0
    %3288 = vmatpush1.msra.mxu0 0.0
    %3289 = vmatprep.subr.mxu0 0.0
    %3290 = vmatpush1.msra.mxu0 0.0
    %3291 = vmatprep.subr.mxu0 0.0
    %3292 = vmatpush1.msra.mxu0 0.0
    %3293 = vmatprep.subr.mxu0 0.0
    %3294 = vmatpush1.msra.mxu0 0.0
    %3295 = vmatprep.subr.mxu0 0.0
    %3296 = vmatpush1.msra.mxu0 0.0
    %3297 = vmatprep.subr.mxu0 0.0
    %3298 = vmatpush1.msra.mxu0 0.0
    %3299 = vmatprep.subr.mxu0 0.0
    %3300 = vmatpush1.msra.mxu0 0.0
    %3301 = vmatprep.subr.mxu0 0.0
    %3302 = vmatpush1.msra.mxu0 0.0
    %3303 = vmatprep.subr.mxu0 0.0
    %3304 = vmatpush1.msra.mxu0 0.0
    %3305 = vmatprep.subr.mxu0 0.0
    %3306 = vmatpush1.msra.mxu0 0.0
    %3307 = vmatprep.subr.mxu0 0.0
    %3308 = vmatpush1.msra.mxu0 0.0
    %3309 = vmatprep.subr.mxu0 0.0
    %3310 = vmatpush1.msra.mxu0 0.0
    %3311 = vmatprep.subr.mxu0 0.0
    %3312 = vmatpush1.msra.mxu0 0.0
    %3313 = vmatprep.subr.mxu0 0.0
    %3314 = vmatpush1.msra.mxu0 0.0
    %3315 = vmatprep.subr.mxu0 0.0
    %3316 = vmatpush1.msra.mxu0 0.0
    %3317 = vmatprep.subr.mxu0 0.0
    %3318 = vmatpush1.msra.mxu0 0.0
    %3319 = vmatprep.subr.mxu0 0.0
    %3320 = vmatpush1.msra.mxu0 0.0
    %3321 = vmatprep.subr.mxu0 0.0
    %3322 = vmatpush1.msra.mxu0 0.0
    %3323 = vmatprep.subr.mxu0 0.0
    %3324 = vmatpush1.msra.mxu0 0.0
    %3325 = vmatprep.subr.mxu0 0.0
    %3326 = vmatpush1.msra.mxu0 0.0
    %3327 = vmatprep.subr.mxu0 0.0
    %3328 = vmatpush1.msra.mxu0 0.0
    %3329 = vmatprep.subr.mxu0 0.0
    %3330 = vmatpush1.msra.mxu0 0.0
    %3331 = vmatprep.subr.mxu0 0.0
    %3332 = vmatpush1.msra.mxu0 0.0
    %3333 = vmatprep.subr.mxu0 0.0
    %3334 = vmatpush1.msra.mxu0 0.0
    %3335 = vmatprep.subr.mxu0 0.0
    %3336 = vmatpush1.msra.mxu0 0.0
    %3337 = vmatprep.mubr.f32.mxu0 0.0
    %3338 = vmatmul.mubr.f32.gmra.mrb[0].mxu0 %v781
    %v3339 = vpop.f32.mrb[0].mxu0
    %v3340 = vadd.f32 %v2159, %v3339
    %v3341 = vpop.f32.mrb[0].mxu0
    %3342 = vmatprep.mubr.f32.mxu0 0.0
    %3343 = vmatmul.mubr.f32.gmra.mrb[0].mxu0 %v784
    %v3344 = vpop.f32.mrb[0].mxu0
    %v3345 = vadd.f32 %v2160, %v3344
    %v3346 = vpop.f32.mrb[0].mxu0
    %3347 = vmatprep.mubr.f32.mxu0 0.0
    %3348 = vmatmul.mubr.f32.gmra.mrb[0].mxu0 %v787
    %v3349 = vpop.f32.mrb[0].mxu0
    %v3350 = vadd.f32 %v2161, %v3349
    %v3351 = vpop.f32.mrb[0].mxu0
    %3352 = vmatprep.mubr.f32.mxu0 0.0
    %3353 = vmatmul.mubr.f32.gmra.mrb[0].mxu0 %v790
    %v3354 = vpop.f32.mrb[0].mxu0
    %v3355 = vadd.f32 %v2162, %v3354
    %v3356 = vpop.f32.mrb[0].mxu0
    %3357 = vmatprep.mubr.f32.mxu0 0.0
    %3358 = vmatmul.mubr.f32.gmra.mrb[0].mxu0 %v793
    %v3359 = vpop.f32.mrb[0].mxu0
    %v3360 = vadd.f32 %v2163, %v3359
    %v3361 = vpop.f32.mrb[0].mxu0
    %3362 = vmatprep.mubr.f32.mxu0 0.0
    %3363 = vmatmul.mubr.f32.gmra.mrb[0].mxu0 %v796
    %v3364 = vpop.f32.mrb[0].mxu0
    %v3365 = vadd.f32 %v2164, %v3364
    %v3366 = vpop.f32.mrb[0].mxu0
    %3367 = vmatprep.mubr.f32.mxu0 0.0
    %3368 = vmatmul.mubr.f32.gmra.mrb[0].mxu0 %v799
    %v3369 = vpop.f32.mrb[0].mxu0
    %v3370 = vadd.f32 %v2165, %v3369
    %v3371 = vpop.f32.mrb[0].mxu0
    %3372 = vmatprep.mubr.f32.mxu0 0.0
    %3373 = vmatmul.mubr.f32.gmra.mrb[0].mxu0 %v802
    %v3374 = vpop.f32.mrb[0].mxu0
    %v3375 = vadd.f32 %v2166, %v3374
    %v3376 = vpop.f32.mrb[0].mxu0
    %3377 = vmatprep.mubr.f32.mxu0 0.0
    %3378 = vmatmul.mubr.f32.gmra.mrb[0].mxu0 %v805
    %v3379 = vpop.f32.mrb[0].mxu0
    %v3380 = vadd.f32 %v2167, %v3379
    %v3381 = vpop.f32.mrb[0].mxu0
    %3382 = vmatprep.mubr.f32.mxu0 0.0
    %3383 = vmatmul.mubr.f32.gmra.mrb[0].mxu0 %v808
    %v3384 = vpop.f32.mrb[0].mxu0
    %v3385 = vadd.f32 %v2168, %v3384
    %v3386 = vpop.f32.mrb[0].mxu0
    %3387 = vmatprep.mubr.f32.mxu0 0.0
    %3388 = vmatmul.mubr.f32.gmra.mrb[0].mxu0 %v811
    %v3389 = vpop.f32.mrb[0].mxu0
    %v3390 = vadd.f32 %v2169, %v3389
    %v3391 = vpop.f32.mrb[0].mxu0
    %3392 = vmatprep.mubr.f32.mxu0 0.0
    %3393 = vmatmul.mubr.f32.gmra.mrb[0].mxu0 %v814
    %v3394 = vpop.f32.mrb[0].mxu0
    %v3395 = vadd.f32 %v2170, %v3394
    %v3396 = vpop.f32.mrb[0].mxu0
    %3397 = vmatprep.mubr.f32.mxu0 0.0
    %3398 = vmatmul.mubr.f32.gmra.mrb[0].mxu0 %v817
    %v3399 = vpop.f32.mrb[0].mxu0
    %v3400 = vadd.f32 %v2171, %v3399
    %v3401 = vpop.f32.mrb[0].mxu0
    %3402 = vmatprep.mubr.f32.mxu0 0.0
    %3403 = vmatmul.mubr.f32.gmra.mrb[0].mxu0 %v820
    %v3404 = vpop.f32.mrb[0].mxu0
    %v3405 = vadd.f32 %v2172, %v3404
    %v3406 = vpop.f32.mrb[0].mxu0
    %3407 = vmatprep.mubr.f32.mxu0 0.0
    %3408 = vmatmul.mubr.f32.gmra.mrb[0].mxu0 %v823
    %v3409 = vpop.f32.mrb[0].mxu0
    %v3410 = vadd.f32 %v2173, %v3409
    %v3411 = vpop.f32.mrb[0].mxu0
    %3412 = vmatprep.mubr.f32.mxu0 0.0
    %3413 = vmatmul.mubr.f32.gmra.mrb[0].mxu0 %v826
    %v3414 = vpop.f32.mrb[0].mxu0
    %v3415 = vadd.f32 %v2174, %v3414
    %v3416 = vpop.f32.mrb[0].mxu0
    %3417 = vmatprep.mubr.f32.mxu0 0.0
    %3418 = vmatmul.mubr.f32.gmra.mrb[0].mxu0 %v829
    %v3419 = vpop.f32.mrb[0].mxu0
    %v3420 = vadd.f32 %v2175, %v3419
    %v3421 = vpop.f32.mrb[0].mxu0
    %3422 = vmatprep.mubr.f32.mxu0 0.0
    %3423 = vmatmul.mubr.f32.gmra.mrb[0].mxu0 %v832
    %v3424 = vpop.f32.mrb[0].mxu0
    %v3425 = vadd.f32 %v2176, %v3424
    %v3426 = vpop.f32.mrb[0].mxu0
    %3427 = vmatprep.mubr.f32.mxu0 0.0
    %3428 = vmatmul.mubr.f32.gmra.mrb[0].mxu0 %v835
    %v3429 = vpop.f32.mrb[0].mxu0
    %v3430 = vadd.f32 %v2177, %v3429
    %v3431 = vpop.f32.mrb[0].mxu0
    %3432 = vmatprep.mubr.f32.mxu0 0.0
    %3433 = vmatmul.mubr.f32.gmra.mrb[0].mxu0 %v838
    %v3434 = vpop.f32.mrb[0].mxu0
    %v3435 = vadd.f32 %v2178, %v3434
    %v3436 = vpop.f32.mrb[0].mxu0
    %3437 = vmatprep.mubr.f32.mxu0 0.0
    %3438 = vmatmul.mubr.f32.gmra.mrb[0].mxu0 %v841
    %v3439 = vpop.f32.mrb[0].mxu0
    %v3440 = vadd.f32 %v2179, %v3439
    %v3441 = vpop.f32.mrb[0].mxu0
    %3442 = vmatprep.mubr.f32.mxu0 0.0
    %3443 = vmatmul.mubr.f32.gmra.mrb[0].mxu0 %v844
    %v3444 = vpop.f32.mrb[0].mxu0
    %v3445 = vadd.f32 %v2180, %v3444
    %v3446 = vpop.f32.mrb[0].mxu0
    %3447 = vmatprep.mubr.f32.mxu0 0.0
    %3448 = vmatmul.mubr.f32.gmra.mrb[0].mxu0 %v847
    %v3449 = vpop.f32.mrb[0].mxu0
    %v3450 = vadd.f32 %v2181, %v3449
    %v3451 = vpop.f32.mrb[0].mxu0
    %3452 = vmatprep.mubr.f32.mxu0 0.0
    %3453 = vmatmul.mubr.f32.gmra.mrb[0].mxu0 %v850
    %v3454 = vpop.f32.mrb[0].mxu0
    %v3455 = vadd.f32 %v2182, %v3454
    %v3456 = vpop.f32.mrb[0].mxu0
    %3457 = vmatprep.mubr.f32.mxu0 0.0
    %3458 = vmatmul.mubr.f32.gmra.mrb[0].mxu0 %v853
    %v3459 = vpop.f32.mrb[0].mxu0
    %v3460 = vadd.f32 %v2183, %v3459
    %v3461 = vpop.f32.mrb[0].mxu0
    %3462 = vmatprep.mubr.f32.mxu0 0.0
    %3463 = vmatmul.mubr.f32.gmra.mrb[0].mxu0 %v856
    %v3464 = vpop.f32.mrb[0].mxu0
    %v3465 = vadd.f32 %v2184, %v3464
    %v3466 = vpop.f32.mrb[0].mxu0
    %3467 = vmatprep.mubr.f32.mxu0 0.0
    %3468 = vmatmul.mubr.f32.gmra.mrb[0].mxu0 %v859
    %v3469 = vpop.f32.mrb[0].mxu0
    %v3470 = vadd.f32 %v2185, %v3469
    %v3471 = vpop.f32.mrb[0].mxu0
    %3472 = vmatprep.mubr.f32.mxu0 0.0
    %3473 = vmatmul.mubr.f32.gmra.mrb[0].mxu0 %v862
    %v3474 = vpop.f32.mrb[0].mxu0
    %v3475 = vadd.f32 %v2186, %v3474
    %v3476 = vpop.f32.mrb[0].mxu0
    %3477 = vmatprep.mubr.f32.mxu0 0.0
    %3478 = vmatmul.mubr.f32.gmra.mrb[0].mxu0 %v865
    %v3479 = vpop.f32.mrb[0].mxu0
    %v3480 = vadd.f32 %v2187, %v3479
    %v3481 = vpop.f32.mrb[0].mxu0
    %3482 = vmatprep.mubr.f32.mxu0 0.0
    %3483 = vmatmul.mubr.f32.gmra.mrb[0].mxu0 %v868
    %v3484 = vpop.f32.mrb[0].mxu0
    %v3485 = vadd.f32 %v2188, %v3484
    %v3486 = vpop.f32.mrb[0].mxu0
    %3487 = vmatprep.mubr.f32.mxu0 0.0
    %3488 = vmatmul.mubr.f32.gmra.mrb[0].mxu0 %v871
    %v3489 = vpop.f32.mrb[0].mxu0
    %v3490 = vadd.f32 %v2189, %v3489
    %v3491 = vpop.f32.mrb[0].mxu0
    %3492 = vmatprep.mubr.f32.mxu0 0.0
    %3493 = vmatmul.mubr.f32.gmra.mrb[0].mxu0 %v874
    %v3494 = vpop.f32.mrb[0].mxu0
    %v3495 = vadd.f32 %v2190, %v3494
    %v3496 = vpop.f32.mrb[0].mxu0
    %3497 = vdwg.mxu0
    %v3498 = vmax.f32 %v3241, %v3243
    %v3499 = vmax.f32 %v3242, %v3244
    %v3500 = vmax.f32 %v3498, %v3245
    %v3501 = vmax.f32 %v3499, %v3246
    %v3502 = vmax.f32 %v3500, %v3247
    %v3503 = vmax.f32 %v3501, %v3248
    %v3504 = vmax.f32 %v3502, %v3249
    %v3505 = vmax.f32 %v3503, %v3250
    %v3506 = vmax.f32 %v3504, %v3251
    %v3507 = vmax.f32 %v3505, %v3252
    %v3508 = vmax.f32 %v3506, %v3253
    %v3509 = vmax.f32 %v3507, %v3254
    %v3510 = vmax.f32 %v3508, %v3255
    %v3511 = vmax.f32 %v3509, %v3256
    %v3512 = vmax.f32 %v3510, %v3257
    %v3513 = vmax.f32 %v3511, %v3258
    %v3514 = vmax.f32 %v3512, %v3259
    %v3515 = vmax.f32 %v3513, %v3260
    %v3516 = vmax.f32 %v3514, %v3261
    %v3517 = vmax.f32 %v3515, %v3262
    %v3518 = vmax.f32 %v3516, %v3263
    %v3519 = vmax.f32 %v3517, %v3264
    %v3520 = vmax.f32 %v3518, %v3265
    %v3521 = vmax.f32 %v3519, %v3266
    %v3522 = vmax.f32 %v3520, %v3267
    %v3523 = vmax.f32 %v3521, %v3268
    %v3524 = vmax.f32 %v3522, %v3269
    %v3525 = vmax.f32 %v3523, %v3270
    %v3526 = vmax.f32 %v3524, %v3271
    %v3527 = vmax.f32 %v3525, %v3272
    %v3528 = vsub.f32 %v3241, %v3526
    %v3529 = vsub.f32 %v3242, %v3527
    %v3530 = vmul.f32 %v3528, 1.442695
    %v3531 = vpow.pop %v3530
    %v3532 = vmul.f32 %v3529, 1.442695
    %v3533 = vpow.pop %v3532
    %3535 = vset.pattern.permute.xlu0 0
    %3536 = vperm.xlu0 %3535, %v2985
    %v3537 = vpop.permute.xlu0 %3536
    %3540 = vset.pattern.permute.xlu0 0
    %3541 = vperm.xlu0 %3540, %v2986
    %v3542 = vpop.permute.xlu0 %3541
    %v3544 = vmul.f32 %v3531, %v3537
    %v3545 = vmul.f32 %v3533, %v3542
    %v3546 = vadd.f32 %v3544, 0.0
    %v3547 = vadd.f32 %v3545, 0.0
    %v3548 = vmul.f32 %v3544, %v3340
    %v3549 = vmul.f32 %v3545, %v3345
    %v3550 = vadd.f32 %v3548, 0.0
    %v3551 = vadd.f32 %v3549, 0.0
    %v3552 = vsub.f32 %v3243, %v3526
    %v3553 = vsub.f32 %v3244, %v3527
    %v3554 = vmul.f32 %v3552, 1.442695
    %v3555 = vpow.pop %v3554
    %v3556 = vmul.f32 %v3553, 1.442695
    %v3557 = vpow.pop %v3556
    %3559 = vset.pattern.permute.xlu0 0
    %3560 = vperm.xlu0 %3559, %v2987
    %v3561 = vpop.permute.xlu0 %3560
    %3564 = vset.pattern.permute.xlu0 0
    %3565 = vperm.xlu0 %3564, %v2988
    %v3566 = vpop.permute.xlu0 %3565
    %v3568 = vmul.f32 %v3555, %v3561
    %v3569 = vmul.f32 %v3557, %v3566
    %v3570 = vadd.f32 %v3546, %v3568
    %v3571 = vadd.f32 %v3547, %v3569
    %v3572 = vmul.f32 %v3568, %v3350
    %v3573 = vmul.f32 %v3569, %v3355
    %v3574 = vadd.f32 %v3550, %v3572
    %v3575 = vadd.f32 %v3551, %v3573
    %v3576 = vsub.f32 %v3245, %v3526
    %v3577 = vsub.f32 %v3246, %v3527
    %v3578 = vmul.f32 %v3576, 1.442695
    %v3579 = vpow.pop %v3578
    %v3580 = vmul.f32 %v3577, 1.442695
    %v3581 = vpow.pop %v3580
    %3583 = vset.pattern.permute.xlu0 0
    %3584 = vperm.xlu0 %3583, %v2989
    %v3585 = vpop.permute.xlu0 %3584
    %3588 = vset.pattern.permute.xlu0 0
    %3589 = vperm.xlu0 %3588, %v2990
    %v3590 = vpop.permute.xlu0 %3589
    %v3592 = vmul.f32 %v3579, %v3585
    %v3593 = vmul.f32 %v3581, %v3590
    %v3594 = vadd.f32 %v3570, %v3592
    %v3595 = vadd.f32 %v3571, %v3593
    %v3596 = vmul.f32 %v3592, %v3360
    %v3597 = vmul.f32 %v3593, %v3365
    %v3598 = vadd.f32 %v3574, %v3596
    %v3599 = vadd.f32 %v3575, %v3597
    %v3600 = vsub.f32 %v3247, %v3526
    %v3601 = vsub.f32 %v3248, %v3527
    %v3602 = vmul.f32 %v3600, 1.442695
    %v3603 = vpow.pop %v3602
    %v3604 = vmul.f32 %v3601, 1.442695
    %v3605 = vpow.pop %v3604
    %3607 = vset.pattern.permute.xlu0 0
    %3608 = vperm.xlu0 %3607, %v2991
    %v3609 = vpop.permute.xlu0 %3608
    %3612 = vset.pattern.permute.xlu0 0
    %3613 = vperm.xlu0 %3612, %v2992
    %v3614 = vpop.permute.xlu0 %3613
    %v3616 = vmul.f32 %v3603, %v3609
    %v3617 = vmul.f32 %v3605, %v3614
    %v3618 = vadd.f32 %v3594, %v3616
    %v3619 = vadd.f32 %v3595, %v3617
    %v3620 = vmul.f32 %v3616, %v3370
    %v3621 = vmul.f32 %v3617, %v3375
    %v3622 = vadd.f32 %v3598, %v3620
    %v3623 = vadd.f32 %v3599, %v3621
    %v3624 = vsub.f32 %v3249, %v3526
    %v3625 = vsub.f32 %v3250, %v3527
    %v3626 = vmul.f32 %v3624, 1.442695
    %v3627 = vpow.pop %v3626
    %v3628 = vmul.f32 %v3625, 1.442695
    %v3629 = vpow.pop %v3628
    %3631 = vset.pattern.permute.xlu0 0
    %3632 = vperm.xlu0 %3631, %v2993
    %v3633 = vpop.permute.xlu0 %3632
    %3636 = vset.pattern.permute.xlu0 0
    %3637 = vperm.xlu0 %3636, %v2994
    %v3638 = vpop.permute.xlu0 %3637
    %v3640 = vmul.f32 %v3627, %v3633
    %v3641 = vmul.f32 %v3629, %v3638
    %v3642 = vadd.f32 %v3618, %v3640
    %v3643 = vadd.f32 %v3619, %v3641
    %v3644 = vmul.f32 %v3640, %v3380
    %v3645 = vmul.f32 %v3641, %v3385
    %v3646 = vadd.f32 %v3622, %v3644
    %v3647 = vadd.f32 %v3623, %v3645
    %v3648 = vsub.f32 %v3251, %v3526
    %v3649 = vsub.f32 %v3252, %v3527
    %v3650 = vmul.f32 %v3648, 1.442695
    %v3651 = vpow.pop %v3650
    %v3652 = vmul.f32 %v3649, 1.442695
    %v3653 = vpow.pop %v3652
    %3655 = vset.pattern.permute.xlu0 0
    %3656 = vperm.xlu0 %3655, %v2995
    %v3657 = vpop.permute.xlu0 %3656
    %3660 = vset.pattern.permute.xlu0 0
    %3661 = vperm.xlu0 %3660, %v2996
    %v3662 = vpop.permute.xlu0 %3661
    %v3664 = vmul.f32 %v3651, %v3657
    %v3665 = vmul.f32 %v3653, %v3662
    %v3666 = vadd.f32 %v3642, %v3664
    %v3667 = vadd.f32 %v3643, %v3665
    %v3668 = vmul.f32 %v3664, %v3390
    %v3669 = vmul.f32 %v3665, %v3395
    %v3670 = vadd.f32 %v3646, %v3668
    %v3671 = vadd.f32 %v3647, %v3669
    %v3672 = vsub.f32 %v3253, %v3526
    %v3673 = vsub.f32 %v3254, %v3527
    %v3674 = vmul.f32 %v3672, 1.442695
    %v3675 = vpow.pop %v3674
    %v3676 = vmul.f32 %v3673, 1.442695
    %v3677 = vpow.pop %v3676
    %3679 = vset.pattern.permute.xlu0 0
    %3680 = vperm.xlu0 %3679, %v2997
    %v3681 = vpop.permute.xlu0 %3680
    %3684 = vset.pattern.permute.xlu0 0
    %3685 = vperm.xlu0 %3684, %v2998
    %v3686 = vpop.permute.xlu0 %3685
    %v3688 = vmul.f32 %v3675, %v3681
    %v3689 = vmul.f32 %v3677, %v3686
    %v3690 = vadd.f32 %v3666, %v3688
    %v3691 = vadd.f32 %v3667, %v3689
    %v3692 = vmul.f32 %v3688, %v3400
    %v3693 = vmul.f32 %v3689, %v3405
    %v3694 = vadd.f32 %v3670, %v3692
    %v3695 = vadd.f32 %v3671, %v3693
    %v3696 = vsub.f32 %v3255, %v3526
    %v3697 = vsub.f32 %v3256, %v3527
    %v3698 = vmul.f32 %v3696, 1.442695
    %v3699 = vpow.pop %v3698
    %v3700 = vmul.f32 %v3697, 1.442695
    %v3701 = vpow.pop %v3700
    %3703 = vset.pattern.permute.xlu0 0
    %3704 = vperm.xlu0 %3703, %v2999
    %v3705 = vpop.permute.xlu0 %3704
    %3708 = vset.pattern.permute.xlu0 0
    %3709 = vperm.xlu0 %3708, %v3000
    %v3710 = vpop.permute.xlu0 %3709
    %v3712 = vmul.f32 %v3699, %v3705
    %v3713 = vmul.f32 %v3701, %v3710
    %v3714 = vadd.f32 %v3690, %v3712
    %v3715 = vadd.f32 %v3691, %v3713
    %v3716 = vmul.f32 %v3712, %v3410
    %v3717 = vmul.f32 %v3713, %v3415
    %v3718 = vadd.f32 %v3694, %v3716
    %v3719 = vadd.f32 %v3695, %v3717
    %v3720 = vsub.f32 %v3257, %v3526
    %v3721 = vsub.f32 %v3258, %v3527
    %v3722 = vmul.f32 %v3720, 1.442695
    %v3723 = vpow.pop %v3722
    %v3724 = vmul.f32 %v3721, 1.442695
    %v3725 = vpow.pop %v3724
    %3727 = vset.pattern.permute.xlu0 0
    %3728 = vperm.xlu0 %3727, %v3001
    %v3729 = vpop.permute.xlu0 %3728
    %3732 = vset.pattern.permute.xlu0 0
    %3733 = vperm.xlu0 %3732, %v3002
    %v3734 = vpop.permute.xlu0 %3733
    %v3736 = vmul.f32 %v3723, %v3729
    %v3737 = vmul.f32 %v3725, %v3734
    %v3738 = vadd.f32 %v3714, %v3736
    %v3739 = vadd.f32 %v3715, %v3737
    %v3740 = vmul.f32 %v3736, %v3420
    %v3741 = vmul.f32 %v3737, %v3425
    %v3742 = vadd.f32 %v3718, %v3740
    %v3743 = vadd.f32 %v3719, %v3741
    %v3744 = vsub.f32 %v3259, %v3526
    %v3745 = vsub.f32 %v3260, %v3527
    %v3746 = vmul.f32 %v3744, 1.442695
    %v3747 = vpow.pop %v3746
    %v3748 = vmul.f32 %v3745, 1.442695
    %v3749 = vpow.pop %v3748
    %3751 = vset.pattern.permute.xlu0 0
    %3752 = vperm.xlu0 %3751, %v3003
    %v3753 = vpop.permute.xlu0 %3752
    %3756 = vset.pattern.permute.xlu0 0
    %3757 = vperm.xlu0 %3756, %v3004
    %v3758 = vpop.permute.xlu0 %3757
    %v3760 = vmul.f32 %v3747, %v3753
    %v3761 = vmul.f32 %v3749, %v3758
    %v3762 = vadd.f32 %v3738, %v3760
    %v3763 = vadd.f32 %v3739, %v3761
    %v3764 = vmul.f32 %v3760, %v3430
    %v3765 = vmul.f32 %v3761, %v3435
    %v3766 = vadd.f32 %v3742, %v3764
    %v3767 = vadd.f32 %v3743, %v3765
    %v3768 = vsub.f32 %v3261, %v3526
    %v3769 = vsub.f32 %v3262, %v3527
    %v3770 = vmul.f32 %v3768, 1.442695
    %v3771 = vpow.pop %v3770
    %v3772 = vmul.f32 %v3769, 1.442695
    %v3773 = vpow.pop %v3772
    %3775 = vset.pattern.permute.xlu0 0
    %3776 = vperm.xlu0 %3775, %v3005
    %v3777 = vpop.permute.xlu0 %3776
    %3780 = vset.pattern.permute.xlu0 0
    %3781 = vperm.xlu0 %3780, %v3006
    %v3782 = vpop.permute.xlu0 %3781
    %v3784 = vmul.f32 %v3771, %v3777
    %v3785 = vmul.f32 %v3773, %v3782
    %v3786 = vadd.f32 %v3762, %v3784
    %v3787 = vadd.f32 %v3763, %v3785
    %v3788 = vmul.f32 %v3784, %v3440
    %v3789 = vmul.f32 %v3785, %v3445
    %v3790 = vadd.f32 %v3766, %v3788
    %v3791 = vadd.f32 %v3767, %v3789
    %v3792 = vsub.f32 %v3263, %v3526
    %v3793 = vsub.f32 %v3264, %v3527
    %v3794 = vmul.f32 %v3792, 1.442695
    %v3795 = vpow.pop %v3794
    %v3796 = vmul.f32 %v3793, 1.442695
    %v3797 = vpow.pop %v3796
    %3799 = vset.pattern.permute.xlu0 0
    %3800 = vperm.xlu0 %3799, %v3007
    %v3801 = vpop.permute.xlu0 %3800
    %3804 = vset.pattern.permute.xlu0 0
    %3805 = vperm.xlu0 %3804, %v3008
    %v3806 = vpop.permute.xlu0 %3805
    %v3808 = vmul.f32 %v3795, %v3801
    %v3809 = vmul.f32 %v3797, %v3806
    %v3810 = vadd.f32 %v3786, %v3808
    %v3811 = vadd.f32 %v3787, %v3809
    %v3812 = vmul.f32 %v3808, %v3450
    %v3813 = vmul.f32 %v3809, %v3455
    %v3814 = vadd.f32 %v3790, %v3812
    %v3815 = vadd.f32 %v3791, %v3813
    %v3816 = vsub.f32 %v3265, %v3526
    %v3817 = vsub.f32 %v3266, %v3527
    %v3818 = vmul.f32 %v3816, 1.442695
    %v3819 = vpow.pop %v3818
    %v3820 = vmul.f32 %v3817, 1.442695
    %v3821 = vpow.pop %v3820
    %3823 = vset.pattern.permute.xlu0 0
    %3824 = vperm.xlu0 %3823, %v3009
    %v3825 = vpop.permute.xlu0 %3824
    %3828 = vset.pattern.permute.xlu0 0
    %3829 = vperm.xlu0 %3828, %v3010
    %v3830 = vpop.permute.xlu0 %3829
    %v3832 = vmul.f32 %v3819, %v3825
    %v3833 = vmul.f32 %v3821, %v3830
    %v3834 = vadd.f32 %v3810, %v3832
    %v3835 = vadd.f32 %v3811, %v3833
    %v3836 = vmul.f32 %v3832, %v3460
    %v3837 = vmul.f32 %v3833, %v3465
    %v3838 = vadd.f32 %v3814, %v3836
    %v3839 = vadd.f32 %v3815, %v3837
    %v3840 = vsub.f32 %v3267, %v3526
    %v3841 = vsub.f32 %v3268, %v3527
    %v3842 = vmul.f32 %v3840, 1.442695
    %v3843 = vpow.pop %v3842
    %v3844 = vmul.f32 %v3841, 1.442695
    %v3845 = vpow.pop %v3844
    %3847 = vset.pattern.permute.xlu0 0
    %3848 = vperm.xlu0 %3847, %v3011
    %v3849 = vpop.permute.xlu0 %3848
    %3852 = vset.pattern.permute.xlu0 0
    %3853 = vperm.xlu0 %3852, %v3012
    %v3854 = vpop.permute.xlu0 %3853
    %v3856 = vmul.f32 %v3843, %v3849
    %v3857 = vmul.f32 %v3845, %v3854
    %v3858 = vadd.f32 %v3834, %v3856
    %v3859 = vadd.f32 %v3835, %v3857
    %v3860 = vmul.f32 %v3856, %v3470
    %v3861 = vmul.f32 %v3857, %v3475
    %v3862 = vadd.f32 %v3838, %v3860
    %v3863 = vadd.f32 %v3839, %v3861
    %v3864 = vsub.f32 %v3269, %v3526
    %v3865 = vsub.f32 %v3270, %v3527
    %v3866 = vmul.f32 %v3864, 1.442695
    %v3867 = vpow.pop %v3866
    %v3868 = vmul.f32 %v3865, 1.442695
    %v3869 = vpow.pop %v3868
    %3871 = vset.pattern.permute.xlu0 0
    %3872 = vperm.xlu0 %3871, %v3013
    %v3873 = vpop.permute.xlu0 %3872
    %3876 = vset.pattern.permute.xlu0 0
    %3877 = vperm.xlu0 %3876, %v3014
    %v3878 = vpop.permute.xlu0 %3877
    %v3880 = vmul.f32 %v3867, %v3873
    %v3881 = vmul.f32 %v3869, %v3878
    %v3882 = vadd.f32 %v3858, %v3880
    %v3883 = vadd.f32 %v3859, %v3881
    %v3884 = vmul.f32 %v3880, %v3480
    %v3885 = vmul.f32 %v3881, %v3485
    %v3886 = vadd.f32 %v3862, %v3884
    %v3887 = vadd.f32 %v3863, %v3885
    %v3888 = vsub.f32 %v3271, %v3526
    %v3889 = vsub.f32 %v3272, %v3527
    %v3890 = vmul.f32 %v3888, 1.442695
    %v3891 = vpow.pop %v3890
    %v3892 = vmul.f32 %v3889, 1.442695
    %v3893 = vpow.pop %v3892
    %3895 = vset.pattern.permute.xlu0 0
    %3896 = vperm.xlu0 %3895, %v3015
    %v3897 = vpop.permute.xlu0 %3896
    %3900 = vset.pattern.permute.xlu0 0
    %3901 = vperm.xlu0 %3900, %v3016
    %v3902 = vpop.permute.xlu0 %3901
    %v3904 = vmul.f32 %v3891, %v3897
    %v3905 = vmul.f32 %v3893, %v3902
    %v3906 = vadd.f32 %v3882, %v3904
    %v3907 = vadd.f32 %v3883, %v3905
    %v3908 = vmul.f32 %v3904, %v3490
    %v3909 = vmul.f32 %v3905, %v3495
    %v3910 = vadd.f32 %v3886, %v3908
    %v3911 = vadd.f32 %v3887, %v3909
    %v3912 = vrcp.pop %v3906
    %v3913 = vrcp.pop %v3907
    %v3914 = vmul.f32 %v3910, %v3912
    %v3915 = vmul.f32 %v3911, %v3913
    %v3916 = vld [vmem:[%s18] sm:$0xff]
    %v3917 = vld [vmem:[%s18 + $0x8] sm:$0xff]
    %v3918 = vld [vmem:[%s19] sm:$0x1]
    %v3920 = vlaneseq
    %v3921 = vshrl.u32 %v3920, 7
    %v3922 = vsub.s32 0, %v3921
    %v3923 = vrot.slane %v3918, %v3922
    %v3926 = vsel %vm458, %v3914, 0
    %v3929 = vsel %vm458, %v3915, 0
    %3931 = vmatprep.subr.mxu0 0.0
    %3932 = vmatpush1.msra.mxu0 %v3916
    %3933 = vmatprep.subr.mxu0 0.0
    %3934 = vmatpush1.msra.mxu0 %v3917
    %3935 = vmatprep.subr.mxu0 0.0
    %3936 = vmatpush1.msra.mxu0 0.0
    %3937 = vmatprep.subr.mxu0 0.0
    %3938 = vmatpush1.msra.mxu0 0.0
    %3939 = vmatprep.subr.mxu0 0.0
    %3940 = vmatpush1.msra.mxu0 0.0
    %3941 = vmatprep.subr.mxu0 0.0
    %3942 = vmatpush1.msra.mxu0 0.0
    %3943 = vmatprep.subr.mxu0 0.0
    %3944 = vmatpush1.msra.mxu0 0.0
    %3945 = vmatprep.subr.mxu0 0.0
    %3946 = vmatpush1.msra.mxu0 0.0
    %3947 = vmatprep.subr.mxu0 0.0
    %3948 = vmatpush1.msra.mxu0 0.0
    %3949 = vmatprep.subr.mxu0 0.0
    %3950 = vmatpush1.msra.mxu0 0.0
    %3951 = vmatprep.subr.mxu0 0.0
    %3952 = vmatpush1.msra.mxu0 0.0
    %3953 = vmatprep.subr.mxu0 0.0
    %3954 = vmatpush1.msra.mxu0 0.0
    %3955 = vmatprep.subr.mxu0 0.0
    %3956 = vmatpush1.msra.mxu0 0.0
    %3957 = vmatprep.subr.mxu0 0.0
    %3958 = vmatpush1.msra.mxu0 0.0
    %3959 = vmatprep.subr.mxu0 0.0
    %3960 = vmatpush1.msra.mxu0 0.0
    %3961 = vmatprep.subr.mxu0 0.0
    %3962 = vmatpush1.msra.mxu0 0.0
    %3963 = vmatprep.subr.mxu0 0.0
    %3964 = vmatpush1.msra.mxu0 0.0
    %3965 = vmatprep.subr.mxu0 0.0
    %3966 = vmatpush1.msra.mxu0 0.0
    %3967 = vmatprep.subr.mxu0 0.0
    %3968 = vmatpush1.msra.mxu0 0.0
    %3969 = vmatprep.subr.mxu0 0.0
    %3970 = vmatpush1.msra.mxu0 0.0
    %3971 = vmatprep.subr.mxu0 0.0
    %3972 = vmatpush1.msra.mxu0 0.0
    %3973 = vmatprep.subr.mxu0 0.0
    %3974 = vmatpush1.msra.mxu0 0.0
    %3975 = vmatprep.subr.mxu0 0.0
    %3976 = vmatpush1.msra.mxu0 0.0
    %3977 = vmatprep.subr.mxu0 0.0
    %3978 = vmatpush1.msra.mxu0 0.0
    %3979 = vmatprep.subr.mxu0 0.0
    %3980 = vmatpush1.msra.mxu0 0.0
    %3981 = vmatprep.subr.mxu0 0.0
    %3982 = vmatpush1.msra.mxu0 0.0
    %3983 = vmatprep.subr.mxu0 0.0
    %3984 = vmatpush1.msra.mxu0 0.0
    %3985 = vmatprep.subr.mxu0 0.0
    %3986 = vmatpush1.msra.mxu0 0.0
    %3987 = vmatprep.subr.mxu0 0.0
    %3988 = vmatpush1.msra.mxu0 0.0
    %3989 = vmatprep.subr.mxu0 0.0
    %3990 = vmatpush1.msra.mxu0 0.0
    %3991 = vmatprep.subr.mxu0 0.0
    %3992 = vmatpush1.msra.mxu0 0.0
    %3993 = vmatprep.subr.mxu0 0.0
    %3994 = vmatpush1.msra.mxu0 0.0
    %3995 = vmatprep.mubr.f32.mxu0 0.0
    %3996 = vmatmul.mubr.f32.gmra.mrb[0].mxu0 %v3926
    %v3997 = vpop.f32.mrb[0].mxu0
    %v3998 = vadd.f32 %v3923, %v3997
    %v3999 = vpop.f32.mrb[0].mxu0
    %4000 = vmatprep.mubr.f32.mxu0 0.0
    %4001 = vmatmul.mubr.f32.gmra.mrb[0].mxu0 %v3929
    %v4002 = vpop.f32.mrb[0].mxu0
    %v4003 = vadd.f32 %v3923, %v4002
    %v4004 = vpop.f32.mrb[0].mxu0
    %4005 = vdwg.mxu0
    %v4006 = vmax.f32 %v3998, 0.0
    %v4007 = vmax.f32 %v4003, 0.0
    %4008 = vst.msk [vmem:[#allocation2] sm:$0xff] %vm458, %v4006
    %4009 = vst.msk [vmem:[#allocation2 + $0x8] sm:$0xff] %vm458, %v4007
    // Predicated region
    $region82: #{transformer_block.1} parent=1 // pred_check
      _
    $region83: #{transformer_block.1} parent=1 // pred_check_branch
      %4011 = sbr.rel (0) target = $region85
    $region84: #{transformer_block.1} parent=1 // pred_region
      %s4013 = ssub.s32 256, 256
      %4014 = vsyncadd [#allocation3], %s4013
      %s4015 = sshll.u32 [#allocation2], 4
      %s4016 = int_to_ptr.vmem [resolvable:$true] %s4015
      %4021 = dma.vmem_to_hbm [thread:$0]  %s4016, 256, %s20, [#allocation3], 128, 128, 8
    $region85: #{transformer_block.1} parent=1 // pred_fallthru
      _
    // Predicated region
    $region86: #{transformer_block.1} parent=1 // pred_check
      _
    $region87: #{transformer_block.1} parent=1 // pred_check_branch
      %4023 = sbr.rel (0) target = $region89
    $region88: #{transformer_block.1} parent=1 // pred_region
      %4024 = dma.done [#allocation3], 256
    $region89: #{transformer_block.1} parent=1 // pred_fallthru
      _
    %4025 = vsyncpa [#allocation3], 1

</llo_original>
